<compile_context>
chip_gen: v7x
topology: tpu7x:2x2x1
jax: 0.10.0
libtpu: 0.0.40
codegen_flags: <defaults>
</compile_context>

<pallas_src>
import math

import jax
import jax.numpy as jnp
from jax.experimental import pallas as pl
from jax.experimental.pallas import tpu as pltpu

# ----------------------- synthetic (small) model configuration -----------------------
B = 2                                  # batch
T_WAV = 256                            # raw waveform length
FE_LAYERS = ((32, 4, 4), (32, 4, 4))   # (out_ch, kernel, stride): 256 -> 64 -> 16 frames
D_FEAT = FE_LAYERS[-1][0]              # conv feature dim
D_MODEL = 32                           # post_extract_proj output dim (transformer width)
NUM_HEADS = 4
HEAD_DIM = D_MODEL // NUM_HEADS
FFN_DIM = 64
NUM_LAYERS = 2                         # transformer encoder layers -> layer_num = 3
POS_CONV_K = 4                         # pos_conv kernel (even -> SamePad drops 1 frame)
POS_CONV_GROUPS = 4
LAYER_NORM_FIRST = False               # HuBERT-base style (post-LN encoder blocks)
TASK_NORMALIZE = True                  # HubertModel.task_cfg.normalize
FEATURIZER_NORMALIZE = False           # Featurizer.normalize (s3prl default)
EPS = 1e-5

C1, K1, S1 = FE_LAYERS[0]
C2, K2, S2 = FE_LAYERS[1]
assert K1 == S1 and K2 == S2, "both convs are non-overlapping -> pure matmuls"
T1 = T_WAV // S1                       # frames after conv1 (64)
T_FRAMES = T1 // S2                    # frames after conv2 (16)
assert T_WAV == T_FRAMES * K2 * K1


# -------- packed-operand layouts (static constants, shared by wrapper & kernel) --------

def _layout(items):
    off, o = {}, 0
    for name, width in items:
        off[name] = (o, width)
        o += width
    return off, -(-o // 128) * 128      # total lanes rounded up to a multiple of 128


_VEC_ITEMS = [("gn_g", C1), ("gn_b", C1), ("post_ln_g", D_FEAT), ("post_ln_b", D_FEAT),
              ("proj_b", D_MODEL), ("pos_b", D_MODEL),
              ("enc_ln_g", D_MODEL), ("enc_ln_b", D_MODEL)]
for _l in range(NUM_LAYERS):
    _VEC_ITEMS += [(f"bqkv{_l}", 3 * D_MODEL), (f"bo{_l}", D_MODEL),
                   (f"ln1_g{_l}", D_MODEL), (f"ln1_b{_l}", D_MODEL),
                   (f"bf1{_l}", FFN_DIM), (f"bf2{_l}", D_MODEL),
                   (f"ln2_g{_l}", D_MODEL), (f"ln2_b{_l}", D_MODEL)]
VEC_OFF, VEC_N = _layout(_VEC_ITEMS)          # (1, 1024)

_M32_ITEMS = [("w1", C1), ("proj_w", D_MODEL)]
for _l in range(NUM_LAYERS):
    _M32_ITEMS += [(f"wqkv{_l}", 3 * D_MODEL), (f"wo{_l}", D_MODEL), (f"wf1{_l}", FFN_DIM)]
M32_OFF, M32_N = _layout(_M32_ITEMS)          # (32, 512)
M32_ROWS = D_MODEL

_M128_ITEMS = [("w2", C2), ("pos", D_MODEL)] + [(f"wf2{_l}", D_MODEL) for _l in range(NUM_LAYERS)]
M128_OFF, M128_N = _layout(_M128_ITEMS)       # (128, 128)
M128_ROWS = K2 * C1


# =============================== in-kernel math helpers ===============================

def _erf(x):
    # Abramowitz & Stegun 7.1.26 rational approximation, |error| <= 1.5e-7 (f32-exact).
    a1, a2, a3, a4, a5 = (0.254829592, -0.284496736, 1.421413741,
                          -1.453152027, 1.061405429)
    p = 0.3275911
    ax = jnp.abs(x)
    t = 1.0 / (1.0 + p * ax)
    poly = t * (a1 + t * (a2 + t * (a3 + t * (a4 + t * a5))))
    y = 1.0 - poly * jnp.exp(-ax * ax)
    return jnp.where(x < 0.0, -y, y)


def _gelu(x):
    # exact (erf) GELU, matching torch.nn.functional.gelu default
    return 0.5 * x * (1.0 + _erf(x * (1.0 / math.sqrt(2.0))))


def _ln(x, g, b, eps=EPS):
    # F.layer_norm semantics: biased variance over the last dim
    m = jnp.mean(x, axis=-1, keepdims=True)
    c = x - m
    v = jnp.mean(c * c, axis=-1, keepdims=True)
    return c * jax.lax.rsqrt(v + eps) * g + b


# =============================== the fused Pallas kernel ===============================

def _s3prl_kernel(fw_ref, wav_ref, vec_ref, m32_ref, m128_ref, out_ref):
    f32 = jnp.float32

    def vec(name):
        o, n = VEC_OFF[name]
        return vec_ref[:, o:o + n]                       # (1, n)

    def m32(name, rows=M32_ROWS):
        o, n = M32_OFF[name]
        return m32_ref[0:rows, o:o + n]

    def m128(name, rows=M128_ROWS):
        o, n = M128_OFF[name]
        return m128_ref[0:rows, o:o + n]

    # ---- HubertModel.layer_norm(wav): torch.std (UNBIASED) and sqrt(std + eps),
    #      intentionally mirroring the PyTorch reference "as written". ----
    w = wav_ref[0].astype(f32)                           # (K1, K2*T_FRAMES), permuted view
    if TASK_NORMALIZE:
        n = float(K1 * T1)
        s = jnp.sum(jnp.sum(w, axis=1, keepdims=True), axis=0, keepdims=True)
        m = s / n
        c = w - m
        ss = jnp.sum(jnp.sum(c * c, axis=1, keepdims=True), axis=0, keepdims=True)
        std = jnp.sqrt(ss / (n - 1.0))
        w = c * jax.lax.rsqrt(std + EPS)

    # ---- feature-extractor conv1 (C_in=1, bias-free, kernel==stride): ONE matmul ----
    # rows come out in conv2-tap-major order u' = k*T_FRAMES + t  <->  time 4t+k; the
    # GroupNorm/GELU that follow are order-invariant, so this is transparent.
    x = jax.lax.dot_general(w, m32("w1", rows=K1),
                            (((0,), (0,)), ((), ())),
                            preferred_element_type=f32)  # (T1, C1)

    # ---- GroupNorm(C1, C1): per-channel stats over time (biased var), then GELU ----
    gm = jnp.mean(x, axis=0, keepdims=True)
    gc = x - gm
    gv = jnp.mean(gc * gc, axis=0, keepdims=True)
    x = gc * jax.lax.rsqrt(gv + EPS) * vec("gn_g") + vec("gn_b")
    x = _gelu(x)

    # ---- conv2 (bias-free, kernel==stride): lane-concat the K2 contiguous tap slices
    #      -> ONE full-contraction (T_FRAMES, K2*C1)@(K2*C1, C2) matmul, then GELU ----
    taps = jnp.concatenate(
        [x[k * T_FRAMES:(k + 1) * T_FRAMES, :] for k in range(K2)], axis=-1)  # (16, 128)
    x = _gelu(jnp.dot(taps, m128("w2"), preferred_element_type=f32))          # (16, D_FEAT)

    # ---- model.layer_norm + post_extract_proj ----
    x = _ln(x, vec("post_ln_g"), vec("post_ln_b"))
    x = jnp.dot(x, m32("proj_w"), preferred_element_type=f32) + vec("proj_b")
    res = x

    # ---- encoder.pos_conv: grouped conv (pad=K//2) + SamePad(drop last) + GELU ----
    # shifted copies (static slice + zero pad) are lane-concatenated so the whole conv
    # is ONE (16, K*D)@(K*D, D) matmul.
    # TODO(synk): fairseq parameterizes this conv with weight_norm; the packed weights
    # are the effective (already-normalized) ones.
    pad = POS_CONV_K // 2
    shifted = []
    for k in range(POS_CONV_K):
        off = k - pad
        if off < 0:
            sh = jnp.concatenate(
                [jnp.zeros((-off, D_MODEL), f32), x[:T_FRAMES + off, :]], axis=0)
        elif off == 0:
            sh = x
        else:
            sh = jnp.concatenate(
                [x[off:, :], jnp.zeros((off, D_MODEL), f32)], axis=0)
        shifted.append(sh)
    xsh = jnp.concatenate(shifted, axis=-1)              # (T_FRAMES, K*D_MODEL)
    y = jnp.dot(xsh, m128("pos"), preferred_element_type=f32) + vec("pos_b")
    x = _gelu(y) + res

    if not LAYER_NORM_FIRST:
        x = _ln(x, vec("enc_ln_g"), vec("enc_ln_b"))

    # ---- transformer layers + Featurizer softmax-weighted accumulation (fused) ----
    def fz(h):
        return _ln(h, 1.0, 0.0) if FEATURIZER_NORMALIZE else h

    acc = fw_ref[0] * fz(x)                              # hidden_states[0] contribution
    scale = 1.0 / math.sqrt(HEAD_DIM)
    # TODO(synk): at real HuBERT sizes convert these static loops to lax.fori_loop and
    # stream per-layer weights via a grid axis (Buffered(1)) to bound vreg/VMEM pressure.
    for l in range(NUM_LAYERS):
        # fused QKV projection (lane-dense 3*D output)
        qkv = jnp.dot(x, m32(f"wqkv{l}"), preferred_element_type=f32) + vec(f"bqkv{l}")
        ctxs = []
        for h in range(NUM_HEADS):
            lo = h * HEAD_DIM
            q = qkv[:, lo:lo + HEAD_DIM]
            kh = qkv[:, D_MODEL + lo:D_MODEL + lo + HEAD_DIM]
            vh = qkv[:, 2 * D_MODEL + lo:2 * D_MODEL + lo + HEAD_DIM]
            s = jax.lax.dot_general(q, kh, (((1,), (1,)), ((), ())),
                                    preferred_element_type=f32) * scale
            # pad mask is identically zero (lengths == T), so it is omitted entirely
            s = s - jnp.max(s, axis=-1, keepdims=True)
            p = jnp.exp(s)
            p = p * pl.reciprocal(jnp.sum(p, axis=-1, keepdims=True), approx=True)
            ctxs.append(jnp.dot(p, vh, preferred_element_type=f32))     # (T, dh)
        ctx = jnp.concatenate(ctxs, axis=-1)             # all heads, lane-concatenated
        attn = jnp.dot(ctx, m32(f"wo{l}"), preferred_element_type=f32) + vec(f"bo{l}")
        x1 = _ln(x + attn, vec(f"ln1_g{l}"), vec(f"ln1_b{l}"))
        hmid = _gelu(jnp.dot(x1, m32(f"wf1{l}"), preferred_element_type=f32)
                     + vec(f"bf1{l}"))
        ho = jnp.dot(hmid, m128(f"wf2{l}", rows=FFN_DIM),
                     preferred_element_type=f32) + vec(f"bf2{l}")
        x = _ln(x1 + ho, vec(f"ln2_g{l}"), vec(f"ln2_b{l}"))
        if l + 1 < NUM_LAYERS:
            acc = acc + fw_ref[l + 1] * fz(x)
    if LAYER_NORM_FIRST:
        x = _ln(x, vec("enc_ln_g"), vec("enc_ln_b"))
    acc = acc + fw_ref[NUM_LAYERS] * fz(x)

    # ---- lane-dense output: (T_FRAMES, D_MODEL) -> one (1, T_FRAMES*D_MODEL) row ----
    out_ref[0] = jnp.concatenate([acc[t:t + 1, :] for t in range(T_FRAMES)], axis=-1)


# =============================== wrapper / weight packing ===============================

def _pos_conv_weights_per_tap(w, groups):
    """(C_out, C_in//groups, K) grouped Conv1d weight -> (K, C_in, C_out) block-diag per tap."""
    c_out, c_in_g, kw = w.shape
    out_g = c_out // groups
    c_in = c_in_g * groups
    wk = jnp.zeros((kw, c_in, c_out), jnp.float32)
    for g in range(groups):
        blk = jnp.transpose(w[g * out_g:(g + 1) * out_g], (2, 1, 0))    # (K, c_in_g, out_g)
        wk = wk.at[:, g * c_in_g:(g + 1) * c_in_g,
                   g * out_g:(g + 1) * out_g].set(blk)
    return wk


def _pack_lane_concat(items, entries, rows, total):
    """Pack named (r, w) matrices / (w,) vectors into one lane-dense (rows, total) slab."""
    cols = []
    for name, width in items:
        a = jnp.asarray(entries[name], jnp.float32)
        if a.ndim == 1:
            a = a.reshape(1, -1)
        assert a.shape[1] == width, (name, a.shape, width)
        if a.shape[0] < rows:
            a = jnp.pad(a, ((0, rows - a.shape[0]), (0, 0)))
        cols.append(a)
    buf = jnp.concatenate(cols, axis=1)
    if buf.shape[1] < total:
        buf = jnp.pad(buf, ((0, 0), (0, total - buf.shape[1])))
    return buf


def s3prl_forward(wav, params):
    """Returns (feats (B, T, D_MODEL), feats_length (B,)) -- matches S3PRLModel.forward."""
    bsz = wav.shape[0]
    f32 = jnp.float32

    # waveform, permuted so conv1 taps sit on sublanes (lane dim 64, dense-ish DMA) and
    # conv2-tap rows of the conv1 output become contiguous sublane slices:
    #   wav_p[b, j, k*T_FRAMES + t] = wav[b, (4t + k)*4 + j]
    wav_p = (wav.astype(f32)
             .reshape(bsz, T_FRAMES, K2, K1)
             .transpose(0, 3, 2, 1)
             .reshape(bsz, K1, K2 * T_FRAMES))

    fe0, fe1 = params["fe"]
    w1 = jnp.transpose(fe0["w"][:, 0, :]).astype(f32)                    # (K1, C1)
    w2flat = jnp.transpose(fe1["w"], (2, 1, 0)).reshape(K2 * C1, C2)     # (K2*C1, C2)
    posflat = _pos_conv_weights_per_tap(
        params["pos_w"].astype(f32), POS_CONV_GROUPS).reshape(POS_CONV_K * D_MODEL, D_MODEL)

    vec_entries = {
        "gn_g": fe0["gn_g"], "gn_b": fe0["gn_b"],
        "post_ln_g": params["post_ln_g"], "post_ln_b": params["post_ln_b"],
        "proj_b": params["proj_b"], "pos_b": params["pos_b"],
        "enc_ln_g": params["enc_ln_g"], "enc_ln_b": params["enc_ln_b"],
    }
    m32_entries = {"w1": w1, "proj_w": params["proj_w"]}
    m128_entries = {"w2": w2flat, "pos": posflat}
    for l, lp in enumerate(params["layers"]):
        vec_entries[f"bqkv{l}"] = jnp.concatenate([lp["bq"], lp["bk"], lp["bv"]])
        vec_entries[f"bo{l}"] = lp["bo"]
        vec_entries[f"ln1_g{l}"] = lp["ln1_g"]
        vec_entries[f"ln1_b{l}"] = lp["ln1_b"]
        vec_entries[f"bf1{l}"] = lp["b1"]
        vec_entries[f"bf2{l}"] = lp["b2"]
        vec_entries[f"ln2_g{l}"] = lp["ln2_g"]
        vec_entries[f"ln2_b{l}"] = lp["ln2_b"]
        m32_entries[f"wqkv{l}"] = jnp.concatenate([lp["wq"], lp["wk"], lp["wv"]], axis=1)
        m32_entries[f"wo{l}"] = lp["wo"]
        m32_entries[f"wf1{l}"] = lp["w1"]
        m128_entries[f"wf2{l}"] = lp["w2"]

    vecs = _pack_lane_concat(_VEC_ITEMS, vec_entries, 1, VEC_N)               # (1, 1024)
    m32p = _pack_lane_concat(_M32_ITEMS, m32_entries, M32_ROWS, M32_N)        # (32, 512)
    m128p = _pack_lane_concat(_M128_ITEMS, m128_entries, M128_ROWS, M128_N)   # (128, 128)

    fw = jax.nn.softmax(params["featurizer_w"].astype(f32))   # (layer_num,) = (L+1,)

    feats_flat = pl.pallas_call(
        _s3prl_kernel,
        out_shape=jax.ShapeDtypeStruct((bsz, 1, T_FRAMES * D_MODEL), f32),
        grid=(bsz,),
        in_specs=[
            pl.BlockSpec(memory_space=pltpu.MemorySpace.SMEM),            # featurizer softmax wts
            pl.BlockSpec((1, K1, K2 * T_FRAMES), lambda b: (b, 0, 0)),    # per-batch waveform
            pl.BlockSpec((1, VEC_N), lambda b: (0, 0)),                   # packed bias/LN vectors
            pl.BlockSpec((M32_ROWS, M32_N), lambda b: (0, 0)),            # packed 32-row weights
            pl.BlockSpec((M128_ROWS, M128_N), lambda b: (0, 0)),          # packed 128-row weights
        ],
        out_specs=pl.BlockSpec((1, 1, T_FRAMES * D_MODEL), lambda b: (b, 0, 0)),
        compiler_params=pltpu.CompilerParams(
            dimension_semantics=("parallel",)),                           # both TCs on v7x
    )(fw, wav_p, vecs, m32p, m128p)

    feats = feats_flat.reshape(bsz, T_FRAMES, D_MODEL)
    # feats_length = ones(B, T).sum(-1).long() == T for every batch element
    feats_length = jnp.full((bsz,), T_FRAMES, dtype=jnp.int32)
    return feats, feats_length


# =============================== parameter init ===============================

def init_params(key):
    def nrm(k, shape, scale):
        return scale * jax.random.normal(k, shape, jnp.float32)

    keys = iter(jax.random.split(key, 64))
    params = {}
    fe = []
    in_ch = 1
    for i, (out_ch, k, _) in enumerate(FE_LAYERS):
        layer = {"w": nrm(next(keys), (out_ch, in_ch, k), 1.0 / math.sqrt(in_ch * k))}
        if i == 0:
            layer["gn_g"] = jnp.ones((out_ch,), jnp.float32)
            layer["gn_b"] = jnp.zeros((out_ch,), jnp.float32)
        fe.append(layer)
        in_ch = out_ch
    params["fe"] = fe
    params["post_ln_g"] = jnp.ones((D_FEAT,), jnp.float32)
    params["post_ln_b"] = jnp.zeros((D_FEAT,), jnp.float32)
    params["proj_w"] = nrm(next(keys), (D_FEAT, D_MODEL), 1.0 / math.sqrt(D_FEAT))
    params["proj_b"] = nrm(next(keys), (D_MODEL,), 0.01)
    params["pos_w"] = nrm(next(keys), (D_MODEL, D_MODEL // POS_CONV_GROUPS, POS_CONV_K),
                          1.0 / math.sqrt(D_MODEL * POS_CONV_K / POS_CONV_GROUPS))
    params["pos_b"] = nrm(next(keys), (D_MODEL,), 0.01)
    params["enc_ln_g"] = jnp.ones((D_MODEL,), jnp.float32)
    params["enc_ln_b"] = jnp.zeros((D_MODEL,), jnp.float32)
    layers = []
    for _ in range(NUM_LAYERS):
        lp = {}
        for nm in ("wq", "wk", "wv", "wo"):
            lp[nm] = nrm(next(keys), (D_MODEL, D_MODEL), 1.0 / math.sqrt(D_MODEL))
        for nm in ("bq", "bk", "bv", "bo"):
            lp[nm] = nrm(next(keys), (D_MODEL,), 0.01)
        lp["ln1_g"] = jnp.ones((D_MODEL,), jnp.float32)
        lp["ln1_b"] = jnp.zeros((D_MODEL,), jnp.float32)
        lp["w1"] = nrm(next(keys), (D_MODEL, FFN_DIM), 1.0 / math.sqrt(D_MODEL))
        lp["b1"] = nrm(next(keys), (FFN_DIM,), 0.01)
        lp["w2"] = nrm(next(keys), (FFN_DIM, D_MODEL), 1.0 / math.sqrt(FFN_DIM))
        lp["b2"] = nrm(next(keys), (D_MODEL,), 0.01)
        lp["ln2_g"] = jnp.ones((D_MODEL,), jnp.float32)
        lp["ln2_b"] = jnp.zeros((D_MODEL,), jnp.float32)
        layers.append(lp)
    params["layers"] = layers
    params["featurizer_w"] = jnp.zeros((NUM_LAYERS + 1,), jnp.float32)  # s3prl init
    return params


# =============================== main ===============================

if __name__ == "__main__":
    root = jax.random.PRNGKey(0)
    k_wav, k_par = jax.random.split(root)
    wav = jax.random.normal(k_wav, (B, T_WAV), jnp.float32)   # input: (batch, wav_length)
    params = init_params(k_par)

    feats, feats_len = jax.jit(s3prl_forward)(wav, params)
    jax.block_until_ready((feats, feats_len))

    assert feats.shape == (B, T_WAV // (S1 * S2), D_MODEL), feats.shape
    assert feats_len.shape == (B,) and feats_len.dtype == jnp.int32
    assert bool(jnp.all(jnp.isfinite(feats)))
    print("KERNEL_OK")
</pallas_src>

<mosaic_0001>
module attributes {stable_mosaic.version = 11 : i64} {
  func.func @_s3prl_kernel(%arg0: i32, %arg1: memref<3xf32, #tpu.memory_space<smem>>, %arg2: memref<1x4x64xf32, #tpu.memory_space<vmem>>, %arg3: memref<1x1024xf32, #tpu.memory_space<vmem>>, %arg4: memref<32x512xf32, #tpu.memory_space<vmem>>, %arg5: memref<128x128xf32, #tpu.memory_space<vmem>>, %arg6: memref<1x1x512xf32, #tpu.memory_space<vmem>>) attributes {dimension_semantics = [#tpu.dimension_semantics<parallel>], iteration_bounds = array<i64: 2>, scalar_prefetch = 0 : i64, scratch_operands = 0 : i64, tpu.core_type = #tpu.core_type<tc>, window_params = [{transform_indices = @transform_0, window_bounds = array<i64: 3>}, {transform_indices = @transform_1, window_bounds = array<i64: 1, 4, 64>}, {pipeline_mode = #tpu.pipeline_mode<synchronous>, transform_indices = @transform_2, window_bounds = array<i64: 1, 1024>}, {pipeline_mode = #tpu.pipeline_mode<synchronous>, transform_indices = @transform_3, window_bounds = array<i64: 32, 512>}, {pipeline_mode = #tpu.pipeline_mode<synchronous>, transform_indices = @transform_4, window_bounds = array<i64: 128, 128>}, {transform_indices = @transform_5, window_bounds = array<i64: 1, 1, 512>}]} {
    %c0 = arith.constant 0 : index
    %c0_0 = arith.constant 0 : index
    %c0_1 = arith.constant 0 : index
    %0 = vector.load %arg2[%c0, %c0_0, %c0_1] : memref<1x4x64xf32, #tpu.memory_space<vmem>>, vector<1x4x64xf32>
    %1 = vector.shape_cast %0 : vector<1x4x64xf32> to vector<4x64xf32>
    %cst = arith.constant dense<0.000000e+00> : vector<4xf32>
    %2 = vector.multi_reduction <add>, %1, %cst [1] : vector<4x64xf32> to vector<4xf32>
    %3 = vector.shape_cast %2 : vector<4xf32> to vector<4x1xf32>
    %cst_2 = arith.constant dense<0.000000e+00> : vector<1xf32>
    %4 = vector.multi_reduction <add>, %3, %cst_2 [0] : vector<4x1xf32> to vector<1xf32>
    %5 = vector.shape_cast %4 : vector<1xf32> to vector<1x1xf32>
    %cst_3 = arith.constant 2.560000e+02 : f32
    %6 = vector.broadcast %cst_3 : f32 to vector<1x1xf32>
    %7 = arith.divf %5, %6 : vector<1x1xf32>
    %8 = vector.broadcast %7 : vector<1x1xf32> to vector<4x64xf32>
    %9 = arith.subf %1, %8 : vector<4x64xf32>
    %10 = arith.mulf %9, %9 : vector<4x64xf32>
    %cst_4 = arith.constant dense<0.000000e+00> : vector<4xf32>
    %11 = vector.multi_reduction <add>, %10, %cst_4 [1] : vector<4x64xf32> to vector<4xf32>
    %12 = vector.shape_cast %11 : vector<4xf32> to vector<4x1xf32>
    %cst_5 = arith.constant dense<0.000000e+00> : vector<1xf32>
    %13 = vector.multi_reduction <add>, %12, %cst_5 [0] : vector<4x1xf32> to vector<1xf32>
    %14 = vector.shape_cast %13 : vector<1xf32> to vector<1x1xf32>
    %cst_6 = arith.constant 2.550000e+02 : f32
    %15 = vector.broadcast %cst_6 : f32 to vector<1x1xf32>
    %16 = arith.divf %14, %15 : vector<1x1xf32>
    %17 = math.sqrt %16 : vector<1x1xf32>
    %cst_7 = arith.constant 9.99999974E-6 : f32
    %18 = vector.broadcast %cst_7 : f32 to vector<1x1xf32>
    %19 = arith.addf %17, %18 : vector<1x1xf32>
    %20 = math.rsqrt %19 : vector<1x1xf32>
    %21 = vector.broadcast %20 : vector<1x1xf32> to vector<4x64xf32>
    %22 = arith.mulf %9, %21 : vector<4x64xf32>
    %c0_8 = arith.constant 0 : index
    %c0_9 = arith.constant 0 : index
    %23 = vector.load %arg4[%c0_8, %c0_9] : memref<32x512xf32, #tpu.memory_space<vmem>>, vector<4x32xf32>
    %cst_10 = arith.constant dense<0.000000e+00> : vector<64x32xf32>
    %24 = tpu.matmul %22, %23, %cst_10 {dimension_numbers = #tpu.dot_dimension_numbers<[0], [0], [1], [1], [0, 1, 1, 1], [], []>} : vector<4x64xf32>, vector<4x32xf32>, vector<64x32xf32> -> vector<64x32xf32>
    %cst_11 = arith.constant dense<0.000000e+00> : vector<32xf32>
    %25 = vector.multi_reduction <add>, %24, %cst_11 [0] : vector<64x32xf32> to vector<32xf32>
    %26 = vector.shape_cast %25 : vector<32xf32> to vector<1x32xf32>
    %cst_12 = arith.constant 6.400000e+01 : f32
    %27 = vector.broadcast %cst_12 : f32 to vector<1x32xf32>
    %28 = arith.divf %26, %27 : vector<1x32xf32>
    %29 = vector.broadcast %28 : vector<1x32xf32> to vector<64x32xf32>
    %30 = arith.subf %24, %29 : vector<64x32xf32>
    %31 = arith.mulf %30, %30 : vector<64x32xf32>
    %cst_13 = arith.constant dense<0.000000e+00> : vector<32xf32>
    %32 = vector.multi_reduction <add>, %31, %cst_13 [0] : vector<64x32xf32> to vector<32xf32>
    %33 = vector.shape_cast %32 : vector<32xf32> to vector<1x32xf32>
    %cst_14 = arith.constant 6.400000e+01 : f32
    %34 = vector.broadcast %cst_14 : f32 to vector<1x32xf32>
    %35 = arith.divf %33, %34 : vector<1x32xf32>
    %cst_15 = arith.constant 9.99999974E-6 : f32
    %36 = vector.broadcast %cst_15 : f32 to vector<1x32xf32>
    %37 = arith.addf %35, %36 : vector<1x32xf32>
    %38 = math.rsqrt %37 : vector<1x32xf32>
    %39 = vector.broadcast %38 : vector<1x32xf32> to vector<64x32xf32>
    %40 = arith.mulf %30, %39 : vector<64x32xf32>
    %c0_16 = arith.constant 0 : index
    %c0_17 = arith.constant 0 : index
    %41 = vector.load %arg3[%c0_16, %c0_17] : memref<1x1024xf32, #tpu.memory_space<vmem>>, vector<1x32xf32>
    %42 = vector.broadcast %41 : vector<1x32xf32> to vector<64x32xf32>
    %43 = arith.mulf %40, %42 : vector<64x32xf32>
    %c0_18 = arith.constant 0 : index
    %c32 = arith.constant 32 : index
    %44 = vector.load %arg3[%c0_18, %c32] : memref<1x1024xf32, #tpu.memory_space<vmem>>, vector<1x32xf32>
    %45 = vector.broadcast %44 : vector<1x32xf32> to vector<64x32xf32>
    %46 = arith.addf %43, %45 : vector<64x32xf32>
    %cst_19 = arith.constant 5.000000e-01 : f32
    %47 = vector.broadcast %cst_19 : f32 to vector<64x32xf32>
    %48 = arith.mulf %47, %46 : vector<64x32xf32>
    %cst_20 = arith.constant 0.707106769 : f32
    %49 = vector.broadcast %cst_20 : f32 to vector<64x32xf32>
    %50 = arith.mulf %46, %49 : vector<64x32xf32>
    %51 = math.absf %50 : vector<64x32xf32>
    %cst_21 = arith.constant 0.327591091 : f32
    %52 = vector.broadcast %cst_21 : f32 to vector<64x32xf32>
    %53 = arith.mulf %52, %51 : vector<64x32xf32>
    %cst_22 = arith.constant 1.000000e+00 : f32
    %54 = vector.broadcast %cst_22 : f32 to vector<64x32xf32>
    %55 = arith.addf %54, %53 : vector<64x32xf32>
    %cst_23 = arith.constant 1.000000e+00 : f32
    %56 = vector.broadcast %cst_23 : f32 to vector<64x32xf32>
    %57 = arith.divf %56, %55 : vector<64x32xf32>
    %cst_24 = arith.constant 1.06140542 : f32
    %58 = vector.broadcast %cst_24 : f32 to vector<64x32xf32>
    %59 = arith.mulf %57, %58 : vector<64x32xf32>
    %cst_25 = arith.constant -1.45315206 : f32
    %60 = vector.broadcast %cst_25 : f32 to vector<64x32xf32>
    %61 = arith.addf %60, %59 : vector<64x32xf32>
    %62 = arith.mulf %57, %61 : vector<64x32xf32>
    %cst_26 = arith.constant 1.42141378 : f32
    %63 = vector.broadcast %cst_26 : f32 to vector<64x32xf32>
    %64 = arith.addf %63, %62 : vector<64x32xf32>
    %65 = arith.mulf %57, %64 : vector<64x32xf32>
    %cst_27 = arith.constant -0.284496725 : f32
    %66 = vector.broadcast %cst_27 : f32 to vector<64x32xf32>
    %67 = arith.addf %66, %65 : vector<64x32xf32>
    %68 = arith.mulf %57, %67 : vector<64x32xf32>
    %cst_28 = arith.constant 0.254829586 : f32
    %69 = vector.broadcast %cst_28 : f32 to vector<64x32xf32>
    %70 = arith.addf %69, %68 : vector<64x32xf32>
    %71 = arith.mulf %57, %70 : vector<64x32xf32>
    %cst_29 = arith.constant 0.000000e+00 : f32
    %72 = vector.broadcast %cst_29 : f32 to vector<64x32xf32>
    %73 = arith.subf %72, %51 : vector<64x32xf32>
    %74 = arith.mulf %73, %51 : vector<64x32xf32>
    %75 = math.exp %74 : vector<64x32xf32>
    %76 = arith.mulf %71, %75 : vector<64x32xf32>
    %cst_30 = arith.constant 1.000000e+00 : f32
    %77 = vector.broadcast %cst_30 : f32 to vector<64x32xf32>
    %78 = arith.subf %77, %76 : vector<64x32xf32>
    %cst_31 = arith.constant 0.000000e+00 : f32
    %79 = vector.broadcast %cst_31 : f32 to vector<64x32xf32>
    %80 = arith.cmpf olt, %50, %79 : vector<64x32xf32>
    %cst_32 = arith.constant 0.000000e+00 : f32
    %81 = vector.broadcast %cst_32 : f32 to vector<64x32xf32>
    %82 = arith.subf %81, %78 : vector<64x32xf32>
    %83 = arith.select %80, %82, %78 : vector<64x32xi1>, vector<64x32xf32>
    %cst_33 = arith.constant 1.000000e+00 : f32
    %84 = vector.broadcast %cst_33 : f32 to vector<64x32xf32>
    %85 = arith.addf %84, %83 : vector<64x32xf32>
    %86 = arith.mulf %48, %85 : vector<64x32xf32>
    %87 = vector.extract_strided_slice %86 {offsets = [0, 0], sizes = [16, 32], strides = [1, 1]} : vector<64x32xf32> to vector<16x32xf32>
    %88 = vector.extract_strided_slice %86 {offsets = [16, 0], sizes = [16, 32], strides = [1, 1]} : vector<64x32xf32> to vector<16x32xf32>
    %89 = vector.extract_strided_slice %86 {offsets = [32, 0], sizes = [16, 32], strides = [1, 1]} : vector<64x32xf32> to vector<16x32xf32>
    %90 = vector.extract_strided_slice %86 {offsets = [48, 0], sizes = [16, 32], strides = [1, 1]} : vector<64x32xf32> to vector<16x32xf32>
    %91 = tpu.concatenate %87, %88, %89, %90 in 1 : vector<16x32xf32>, vector<16x32xf32>, vector<16x32xf32>, vector<16x32xf32> -> vector<16x128xf32>
    %c0_34 = arith.constant 0 : index
    %c0_35 = arith.constant 0 : index
    %92 = vector.load %arg5[%c0_34, %c0_35] : memref<128x128xf32, #tpu.memory_space<vmem>>, vector<128x32xf32>
    %cst_36 = arith.constant dense<0.000000e+00> : vector<16x32xf32>
    %93 = tpu.matmul %91, %92, %cst_36 {dimension_numbers = #tpu.dot_dimension_numbers<[1], [0], [0], [1], [0, 0, 1, 1], [], []>} : vector<16x128xf32>, vector<128x32xf32>, vector<16x32xf32> -> vector<16x32xf32>
    %cst_37 = arith.constant 5.000000e-01 : f32
    %94 = vector.broadcast %cst_37 : f32 to vector<16x32xf32>
    %95 = arith.mulf %94, %93 : vector<16x32xf32>
    %cst_38 = arith.constant 0.707106769 : f32
    %96 = vector.broadcast %cst_38 : f32 to vector<16x32xf32>
    %97 = arith.mulf %93, %96 : vector<16x32xf32>
    %98 = math.absf %97 : vector<16x32xf32>
    %cst_39 = arith.constant 0.327591091 : f32
    %99 = vector.broadcast %cst_39 : f32 to vector<16x32xf32>
    %100 = arith.mulf %99, %98 : vector<16x32xf32>
    %cst_40 = arith.constant 1.000000e+00 : f32
    %101 = vector.broadcast %cst_40 : f32 to vector<16x32xf32>
    %102 = arith.addf %101, %100 : vector<16x32xf32>
    %cst_41 = arith.constant 1.000000e+00 : f32
    %103 = vector.broadcast %cst_41 : f32 to vector<16x32xf32>
    %104 = arith.divf %103, %102 : vector<16x32xf32>
    %cst_42 = arith.constant 1.06140542 : f32
    %105 = vector.broadcast %cst_42 : f32 to vector<16x32xf32>
    %106 = arith.mulf %104, %105 : vector<16x32xf32>
    %cst_43 = arith.constant -1.45315206 : f32
    %107 = vector.broadcast %cst_43 : f32 to vector<16x32xf32>
    %108 = arith.addf %107, %106 : vector<16x32xf32>
    %109 = arith.mulf %104, %108 : vector<16x32xf32>
    %cst_44 = arith.constant 1.42141378 : f32
    %110 = vector.broadcast %cst_44 : f32 to vector<16x32xf32>
    %111 = arith.addf %110, %109 : vector<16x32xf32>
    %112 = arith.mulf %104, %111 : vector<16x32xf32>
    %cst_45 = arith.constant -0.284496725 : f32
    %113 = vector.broadcast %cst_45 : f32 to vector<16x32xf32>
    %114 = arith.addf %113, %112 : vector<16x32xf32>
    %115 = arith.mulf %104, %114 : vector<16x32xf32>
    %cst_46 = arith.constant 0.254829586 : f32
    %116 = vector.broadcast %cst_46 : f32 to vector<16x32xf32>
    %117 = arith.addf %116, %115 : vector<16x32xf32>
    %118 = arith.mulf %104, %117 : vector<16x32xf32>
    %cst_47 = arith.constant 0.000000e+00 : f32
    %119 = vector.broadcast %cst_47 : f32 to vector<16x32xf32>
    %120 = arith.subf %119, %98 : vector<16x32xf32>
    %121 = arith.mulf %120, %98 : vector<16x32xf32>
    %122 = math.exp %121 : vector<16x32xf32>
    %123 = arith.mulf %118, %122 : vector<16x32xf32>
    %cst_48 = arith.constant 1.000000e+00 : f32
    %124 = vector.broadcast %cst_48 : f32 to vector<16x32xf32>
    %125 = arith.subf %124, %123 : vector<16x32xf32>
    %cst_49 = arith.constant 0.000000e+00 : f32
    %126 = vector.broadcast %cst_49 : f32 to vector<16x32xf32>
    %127 = arith.cmpf olt, %97, %126 : vector<16x32xf32>
    %cst_50 = arith.constant 0.000000e+00 : f32
    %128 = vector.broadcast %cst_50 : f32 to vector<16x32xf32>
    %129 = arith.subf %128, %125 : vector<16x32xf32>
    %130 = arith.select %127, %129, %125 : vector<16x32xi1>, vector<16x32xf32>
    %cst_51 = arith.constant 1.000000e+00 : f32
    %131 = vector.broadcast %cst_51 : f32 to vector<16x32xf32>
    %132 = arith.addf %131, %130 : vector<16x32xf32>
    %133 = arith.mulf %95, %132 : vector<16x32xf32>
    %c0_52 = arith.constant 0 : index
    %c64 = arith.constant 64 : index
    %134 = vector.load %arg3[%c0_52, %c64] : memref<1x1024xf32, #tpu.memory_space<vmem>>, vector<1x32xf32>
    %c0_53 = arith.constant 0 : index
    %c96 = arith.constant 96 : index
    %135 = vector.load %arg3[%c0_53, %c96] : memref<1x1024xf32, #tpu.memory_space<vmem>>, vector<1x32xf32>
    %cst_54 = arith.constant dense<0.000000e+00> : vector<16xf32>
    %136 = vector.multi_reduction <add>, %133, %cst_54 [1] : vector<16x32xf32> to vector<16xf32>
    %137 = vector.shape_cast %136 : vector<16xf32> to vector<16x1xf32>
    %cst_55 = arith.constant 3.200000e+01 : f32
    %138 = vector.broadcast %cst_55 : f32 to vector<16x1xf32>
    %139 = arith.divf %137, %138 : vector<16x1xf32>
    %140 = vector.broadcast %139 : vector<16x1xf32> to vector<16x32xf32>
    %141 = arith.subf %133, %140 : vector<16x32xf32>
    %142 = arith.mulf %141, %141 : vector<16x32xf32>
    %cst_56 = arith.constant dense<0.000000e+00> : vector<16xf32>
    %143 = vector.multi_reduction <add>, %142, %cst_56 [1] : vector<16x32xf32> to vector<16xf32>
    %144 = vector.shape_cast %143 : vector<16xf32> to vector<16x1xf32>
    %cst_57 = arith.constant 3.200000e+01 : f32
    %145 = vector.broadcast %cst_57 : f32 to vector<16x1xf32>
    %146 = arith.divf %144, %145 : vector<16x1xf32>
    %cst_58 = arith.constant 9.99999974E-6 : f32
    %147 = vector.broadcast %cst_58 : f32 to vector<16x1xf32>
    %148 = arith.addf %146, %147 : vector<16x1xf32>
    %149 = math.rsqrt %148 : vector<16x1xf32>
    %150 = vector.broadcast %149 : vector<16x1xf32> to vector<16x32xf32>
    %151 = arith.mulf %141, %150 : vector<16x32xf32>
    %152 = vector.broadcast %134 : vector<1x32xf32> to vector<16x32xf32>
    %153 = arith.mulf %151, %152 : vector<16x32xf32>
    %154 = vector.broadcast %135 : vector<1x32xf32> to vector<16x32xf32>
    %155 = arith.addf %153, %154 : vector<16x32xf32>
    %c0_59 = arith.constant 0 : index
    %c32_60 = arith.constant 32 : index
    %156 = vector.load %arg4[%c0_59, %c32_60] : memref<32x512xf32, #tpu.memory_space<vmem>>, vector<32x32xf32>
    %cst_61 = arith.constant dense<0.000000e+00> : vector<16x32xf32>
    %157 = tpu.matmul %155, %156, %cst_61 {dimension_numbers = #tpu.dot_dimension_numbers<[1], [0], [0], [1], [0, 0, 1, 1], [], []>} : vector<16x32xf32>, vector<32x32xf32>, vector<16x32xf32> -> vector<16x32xf32>
    %c0_62 = arith.constant 0 : index
    %c128 = arith.constant 128 : index
    %158 = vector.load %arg3[%c0_62, %c128] : memref<1x1024xf32, #tpu.memory_space<vmem>>, vector<1x32xf32>
    %159 = vector.broadcast %158 : vector<1x32xf32> to vector<16x32xf32>
    %160 = arith.addf %157, %159 : vector<16x32xf32>
    %cst_63 = arith.constant 0.000000e+00 : f32
    %161 = vector.broadcast %cst_63 : f32 to vector<2x32xf32>
    %162 = vector.extract_strided_slice %160 {offsets = [0, 0], sizes = [14, 32], strides = [1, 1]} : vector<16x32xf32> to vector<14x32xf32>
    %163 = tpu.concatenate %161, %162 in 0 : vector<2x32xf32>, vector<14x32xf32> -> vector<16x32xf32>
    %cst_64 = arith.constant 0.000000e+00 : f32
    %164 = vector.broadcast %cst_64 : f32 to vector<1x32xf32>
    %165 = vector.extract_strided_slice %160 {offsets = [0, 0], sizes = [15, 32], strides = [1, 1]} : vector<16x32xf32> to vector<15x32xf32>
    %166 = tpu.concatenate %164, %165 in 0 : vector<1x32xf32>, vector<15x32xf32> -> vector<16x32xf32>
    %167 = vector.extract_strided_slice %160 {offsets = [1, 0], sizes = [15, 32], strides = [1, 1]} : vector<16x32xf32> to vector<15x32xf32>
    %cst_65 = arith.constant 0.000000e+00 : f32
    %168 = vector.broadcast %cst_65 : f32 to vector<1x32xf32>
    %169 = tpu.concatenate %167, %168 in 0 : vector<15x32xf32>, vector<1x32xf32> -> vector<16x32xf32>
    %170 = tpu.concatenate %163, %166, %160, %169 in 1 : vector<16x32xf32>, vector<16x32xf32>, vector<16x32xf32>, vector<16x32xf32> -> vector<16x128xf32>
    %c0_66 = arith.constant 0 : index
    %c32_67 = arith.constant 32 : index
    %171 = vector.load %arg5[%c0_66, %c32_67] : memref<128x128xf32, #tpu.memory_space<vmem>>, vector<128x32xf32>
    %cst_68 = arith.constant dense<0.000000e+00> : vector<16x32xf32>
    %172 = tpu.matmul %170, %171, %cst_68 {dimension_numbers = #tpu.dot_dimension_numbers<[1], [0], [0], [1], [0, 0, 1, 1], [], []>} : vector<16x128xf32>, vector<128x32xf32>, vector<16x32xf32> -> vector<16x32xf32>
    %c0_69 = arith.constant 0 : index
    %c160 = arith.constant 160 : index
    %173 = vector.load %arg3[%c0_69, %c160] : memref<1x1024xf32, #tpu.memory_space<vmem>>, vector<1x32xf32>
    %174 = vector.broadcast %173 : vector<1x32xf32> to vector<16x32xf32>
    %175 = arith.addf %172, %174 : vector<16x32xf32>
    %cst_70 = arith.constant 5.000000e-01 : f32
    %176 = vector.broadcast %cst_70 : f32 to vector<16x32xf32>
    %177 = arith.mulf %176, %175 : vector<16x32xf32>
    %cst_71 = arith.constant 0.707106769 : f32
    %178 = vector.broadcast %cst_71 : f32 to vector<16x32xf32>
    %179 = arith.mulf %175, %178 : vector<16x32xf32>
    %180 = math.absf %179 : vector<16x32xf32>
    %cst_72 = arith.constant 0.327591091 : f32
    %181 = vector.broadcast %cst_72 : f32 to vector<16x32xf32>
    %182 = arith.mulf %181, %180 : vector<16x32xf32>
    %cst_73 = arith.constant 1.000000e+00 : f32
    %183 = vector.broadcast %cst_73 : f32 to vector<16x32xf32>
    %184 = arith.addf %183, %182 : vector<16x32xf32>
    %cst_74 = arith.constant 1.000000e+00 : f32
    %185 = vector.broadcast %cst_74 : f32 to vector<16x32xf32>
    %186 = arith.divf %185, %184 : vector<16x32xf32>
    %cst_75 = arith.constant 1.06140542 : f32
    %187 = vector.broadcast %cst_75 : f32 to vector<16x32xf32>
    %188 = arith.mulf %186, %187 : vector<16x32xf32>
    %cst_76 = arith.constant -1.45315206 : f32
    %189 = vector.broadcast %cst_76 : f32 to vector<16x32xf32>
    %190 = arith.addf %189, %188 : vector<16x32xf32>
    %191 = arith.mulf %186, %190 : vector<16x32xf32>
    %cst_77 = arith.constant 1.42141378 : f32
    %192 = vector.broadcast %cst_77 : f32 to vector<16x32xf32>
    %193 = arith.addf %192, %191 : vector<16x32xf32>
    %194 = arith.mulf %186, %193 : vector<16x32xf32>
    %cst_78 = arith.constant -0.284496725 : f32
    %195 = vector.broadcast %cst_78 : f32 to vector<16x32xf32>
    %196 = arith.addf %195, %194 : vector<16x32xf32>
    %197 = arith.mulf %186, %196 : vector<16x32xf32>
    %cst_79 = arith.constant 0.254829586 : f32
    %198 = vector.broadcast %cst_79 : f32 to vector<16x32xf32>
    %199 = arith.addf %198, %197 : vector<16x32xf32>
    %200 = arith.mulf %186, %199 : vector<16x32xf32>
    %cst_80 = arith.constant 0.000000e+00 : f32
    %201 = vector.broadcast %cst_80 : f32 to vector<16x32xf32>
    %202 = arith.subf %201, %180 : vector<16x32xf32>
    %203 = arith.mulf %202, %180 : vector<16x32xf32>
    %204 = math.exp %203 : vector<16x32xf32>
    %205 = arith.mulf %200, %204 : vector<16x32xf32>
    %cst_81 = arith.constant 1.000000e+00 : f32
    %206 = vector.broadcast %cst_81 : f32 to vector<16x32xf32>
    %207 = arith.subf %206, %205 : vector<16x32xf32>
    %cst_82 = arith.constant 0.000000e+00 : f32
    %208 = vector.broadcast %cst_82 : f32 to vector<16x32xf32>
    %209 = arith.cmpf olt, %179, %208 : vector<16x32xf32>
    %cst_83 = arith.constant 0.000000e+00 : f32
    %210 = vector.broadcast %cst_83 : f32 to vector<16x32xf32>
    %211 = arith.subf %210, %207 : vector<16x32xf32>
    %212 = arith.select %209, %211, %207 : vector<16x32xi1>, vector<16x32xf32>
    %cst_84 = arith.constant 1.000000e+00 : f32
    %213 = vector.broadcast %cst_84 : f32 to vector<16x32xf32>
    %214 = arith.addf %213, %212 : vector<16x32xf32>
    %215 = arith.mulf %177, %214 : vector<16x32xf32>
    %216 = arith.addf %215, %160 : vector<16x32xf32>
    %c0_85 = arith.constant 0 : index
    %c192 = arith.constant 192 : index
    %217 = vector.load %arg3[%c0_85, %c192] : memref<1x1024xf32, #tpu.memory_space<vmem>>, vector<1x32xf32>
    %c0_86 = arith.constant 0 : index
    %c224 = arith.constant 224 : index
    %218 = vector.load %arg3[%c0_86, %c224] : memref<1x1024xf32, #tpu.memory_space<vmem>>, vector<1x32xf32>
    %cst_87 = arith.constant dense<0.000000e+00> : vector<16xf32>
    %219 = vector.multi_reduction <add>, %216, %cst_87 [1] : vector<16x32xf32> to vector<16xf32>
    %220 = vector.shape_cast %219 : vector<16xf32> to vector<16x1xf32>
    %cst_88 = arith.constant 3.200000e+01 : f32
    %221 = vector.broadcast %cst_88 : f32 to vector<16x1xf32>
    %222 = arith.divf %220, %221 : vector<16x1xf32>
    %223 = vector.broadcast %222 : vector<16x1xf32> to vector<16x32xf32>
    %224 = arith.subf %216, %223 : vector<16x32xf32>
    %225 = arith.mulf %224, %224 : vector<16x32xf32>
    %cst_89 = arith.constant dense<0.000000e+00> : vector<16xf32>
    %226 = vector.multi_reduction <add>, %225, %cst_89 [1] : vector<16x32xf32> to vector<16xf32>
    %227 = vector.shape_cast %226 : vector<16xf32> to vector<16x1xf32>
    %cst_90 = arith.constant 3.200000e+01 : f32
    %228 = vector.broadcast %cst_90 : f32 to vector<16x1xf32>
    %229 = arith.divf %227, %228 : vector<16x1xf32>
    %cst_91 = arith.constant 9.99999974E-6 : f32
    %230 = vector.broadcast %cst_91 : f32 to vector<16x1xf32>
    %231 = arith.addf %229, %230 : vector<16x1xf32>
    %232 = math.rsqrt %231 : vector<16x1xf32>
    %233 = vector.broadcast %232 : vector<16x1xf32> to vector<16x32xf32>
    %234 = arith.mulf %224, %233 : vector<16x32xf32>
    %235 = vector.broadcast %217 : vector<1x32xf32> to vector<16x32xf32>
    %236 = arith.mulf %234, %235 : vector<16x32xf32>
    %237 = vector.broadcast %218 : vector<1x32xf32> to vector<16x32xf32>
    %238 = arith.addf %236, %237 : vector<16x32xf32>
    %c0_92 = arith.constant 0 : index
    %239 = memref.load %arg1[%c0_92] : memref<3xf32, #tpu.memory_space<smem>>
    %240 = vector.broadcast %239 : f32 to vector<16x32xf32>
    %241 = arith.mulf %240, %238 : vector<16x32xf32>
    %c0_93 = arith.constant 0 : index
    %c64_94 = arith.constant 64 : index
    %242 = vector.load %arg4[%c0_93, %c64_94] : memref<32x512xf32, #tpu.memory_space<vmem>>, vector<32x96xf32>
    %cst_95 = arith.constant dense<0.000000e+00> : vector<16x96xf32>
    %243 = tpu.matmul %238, %242, %cst_95 {dimension_numbers = #tpu.dot_dimension_numbers<[1], [0], [0], [1], [0, 0, 1, 1], [], []>} : vector<16x32xf32>, vector<32x96xf32>, vector<16x96xf32> -> vector<16x96xf32>
    %c0_96 = arith.constant 0 : index
    %c256 = arith.constant 256 : index
    %244 = vector.load %arg3[%c0_96, %c256] : memref<1x1024xf32, #tpu.memory_space<vmem>>, vector<1x96xf32>
    %245 = vector.broadcast %244 : vector<1x96xf32> to vector<16x96xf32>
    %246 = arith.addf %243, %245 : vector<16x96xf32>
    %247 = vector.extract_strided_slice %246 {offsets = [0, 0], sizes = [16, 8], strides = [1, 1]} : vector<16x96xf32> to vector<16x8xf32>
    %248 = vector.extract_strided_slice %246 {offsets = [0, 32], sizes = [16, 8], strides = [1, 1]} : vector<16x96xf32> to vector<16x8xf32>
    %249 = vector.extract_strided_slice %246 {offsets = [0, 64], sizes = [16, 8], strides = [1, 1]} : vector<16x96xf32> to vector<16x8xf32>
    %cst_97 = arith.constant dense<0.000000e+00> : vector<16x16xf32>
    %250 = tpu.matmul %247, %248, %cst_97 {dimension_numbers = #tpu.dot_dimension_numbers<[1], [1], [0], [0], [0, 0, 1, 0], [], []>} : vector<16x8xf32>, vector<16x8xf32>, vector<16x16xf32> -> vector<16x16xf32>
    %cst_98 = arith.constant 0.353553385 : f32
    %251 = vector.broadcast %cst_98 : f32 to vector<16x16xf32>
    %252 = arith.mulf %250, %251 : vector<16x16xf32>
    %cst_99 = arith.constant dense<0xFF800000> : vector<16xf32>
    %253 = vector.multi_reduction <maximumf>, %252, %cst_99 [1] : vector<16x16xf32> to vector<16xf32>
    %254 = vector.shape_cast %253 : vector<16xf32> to vector<16x1xf32>
    %255 = vector.broadcast %254 : vector<16x1xf32> to vector<16x16xf32>
    %256 = arith.subf %252, %255 : vector<16x16xf32>
    %257 = math.exp %256 : vector<16x16xf32>
    %cst_100 = arith.constant dense<0.000000e+00> : vector<16xf32>
    %258 = vector.multi_reduction <add>, %257, %cst_100 [1] : vector<16x16xf32> to vector<16xf32>
    %259 = vector.shape_cast %258 : vector<16xf32> to vector<16x1xf32>
    %260 = tpu.reciprocal %259 {approx = true} : vector<16x1xf32> -> vector<16x1xf32>
    %261 = vector.broadcast %260 : vector<16x1xf32> to vector<16x16xf32>
    %262 = arith.mulf %257, %261 : vector<16x16xf32>
    %cst_101 = arith.constant dense<0.000000e+00> : vector<16x8xf32>
    %263 = tpu.matmul %262, %249, %cst_101 {dimension_numbers = #tpu.dot_dimension_numbers<[1], [0], [0], [1], [0, 0, 1, 1], [], []>} : vector<16x16xf32>, vector<16x8xf32>, vector<16x8xf32> -> vector<16x8xf32>
    %264 = vector.extract_strided_slice %246 {offsets = [0, 8], sizes = [16, 8], strides = [1, 1]} : vector<16x96xf32> to vector<16x8xf32>
    %265 = vector.extract_strided_slice %246 {offsets = [0, 40], sizes = [16, 8], strides = [1, 1]} : vector<16x96xf32> to vector<16x8xf32>
    %266 = vector.extract_strided_slice %246 {offsets = [0, 72], sizes = [16, 8], strides = [1, 1]} : vector<16x96xf32> to vector<16x8xf32>
    %cst_102 = arith.constant dense<0.000000e+00> : vector<16x16xf32>
    %267 = tpu.matmul %264, %265, %cst_102 {dimension_numbers = #tpu.dot_dimension_numbers<[1], [1], [0], [0], [0, 0, 1, 0], [], []>} : vector<16x8xf32>, vector<16x8xf32>, vector<16x16xf32> -> vector<16x16xf32>
    %cst_103 = arith.constant 0.353553385 : f32
    %268 = vector.broadcast %cst_103 : f32 to vector<16x16xf32>
    %269 = arith.mulf %267, %268 : vector<16x16xf32>
    %cst_104 = arith.constant dense<0xFF800000> : vector<16xf32>
    %270 = vector.multi_reduction <maximumf>, %269, %cst_104 [1] : vector<16x16xf32> to vector<16xf32>
    %271 = vector.shape_cast %270 : vector<16xf32> to vector<16x1xf32>
    %272 = vector.broadcast %271 : vector<16x1xf32> to vector<16x16xf32>
    %273 = arith.subf %269, %272 : vector<16x16xf32>
    %274 = math.exp %273 : vector<16x16xf32>
    %cst_105 = arith.constant dense<0.000000e+00> : vector<16xf32>
    %275 = vector.multi_reduction <add>, %274, %cst_105 [1] : vector<16x16xf32> to vector<16xf32>
    %276 = vector.shape_cast %275 : vector<16xf32> to vector<16x1xf32>
    %277 = tpu.reciprocal %276 {approx = true} : vector<16x1xf32> -> vector<16x1xf32>
    %278 = vector.broadcast %277 : vector<16x1xf32> to vector<16x16xf32>
    %279 = arith.mulf %274, %278 : vector<16x16xf32>
    %cst_106 = arith.constant dense<0.000000e+00> : vector<16x8xf32>
    %280 = tpu.matmul %279, %266, %cst_106 {dimension_numbers = #tpu.dot_dimension_numbers<[1], [0], [0], [1], [0, 0, 1, 1], [], []>} : vector<16x16xf32>, vector<16x8xf32>, vector<16x8xf32> -> vector<16x8xf32>
    %281 = vector.extract_strided_slice %246 {offsets = [0, 16], sizes = [16, 8], strides = [1, 1]} : vector<16x96xf32> to vector<16x8xf32>
    %282 = vector.extract_strided_slice %246 {offsets = [0, 48], sizes = [16, 8], strides = [1, 1]} : vector<16x96xf32> to vector<16x8xf32>
    %283 = vector.extract_strided_slice %246 {offsets = [0, 80], sizes = [16, 8], strides = [1, 1]} : vector<16x96xf32> to vector<16x8xf32>
    %cst_107 = arith.constant dense<0.000000e+00> : vector<16x16xf32>
    %284 = tpu.matmul %281, %282, %cst_107 {dimension_numbers = #tpu.dot_dimension_numbers<[1], [1], [0], [0], [0, 0, 1, 0], [], []>} : vector<16x8xf32>, vector<16x8xf32>, vector<16x16xf32> -> vector<16x16xf32>
    %cst_108 = arith.constant 0.353553385 : f32
    %285 = vector.broadcast %cst_108 : f32 to vector<16x16xf32>
    %286 = arith.mulf %284, %285 : vector<16x16xf32>
    %cst_109 = arith.constant dense<0xFF800000> : vector<16xf32>
    %287 = vector.multi_reduction <maximumf>, %286, %cst_109 [1] : vector<16x16xf32> to vector<16xf32>
    %288 = vector.shape_cast %287 : vector<16xf32> to vector<16x1xf32>
    %289 = vector.broadcast %288 : vector<16x1xf32> to vector<16x16xf32>
    %290 = arith.subf %286, %289 : vector<16x16xf32>
    %291 = math.exp %290 : vector<16x16xf32>
    %cst_110 = arith.constant dense<0.000000e+00> : vector<16xf32>
    %292 = vector.multi_reduction <add>, %291, %cst_110 [1] : vector<16x16xf32> to vector<16xf32>
    %293 = vector.shape_cast %292 : vector<16xf32> to vector<16x1xf32>
    %294 = tpu.reciprocal %293 {approx = true} : vector<16x1xf32> -> vector<16x1xf32>
    %295 = vector.broadcast %294 : vector<16x1xf32> to vector<16x16xf32>
    %296 = arith.mulf %291, %295 : vector<16x16xf32>
    %cst_111 = arith.constant dense<0.000000e+00> : vector<16x8xf32>
    %297 = tpu.matmul %296, %283, %cst_111 {dimension_numbers = #tpu.dot_dimension_numbers<[1], [0], [0], [1], [0, 0, 1, 1], [], []>} : vector<16x16xf32>, vector<16x8xf32>, vector<16x8xf32> -> vector<16x8xf32>
    %298 = vector.extract_strided_slice %246 {offsets = [0, 24], sizes = [16, 8], strides = [1, 1]} : vector<16x96xf32> to vector<16x8xf32>
    %299 = vector.extract_strided_slice %246 {offsets = [0, 56], sizes = [16, 8], strides = [1, 1]} : vector<16x96xf32> to vector<16x8xf32>
    %300 = vector.extract_strided_slice %246 {offsets = [0, 88], sizes = [16, 8], strides = [1, 1]} : vector<16x96xf32> to vector<16x8xf32>
    %cst_112 = arith.constant dense<0.000000e+00> : vector<16x16xf32>
    %301 = tpu.matmul %298, %299, %cst_112 {dimension_numbers = #tpu.dot_dimension_numbers<[1], [1], [0], [0], [0, 0, 1, 0], [], []>} : vector<16x8xf32>, vector<16x8xf32>, vector<16x16xf32> -> vector<16x16xf32>
    %cst_113 = arith.constant 0.353553385 : f32
    %302 = vector.broadcast %cst_113 : f32 to vector<16x16xf32>
    %303 = arith.mulf %301, %302 : vector<16x16xf32>
    %cst_114 = arith.constant dense<0xFF800000> : vector<16xf32>
    %304 = vector.multi_reduction <maximumf>, %303, %cst_114 [1] : vector<16x16xf32> to vector<16xf32>
    %305 = vector.shape_cast %304 : vector<16xf32> to vector<16x1xf32>
    %306 = vector.broadcast %305 : vector<16x1xf32> to vector<16x16xf32>
    %307 = arith.subf %303, %306 : vector<16x16xf32>
    %308 = math.exp %307 : vector<16x16xf32>
    %cst_115 = arith.constant dense<0.000000e+00> : vector<16xf32>
    %309 = vector.multi_reduction <add>, %308, %cst_115 [1] : vector<16x16xf32> to vector<16xf32>
    %310 = vector.shape_cast %309 : vector<16xf32> to vector<16x1xf32>
    %311 = tpu.reciprocal %310 {approx = true} : vector<16x1xf32> -> vector<16x1xf32>
    %312 = vector.broadcast %311 : vector<16x1xf32> to vector<16x16xf32>
    %313 = arith.mulf %308, %312 : vector<16x16xf32>
    %cst_116 = arith.constant dense<0.000000e+00> : vector<16x8xf32>
    %314 = tpu.matmul %313, %300, %cst_116 {dimension_numbers = #tpu.dot_dimension_numbers<[1], [0], [0], [1], [0, 0, 1, 1], [], []>} : vector<16x16xf32>, vector<16x8xf32>, vector<16x8xf32> -> vector<16x8xf32>
    %315 = tpu.concatenate %263, %280, %297, %314 in 1 : vector<16x8xf32>, vector<16x8xf32>, vector<16x8xf32>, vector<16x8xf32> -> vector<16x32xf32>
    %c0_117 = arith.constant 0 : index
    %c160_118 = arith.constant 160 : index
    %316 = vector.load %arg4[%c0_117, %c160_118] : memref<32x512xf32, #tpu.memory_space<vmem>>, vector<32x32xf32>
    %cst_119 = arith.constant dense<0.000000e+00> : vector<16x32xf32>
    %317 = tpu.matmul %315, %316, %cst_119 {dimension_numbers = #tpu.dot_dimension_numbers<[1], [0], [0], [1], [0, 0, 1, 1], [], []>} : vector<16x32xf32>, vector<32x32xf32>, vector<16x32xf32> -> vector<16x32xf32>
    %c0_120 = arith.constant 0 : index
    %c352 = arith.constant 352 : index
    %318 = vector.load %arg3[%c0_120, %c352] : memref<1x1024xf32, #tpu.memory_space<vmem>>, vector<1x32xf32>
    %319 = vector.broadcast %318 : vector<1x32xf32> to vector<16x32xf32>
    %320 = arith.addf %317, %319 : vector<16x32xf32>
    %321 = arith.addf %238, %320 : vector<16x32xf32>
    %c0_121 = arith.constant 0 : index
    %c384 = arith.constant 384 : index
    %322 = vector.load %arg3[%c0_121, %c384] : memref<1x1024xf32, #tpu.memory_space<vmem>>, vector<1x32xf32>
    %c0_122 = arith.constant 0 : index
    %c416 = arith.constant 416 : index
    %323 = vector.load %arg3[%c0_122, %c416] : memref<1x1024xf32, #tpu.memory_space<vmem>>, vector<1x32xf32>
    %cst_123 = arith.constant dense<0.000000e+00> : vector<16xf32>
    %324 = vector.multi_reduction <add>, %321, %cst_123 [1] : vector<16x32xf32> to vector<16xf32>
    %325 = vector.shape_cast %324 : vector<16xf32> to vector<16x1xf32>
    %cst_124 = arith.constant 3.200000e+01 : f32
    %326 = vector.broadcast %cst_124 : f32 to vector<16x1xf32>
    %327 = arith.divf %325, %326 : vector<16x1xf32>
    %328 = vector.broadcast %327 : vector<16x1xf32> to vector<16x32xf32>
    %329 = arith.subf %321, %328 : vector<16x32xf32>
    %330 = arith.mulf %329, %329 : vector<16x32xf32>
    %cst_125 = arith.constant dense<0.000000e+00> : vector<16xf32>
    %331 = vector.multi_reduction <add>, %330, %cst_125 [1] : vector<16x32xf32> to vector<16xf32>
    %332 = vector.shape_cast %331 : vector<16xf32> to vector<16x1xf32>
    %cst_126 = arith.constant 3.200000e+01 : f32
    %333 = vector.broadcast %cst_126 : f32 to vector<16x1xf32>
    %334 = arith.divf %332, %333 : vector<16x1xf32>
    %cst_127 = arith.constant 9.99999974E-6 : f32
    %335 = vector.broadcast %cst_127 : f32 to vector<16x1xf32>
    %336 = arith.addf %334, %335 : vector<16x1xf32>
    %337 = math.rsqrt %336 : vector<16x1xf32>
    %338 = vector.broadcast %337 : vector<16x1xf32> to vector<16x32xf32>
    %339 = arith.mulf %329, %338 : vector<16x32xf32>
    %340 = vector.broadcast %322 : vector<1x32xf32> to vector<16x32xf32>
    %341 = arith.mulf %339, %340 : vector<16x32xf32>
    %342 = vector.broadcast %323 : vector<1x32xf32> to vector<16x32xf32>
    %343 = arith.addf %341, %342 : vector<16x32xf32>
    %c0_128 = arith.constant 0 : index
    %c192_129 = arith.constant 192 : index
    %344 = vector.load %arg4[%c0_128, %c192_129] : memref<32x512xf32, #tpu.memory_space<vmem>>, vector<32x64xf32>
    %cst_130 = arith.constant dense<0.000000e+00> : vector<16x64xf32>
    %345 = tpu.matmul %343, %344, %cst_130 {dimension_numbers = #tpu.dot_dimension_numbers<[1], [0], [0], [1], [0, 0, 1, 1], [], []>} : vector<16x32xf32>, vector<32x64xf32>, vector<16x64xf32> -> vector<16x64xf32>
    %c0_131 = arith.constant 0 : index
    %c448 = arith.constant 448 : index
    %346 = vector.load %arg3[%c0_131, %c448] : memref<1x1024xf32, #tpu.memory_space<vmem>>, vector<1x64xf32>
    %347 = vector.broadcast %346 : vector<1x64xf32> to vector<16x64xf32>
    %348 = arith.addf %345, %347 : vector<16x64xf32>
    %cst_132 = arith.constant 5.000000e-01 : f32
    %349 = vector.broadcast %cst_132 : f32 to vector<16x64xf32>
    %350 = arith.mulf %349, %348 : vector<16x64xf32>
    %cst_133 = arith.constant 0.707106769 : f32
    %351 = vector.broadcast %cst_133 : f32 to vector<16x64xf32>
    %352 = arith.mulf %348, %351 : vector<16x64xf32>
    %353 = math.absf %352 : vector<16x64xf32>
    %cst_134 = arith.constant 0.327591091 : f32
    %354 = vector.broadcast %cst_134 : f32 to vector<16x64xf32>
    %355 = arith.mulf %354, %353 : vector<16x64xf32>
    %cst_135 = arith.constant 1.000000e+00 : f32
    %356 = vector.broadcast %cst_135 : f32 to vector<16x64xf32>
    %357 = arith.addf %356, %355 : vector<16x64xf32>
    %cst_136 = arith.constant 1.000000e+00 : f32
    %358 = vector.broadcast %cst_136 : f32 to vector<16x64xf32>
    %359 = arith.divf %358, %357 : vector<16x64xf32>
    %cst_137 = arith.constant 1.06140542 : f32
    %360 = vector.broadcast %cst_137 : f32 to vector<16x64xf32>
    %361 = arith.mulf %359, %360 : vector<16x64xf32>
    %cst_138 = arith.constant -1.45315206 : f32
    %362 = vector.broadcast %cst_138 : f32 to vector<16x64xf32>
    %363 = arith.addf %362, %361 : vector<16x64xf32>
    %364 = arith.mulf %359, %363 : vector<16x64xf32>
    %cst_139 = arith.constant 1.42141378 : f32
    %365 = vector.broadcast %cst_139 : f32 to vector<16x64xf32>
    %366 = arith.addf %365, %364 : vector<16x64xf32>
    %367 = arith.mulf %359, %366 : vector<16x64xf32>
    %cst_140 = arith.constant -0.284496725 : f32
    %368 = vector.broadcast %cst_140 : f32 to vector<16x64xf32>
    %369 = arith.addf %368, %367 : vector<16x64xf32>
    %370 = arith.mulf %359, %369 : vector<16x64xf32>
    %cst_141 = arith.constant 0.254829586 : f32
    %371 = vector.broadcast %cst_141 : f32 to vector<16x64xf32>
    %372 = arith.addf %371, %370 : vector<16x64xf32>
    %373 = arith.mulf %359, %372 : vector<16x64xf32>
    %cst_142 = arith.constant 0.000000e+00 : f32
    %374 = vector.broadcast %cst_142 : f32 to vector<16x64xf32>
    %375 = arith.subf %374, %353 : vector<16x64xf32>
    %376 = arith.mulf %375, %353 : vector<16x64xf32>
    %377 = math.exp %376 : vector<16x64xf32>
    %378 = arith.mulf %373, %377 : vector<16x64xf32>
    %cst_143 = arith.constant 1.000000e+00 : f32
    %379 = vector.broadcast %cst_143 : f32 to vector<16x64xf32>
    %380 = arith.subf %379, %378 : vector<16x64xf32>
    %cst_144 = arith.constant 0.000000e+00 : f32
    %381 = vector.broadcast %cst_144 : f32 to vector<16x64xf32>
    %382 = arith.cmpf olt, %352, %381 : vector<16x64xf32>
    %cst_145 = arith.constant 0.000000e+00 : f32
    %383 = vector.broadcast %cst_145 : f32 to vector<16x64xf32>
    %384 = arith.subf %383, %380 : vector<16x64xf32>
    %385 = arith.select %382, %384, %380 : vector<16x64xi1>, vector<16x64xf32>
    %cst_146 = arith.constant 1.000000e+00 : f32
    %386 = vector.broadcast %cst_146 : f32 to vector<16x64xf32>
    %387 = arith.addf %386, %385 : vector<16x64xf32>
    %388 = arith.mulf %350, %387 : vector<16x64xf32>
    %c0_147 = arith.constant 0 : index
    %c64_148 = arith.constant 64 : index
    %389 = vector.load %arg5[%c0_147, %c64_148] : memref<128x128xf32, #tpu.memory_space<vmem>>, vector<64x32xf32>
    %cst_149 = arith.constant dense<0.000000e+00> : vector<16x32xf32>
    %390 = tpu.matmul %388, %389, %cst_149 {dimension_numbers = #tpu.dot_dimension_numbers<[1], [0], [0], [1], [0, 0, 1, 1], [], []>} : vector<16x64xf32>, vector<64x32xf32>, vector<16x32xf32> -> vector<16x32xf32>
    %c0_150 = arith.constant 0 : index
    %c512 = arith.constant 512 : index
    %391 = vector.load %arg3[%c0_150, %c512] : memref<1x1024xf32, #tpu.memory_space<vmem>>, vector<1x32xf32>
    %392 = vector.broadcast %391 : vector<1x32xf32> to vector<16x32xf32>
    %393 = arith.addf %390, %392 : vector<16x32xf32>
    %394 = arith.addf %343, %393 : vector<16x32xf32>
    %c0_151 = arith.constant 0 : index
    %c544 = arith.constant 544 : index
    %395 = vector.load %arg3[%c0_151, %c544] : memref<1x1024xf32, #tpu.memory_space<vmem>>, vector<1x32xf32>
    %c0_152 = arith.constant 0 : index
    %c576 = arith.constant 576 : index
    %396 = vector.load %arg3[%c0_152, %c576] : memref<1x1024xf32, #tpu.memory_space<vmem>>, vector<1x32xf32>
    %cst_153 = arith.constant dense<0.000000e+00> : vector<16xf32>
    %397 = vector.multi_reduction <add>, %394, %cst_153 [1] : vector<16x32xf32> to vector<16xf32>
    %398 = vector.shape_cast %397 : vector<16xf32> to vector<16x1xf32>
    %cst_154 = arith.constant 3.200000e+01 : f32
    %399 = vector.broadcast %cst_154 : f32 to vector<16x1xf32>
    %400 = arith.divf %398, %399 : vector<16x1xf32>
    %401 = vector.broadcast %400 : vector<16x1xf32> to vector<16x32xf32>
    %402 = arith.subf %394, %401 : vector<16x32xf32>
    %403 = arith.mulf %402, %402 : vector<16x32xf32>
    %cst_155 = arith.constant dense<0.000000e+00> : vector<16xf32>
    %404 = vector.multi_reduction <add>, %403, %cst_155 [1] : vector<16x32xf32> to vector<16xf32>
    %405 = vector.shape_cast %404 : vector<16xf32> to vector<16x1xf32>
    %cst_156 = arith.constant 3.200000e+01 : f32
    %406 = vector.broadcast %cst_156 : f32 to vector<16x1xf32>
    %407 = arith.divf %405, %406 : vector<16x1xf32>
    %cst_157 = arith.constant 9.99999974E-6 : f32
    %408 = vector.broadcast %cst_157 : f32 to vector<16x1xf32>
    %409 = arith.addf %407, %408 : vector<16x1xf32>
    %410 = math.rsqrt %409 : vector<16x1xf32>
    %411 = vector.broadcast %410 : vector<16x1xf32> to vector<16x32xf32>
    %412 = arith.mulf %402, %411 : vector<16x32xf32>
    %413 = vector.broadcast %395 : vector<1x32xf32> to vector<16x32xf32>
    %414 = arith.mulf %412, %413 : vector<16x32xf32>
    %415 = vector.broadcast %396 : vector<1x32xf32> to vector<16x32xf32>
    %416 = arith.addf %414, %415 : vector<16x32xf32>
    %c1 = arith.constant 1 : index
    %417 = memref.load %arg1[%c1] : memref<3xf32, #tpu.memory_space<smem>>
    %418 = vector.broadcast %417 : f32 to vector<16x32xf32>
    %419 = arith.mulf %418, %416 : vector<16x32xf32>
    %420 = arith.addf %241, %419 : vector<16x32xf32>
    %c0_158 = arith.constant 0 : index
    %c256_159 = arith.constant 256 : index
    %421 = vector.load %arg4[%c0_158, %c256_159] : memref<32x512xf32, #tpu.memory_space<vmem>>, vector<32x96xf32>
    %cst_160 = arith.constant dense<0.000000e+00> : vector<16x96xf32>
    %422 = tpu.matmul %416, %421, %cst_160 {dimension_numbers = #tpu.dot_dimension_numbers<[1], [0], [0], [1], [0, 0, 1, 1], [], []>} : vector<16x32xf32>, vector<32x96xf32>, vector<16x96xf32> -> vector<16x96xf32>
    %c0_161 = arith.constant 0 : index
    %c608 = arith.constant 608 : index
    %423 = vector.load %arg3[%c0_161, %c608] : memref<1x1024xf32, #tpu.memory_space<vmem>>, vector<1x96xf32>
    %424 = vector.broadcast %423 : vector<1x96xf32> to vector<16x96xf32>
    %425 = arith.addf %422, %424 : vector<16x96xf32>
    %426 = vector.extract_strided_slice %425 {offsets = [0, 0], sizes = [16, 8], strides = [1, 1]} : vector<16x96xf32> to vector<16x8xf32>
    %427 = vector.extract_strided_slice %425 {offsets = [0, 32], sizes = [16, 8], strides = [1, 1]} : vector<16x96xf32> to vector<16x8xf32>
    %428 = vector.extract_strided_slice %425 {offsets = [0, 64], sizes = [16, 8], strides = [1, 1]} : vector<16x96xf32> to vector<16x8xf32>
    %cst_162 = arith.constant dense<0.000000e+00> : vector<16x16xf32>
    %429 = tpu.matmul %426, %427, %cst_162 {dimension_numbers = #tpu.dot_dimension_numbers<[1], [1], [0], [0], [0, 0, 1, 0], [], []>} : vector<16x8xf32>, vector<16x8xf32>, vector<16x16xf32> -> vector<16x16xf32>
    %cst_163 = arith.constant 0.353553385 : f32
    %430 = vector.broadcast %cst_163 : f32 to vector<16x16xf32>
    %431 = arith.mulf %429, %430 : vector<16x16xf32>
    %cst_164 = arith.constant dense<0xFF800000> : vector<16xf32>
    %432 = vector.multi_reduction <maximumf>, %431, %cst_164 [1] : vector<16x16xf32> to vector<16xf32>
    %433 = vector.shape_cast %432 : vector<16xf32> to vector<16x1xf32>
    %434 = vector.broadcast %433 : vector<16x1xf32> to vector<16x16xf32>
    %435 = arith.subf %431, %434 : vector<16x16xf32>
    %436 = math.exp %435 : vector<16x16xf32>
    %cst_165 = arith.constant dense<0.000000e+00> : vector<16xf32>
    %437 = vector.multi_reduction <add>, %436, %cst_165 [1] : vector<16x16xf32> to vector<16xf32>
    %438 = vector.shape_cast %437 : vector<16xf32> to vector<16x1xf32>
    %439 = tpu.reciprocal %438 {approx = true} : vector<16x1xf32> -> vector<16x1xf32>
    %440 = vector.broadcast %439 : vector<16x1xf32> to vector<16x16xf32>
    %441 = arith.mulf %436, %440 : vector<16x16xf32>
    %cst_166 = arith.constant dense<0.000000e+00> : vector<16x8xf32>
    %442 = tpu.matmul %441, %428, %cst_166 {dimension_numbers = #tpu.dot_dimension_numbers<[1], [0], [0], [1], [0, 0, 1, 1], [], []>} : vector<16x16xf32>, vector<16x8xf32>, vector<16x8xf32> -> vector<16x8xf32>
    %443 = vector.extract_strided_slice %425 {offsets = [0, 8], sizes = [16, 8], strides = [1, 1]} : vector<16x96xf32> to vector<16x8xf32>
    %444 = vector.extract_strided_slice %425 {offsets = [0, 40], sizes = [16, 8], strides = [1, 1]} : vector<16x96xf32> to vector<16x8xf32>
    %445 = vector.extract_strided_slice %425 {offsets = [0, 72], sizes = [16, 8], strides = [1, 1]} : vector<16x96xf32> to vector<16x8xf32>
    %cst_167 = arith.constant dense<0.000000e+00> : vector<16x16xf32>
    %446 = tpu.matmul %443, %444, %cst_167 {dimension_numbers = #tpu.dot_dimension_numbers<[1], [1], [0], [0], [0, 0, 1, 0], [], []>} : vector<16x8xf32>, vector<16x8xf32>, vector<16x16xf32> -> vector<16x16xf32>
    %cst_168 = arith.constant 0.353553385 : f32
    %447 = vector.broadcast %cst_168 : f32 to vector<16x16xf32>
    %448 = arith.mulf %446, %447 : vector<16x16xf32>
    %cst_169 = arith.constant dense<0xFF800000> : vector<16xf32>
    %449 = vector.multi_reduction <maximumf>, %448, %cst_169 [1] : vector<16x16xf32> to vector<16xf32>
    %450 = vector.shape_cast %449 : vector<16xf32> to vector<16x1xf32>
    %451 = vector.broadcast %450 : vector<16x1xf32> to vector<16x16xf32>
    %452 = arith.subf %448, %451 : vector<16x16xf32>
    %453 = math.exp %452 : vector<16x16xf32>
    %cst_170 = arith.constant dense<0.000000e+00> : vector<16xf32>
    %454 = vector.multi_reduction <add>, %453, %cst_170 [1] : vector<16x16xf32> to vector<16xf32>
    %455 = vector.shape_cast %454 : vector<16xf32> to vector<16x1xf32>
    %456 = tpu.reciprocal %455 {approx = true} : vector<16x1xf32> -> vector<16x1xf32>
    %457 = vector.broadcast %456 : vector<16x1xf32> to vector<16x16xf32>
    %458 = arith.mulf %453, %457 : vector<16x16xf32>
    %cst_171 = arith.constant dense<0.000000e+00> : vector<16x8xf32>
    %459 = tpu.matmul %458, %445, %cst_171 {dimension_numbers = #tpu.dot_dimension_numbers<[1], [0], [0], [1], [0, 0, 1, 1], [], []>} : vector<16x16xf32>, vector<16x8xf32>, vector<16x8xf32> -> vector<16x8xf32>
    %460 = vector.extract_strided_slice %425 {offsets = [0, 16], sizes = [16, 8], strides = [1, 1]} : vector<16x96xf32> to vector<16x8xf32>
    %461 = vector.extract_strided_slice %425 {offsets = [0, 48], sizes = [16, 8], strides = [1, 1]} : vector<16x96xf32> to vector<16x8xf32>
    %462 = vector.extract_strided_slice %425 {offsets = [0, 80], sizes = [16, 8], strides = [1, 1]} : vector<16x96xf32> to vector<16x8xf32>
    %cst_172 = arith.constant dense<0.000000e+00> : vector<16x16xf32>
    %463 = tpu.matmul %460, %461, %cst_172 {dimension_numbers = #tpu.dot_dimension_numbers<[1], [1], [0], [0], [0, 0, 1, 0], [], []>} : vector<16x8xf32>, vector<16x8xf32>, vector<16x16xf32> -> vector<16x16xf32>
    %cst_173 = arith.constant 0.353553385 : f32
    %464 = vector.broadcast %cst_173 : f32 to vector<16x16xf32>
    %465 = arith.mulf %463, %464 : vector<16x16xf32>
    %cst_174 = arith.constant dense<0xFF800000> : vector<16xf32>
    %466 = vector.multi_reduction <maximumf>, %465, %cst_174 [1] : vector<16x16xf32> to vector<16xf32>
    %467 = vector.shape_cast %466 : vector<16xf32> to vector<16x1xf32>
    %468 = vector.broadcast %467 : vector<16x1xf32> to vector<16x16xf32>
    %469 = arith.subf %465, %468 : vector<16x16xf32>
    %470 = math.exp %469 : vector<16x16xf32>
    %cst_175 = arith.constant dense<0.000000e+00> : vector<16xf32>
    %471 = vector.multi_reduction <add>, %470, %cst_175 [1] : vector<16x16xf32> to vector<16xf32>
    %472 = vector.shape_cast %471 : vector<16xf32> to vector<16x1xf32>
    %473 = tpu.reciprocal %472 {approx = true} : vector<16x1xf32> -> vector<16x1xf32>
    %474 = vector.broadcast %473 : vector<16x1xf32> to vector<16x16xf32>
    %475 = arith.mulf %470, %474 : vector<16x16xf32>
    %cst_176 = arith.constant dense<0.000000e+00> : vector<16x8xf32>
    %476 = tpu.matmul %475, %462, %cst_176 {dimension_numbers = #tpu.dot_dimension_numbers<[1], [0], [0], [1], [0, 0, 1, 1], [], []>} : vector<16x16xf32>, vector<16x8xf32>, vector<16x8xf32> -> vector<16x8xf32>
    %477 = vector.extract_strided_slice %425 {offsets = [0, 24], sizes = [16, 8], strides = [1, 1]} : vector<16x96xf32> to vector<16x8xf32>
    %478 = vector.extract_strided_slice %425 {offsets = [0, 56], sizes = [16, 8], strides = [1, 1]} : vector<16x96xf32> to vector<16x8xf32>
    %479 = vector.extract_strided_slice %425 {offsets = [0, 88], sizes = [16, 8], strides = [1, 1]} : vector<16x96xf32> to vector<16x8xf32>
    %cst_177 = arith.constant dense<0.000000e+00> : vector<16x16xf32>
    %480 = tpu.matmul %477, %478, %cst_177 {dimension_numbers = #tpu.dot_dimension_numbers<[1], [1], [0], [0], [0, 0, 1, 0], [], []>} : vector<16x8xf32>, vector<16x8xf32>, vector<16x16xf32> -> vector<16x16xf32>
    %cst_178 = arith.constant 0.353553385 : f32
    %481 = vector.broadcast %cst_178 : f32 to vector<16x16xf32>
    %482 = arith.mulf %480, %481 : vector<16x16xf32>
    %cst_179 = arith.constant dense<0xFF800000> : vector<16xf32>
    %483 = vector.multi_reduction <maximumf>, %482, %cst_179 [1] : vector<16x16xf32> to vector<16xf32>
    %484 = vector.shape_cast %483 : vector<16xf32> to vector<16x1xf32>
    %485 = vector.broadcast %484 : vector<16x1xf32> to vector<16x16xf32>
    %486 = arith.subf %482, %485 : vector<16x16xf32>
    %487 = math.exp %486 : vector<16x16xf32>
    %cst_180 = arith.constant dense<0.000000e+00> : vector<16xf32>
    %488 = vector.multi_reduction <add>, %487, %cst_180 [1] : vector<16x16xf32> to vector<16xf32>
    %489 = vector.shape_cast %488 : vector<16xf32> to vector<16x1xf32>
    %490 = tpu.reciprocal %489 {approx = true} : vector<16x1xf32> -> vector<16x1xf32>
    %491 = vector.broadcast %490 : vector<16x1xf32> to vector<16x16xf32>
    %492 = arith.mulf %487, %491 : vector<16x16xf32>
    %cst_181 = arith.constant dense<0.000000e+00> : vector<16x8xf32>
    %493 = tpu.matmul %492, %479, %cst_181 {dimension_numbers = #tpu.dot_dimension_numbers<[1], [0], [0], [1], [0, 0, 1, 1], [], []>} : vector<16x16xf32>, vector<16x8xf32>, vector<16x8xf32> -> vector<16x8xf32>
    %494 = tpu.concatenate %442, %459, %476, %493 in 1 : vector<16x8xf32>, vector<16x8xf32>, vector<16x8xf32>, vector<16x8xf32> -> vector<16x32xf32>
    %c0_182 = arith.constant 0 : index
    %c352_183 = arith.constant 352 : index
    %495 = vector.load %arg4[%c0_182, %c352_183] : memref<32x512xf32, #tpu.memory_space<vmem>>, vector<32x32xf32>
    %cst_184 = arith.constant dense<0.000000e+00> : vector<16x32xf32>
    %496 = tpu.matmul %494, %495, %cst_184 {dimension_numbers = #tpu.dot_dimension_numbers<[1], [0], [0], [1], [0, 0, 1, 1], [], []>} : vector<16x32xf32>, vector<32x32xf32>, vector<16x32xf32> -> vector<16x32xf32>
    %c0_185 = arith.constant 0 : index
    %c704 = arith.constant 704 : index
    %497 = vector.load %arg3[%c0_185, %c704] : memref<1x1024xf32, #tpu.memory_space<vmem>>, vector<1x32xf32>
    %498 = vector.broadcast %497 : vector<1x32xf32> to vector<16x32xf32>
    %499 = arith.addf %496, %498 : vector<16x32xf32>
    %500 = arith.addf %416, %499 : vector<16x32xf32>
    %c0_186 = arith.constant 0 : index
    %c736 = arith.constant 736 : index
    %501 = vector.load %arg3[%c0_186, %c736] : memref<1x1024xf32, #tpu.memory_space<vmem>>, vector<1x32xf32>
    %c0_187 = arith.constant 0 : index
    %c768 = arith.constant 768 : index
    %502 = vector.load %arg3[%c0_187, %c768] : memref<1x1024xf32, #tpu.memory_space<vmem>>, vector<1x32xf32>
    %cst_188 = arith.constant dense<0.000000e+00> : vector<16xf32>
    %503 = vector.multi_reduction <add>, %500, %cst_188 [1] : vector<16x32xf32> to vector<16xf32>
    %504 = vector.shape_cast %503 : vector<16xf32> to vector<16x1xf32>
    %cst_189 = arith.constant 3.200000e+01 : f32
    %505 = vector.broadcast %cst_189 : f32 to vector<16x1xf32>
    %506 = arith.divf %504, %505 : vector<16x1xf32>
    %507 = vector.broadcast %506 : vector<16x1xf32> to vector<16x32xf32>
    %508 = arith.subf %500, %507 : vector<16x32xf32>
    %509 = arith.mulf %508, %508 : vector<16x32xf32>
    %cst_190 = arith.constant dense<0.000000e+00> : vector<16xf32>
    %510 = vector.multi_reduction <add>, %509, %cst_190 [1] : vector<16x32xf32> to vector<16xf32>
    %511 = vector.shape_cast %510 : vector<16xf32> to vector<16x1xf32>
    %cst_191 = arith.constant 3.200000e+01 : f32
    %512 = vector.broadcast %cst_191 : f32 to vector<16x1xf32>
    %513 = arith.divf %511, %512 : vector<16x1xf32>
    %cst_192 = arith.constant 9.99999974E-6 : f32
    %514 = vector.broadcast %cst_192 : f32 to vector<16x1xf32>
    %515 = arith.addf %513, %514 : vector<16x1xf32>
    %516 = math.rsqrt %515 : vector<16x1xf32>
    %517 = vector.broadcast %516 : vector<16x1xf32> to vector<16x32xf32>
    %518 = arith.mulf %508, %517 : vector<16x32xf32>
    %519 = vector.broadcast %501 : vector<1x32xf32> to vector<16x32xf32>
    %520 = arith.mulf %518, %519 : vector<16x32xf32>
    %521 = vector.broadcast %502 : vector<1x32xf32> to vector<16x32xf32>
    %522 = arith.addf %520, %521 : vector<16x32xf32>
    %c0_193 = arith.constant 0 : index
    %c384_194 = arith.constant 384 : index
    %523 = vector.load %arg4[%c0_193, %c384_194] : memref<32x512xf32, #tpu.memory_space<vmem>>, vector<32x64xf32>
    %cst_195 = arith.constant dense<0.000000e+00> : vector<16x64xf32>
    %524 = tpu.matmul %522, %523, %cst_195 {dimension_numbers = #tpu.dot_dimension_numbers<[1], [0], [0], [1], [0, 0, 1, 1], [], []>} : vector<16x32xf32>, vector<32x64xf32>, vector<16x64xf32> -> vector<16x64xf32>
    %c0_196 = arith.constant 0 : index
    %c800 = arith.constant 800 : index
    %525 = vector.load %arg3[%c0_196, %c800] : memref<1x1024xf32, #tpu.memory_space<vmem>>, vector<1x64xf32>
    %526 = vector.broadcast %525 : vector<1x64xf32> to vector<16x64xf32>
    %527 = arith.addf %524, %526 : vector<16x64xf32>
    %cst_197 = arith.constant 5.000000e-01 : f32
    %528 = vector.broadcast %cst_197 : f32 to vector<16x64xf32>
    %529 = arith.mulf %528, %527 : vector<16x64xf32>
    %cst_198 = arith.constant 0.707106769 : f32
    %530 = vector.broadcast %cst_198 : f32 to vector<16x64xf32>
    %531 = arith.mulf %527, %530 : vector<16x64xf32>
    %532 = math.absf %531 : vector<16x64xf32>
    %cst_199 = arith.constant 0.327591091 : f32
    %533 = vector.broadcast %cst_199 : f32 to vector<16x64xf32>
    %534 = arith.mulf %533, %532 : vector<16x64xf32>
    %cst_200 = arith.constant 1.000000e+00 : f32
    %535 = vector.broadcast %cst_200 : f32 to vector<16x64xf32>
    %536 = arith.addf %535, %534 : vector<16x64xf32>
    %cst_201 = arith.constant 1.000000e+00 : f32
    %537 = vector.broadcast %cst_201 : f32 to vector<16x64xf32>
    %538 = arith.divf %537, %536 : vector<16x64xf32>
    %cst_202 = arith.constant 1.06140542 : f32
    %539 = vector.broadcast %cst_202 : f32 to vector<16x64xf32>
    %540 = arith.mulf %538, %539 : vector<16x64xf32>
    %cst_203 = arith.constant -1.45315206 : f32
    %541 = vector.broadcast %cst_203 : f32 to vector<16x64xf32>
    %542 = arith.addf %541, %540 : vector<16x64xf32>
    %543 = arith.mulf %538, %542 : vector<16x64xf32>
    %cst_204 = arith.constant 1.42141378 : f32
    %544 = vector.broadcast %cst_204 : f32 to vector<16x64xf32>
    %545 = arith.addf %544, %543 : vector<16x64xf32>
    %546 = arith.mulf %538, %545 : vector<16x64xf32>
    %cst_205 = arith.constant -0.284496725 : f32
    %547 = vector.broadcast %cst_205 : f32 to vector<16x64xf32>
    %548 = arith.addf %547, %546 : vector<16x64xf32>
    %549 = arith.mulf %538, %548 : vector<16x64xf32>
    %cst_206 = arith.constant 0.254829586 : f32
    %550 = vector.broadcast %cst_206 : f32 to vector<16x64xf32>
    %551 = arith.addf %550, %549 : vector<16x64xf32>
    %552 = arith.mulf %538, %551 : vector<16x64xf32>
    %cst_207 = arith.constant 0.000000e+00 : f32
    %553 = vector.broadcast %cst_207 : f32 to vector<16x64xf32>
    %554 = arith.subf %553, %532 : vector<16x64xf32>
    %555 = arith.mulf %554, %532 : vector<16x64xf32>
    %556 = math.exp %555 : vector<16x64xf32>
    %557 = arith.mulf %552, %556 : vector<16x64xf32>
    %cst_208 = arith.constant 1.000000e+00 : f32
    %558 = vector.broadcast %cst_208 : f32 to vector<16x64xf32>
    %559 = arith.subf %558, %557 : vector<16x64xf32>
    %cst_209 = arith.constant 0.000000e+00 : f32
    %560 = vector.broadcast %cst_209 : f32 to vector<16x64xf32>
    %561 = arith.cmpf olt, %531, %560 : vector<16x64xf32>
    %cst_210 = arith.constant 0.000000e+00 : f32
    %562 = vector.broadcast %cst_210 : f32 to vector<16x64xf32>
    %563 = arith.subf %562, %559 : vector<16x64xf32>
    %564 = arith.select %561, %563, %559 : vector<16x64xi1>, vector<16x64xf32>
    %cst_211 = arith.constant 1.000000e+00 : f32
    %565 = vector.broadcast %cst_211 : f32 to vector<16x64xf32>
    %566 = arith.addf %565, %564 : vector<16x64xf32>
    %567 = arith.mulf %529, %566 : vector<16x64xf32>
    %c0_212 = arith.constant 0 : index
    %c96_213 = arith.constant 96 : index
    %568 = vector.load %arg5[%c0_212, %c96_213] : memref<128x128xf32, #tpu.memory_space<vmem>>, vector<64x32xf32>
    %cst_214 = arith.constant dense<0.000000e+00> : vector<16x32xf32>
    %569 = tpu.matmul %567, %568, %cst_214 {dimension_numbers = #tpu.dot_dimension_numbers<[1], [0], [0], [1], [0, 0, 1, 1], [], []>} : vector<16x64xf32>, vector<64x32xf32>, vector<16x32xf32> -> vector<16x32xf32>
    %c0_215 = arith.constant 0 : index
    %c864 = arith.constant 864 : index
    %570 = vector.load %arg3[%c0_215, %c864] : memref<1x1024xf32, #tpu.memory_space<vmem>>, vector<1x32xf32>
    %571 = vector.broadcast %570 : vector<1x32xf32> to vector<16x32xf32>
    %572 = arith.addf %569, %571 : vector<16x32xf32>
    %573 = arith.addf %522, %572 : vector<16x32xf32>
    %c0_216 = arith.constant 0 : index
    %c896 = arith.constant 896 : index
    %574 = vector.load %arg3[%c0_216, %c896] : memref<1x1024xf32, #tpu.memory_space<vmem>>, vector<1x32xf32>
    %c0_217 = arith.constant 0 : index
    %c928 = arith.constant 928 : index
    %575 = vector.load %arg3[%c0_217, %c928] : memref<1x1024xf32, #tpu.memory_space<vmem>>, vector<1x32xf32>
    %cst_218 = arith.constant dense<0.000000e+00> : vector<16xf32>
    %576 = vector.multi_reduction <add>, %573, %cst_218 [1] : vector<16x32xf32> to vector<16xf32>
    %577 = vector.shape_cast %576 : vector<16xf32> to vector<16x1xf32>
    %cst_219 = arith.constant 3.200000e+01 : f32
    %578 = vector.broadcast %cst_219 : f32 to vector<16x1xf32>
    %579 = arith.divf %577, %578 : vector<16x1xf32>
    %580 = vector.broadcast %579 : vector<16x1xf32> to vector<16x32xf32>
    %581 = arith.subf %573, %580 : vector<16x32xf32>
    %582 = arith.mulf %581, %581 : vector<16x32xf32>
    %cst_220 = arith.constant dense<0.000000e+00> : vector<16xf32>
    %583 = vector.multi_reduction <add>, %582, %cst_220 [1] : vector<16x32xf32> to vector<16xf32>
    %584 = vector.shape_cast %583 : vector<16xf32> to vector<16x1xf32>
    %cst_221 = arith.constant 3.200000e+01 : f32
    %585 = vector.broadcast %cst_221 : f32 to vector<16x1xf32>
    %586 = arith.divf %584, %585 : vector<16x1xf32>
    %cst_222 = arith.constant 9.99999974E-6 : f32
    %587 = vector.broadcast %cst_222 : f32 to vector<16x1xf32>
    %588 = arith.addf %586, %587 : vector<16x1xf32>
    %589 = math.rsqrt %588 : vector<16x1xf32>
    %590 = vector.broadcast %589 : vector<16x1xf32> to vector<16x32xf32>
    %591 = arith.mulf %581, %590 : vector<16x32xf32>
    %592 = vector.broadcast %574 : vector<1x32xf32> to vector<16x32xf32>
    %593 = arith.mulf %591, %592 : vector<16x32xf32>
    %594 = vector.broadcast %575 : vector<1x32xf32> to vector<16x32xf32>
    %595 = arith.addf %593, %594 : vector<16x32xf32>
    %c2 = arith.constant 2 : index
    %596 = memref.load %arg1[%c2] : memref<3xf32, #tpu.memory_space<smem>>
    %597 = vector.broadcast %596 : f32 to vector<16x32xf32>
    %598 = arith.mulf %597, %595 : vector<16x32xf32>
    %599 = arith.addf %420, %598 : vector<16x32xf32>
    %600 = vector.extract_strided_slice %599 {offsets = [0, 0], sizes = [1, 32], strides = [1, 1]} : vector<16x32xf32> to vector<1x32xf32>
    %601 = vector.extract_strided_slice %599 {offsets = [1, 0], sizes = [1, 32], strides = [1, 1]} : vector<16x32xf32> to vector<1x32xf32>
    %602 = vector.extract_strided_slice %599 {offsets = [2, 0], sizes = [1, 32], strides = [1, 1]} : vector<16x32xf32> to vector<1x32xf32>
    %603 = vector.extract_strided_slice %599 {offsets = [3, 0], sizes = [1, 32], strides = [1, 1]} : vector<16x32xf32> to vector<1x32xf32>
    %604 = vector.extract_strided_slice %599 {offsets = [4, 0], sizes = [1, 32], strides = [1, 1]} : vector<16x32xf32> to vector<1x32xf32>
    %605 = vector.extract_strided_slice %599 {offsets = [5, 0], sizes = [1, 32], strides = [1, 1]} : vector<16x32xf32> to vector<1x32xf32>
    %606 = vector.extract_strided_slice %599 {offsets = [6, 0], sizes = [1, 32], strides = [1, 1]} : vector<16x32xf32> to vector<1x32xf32>
    %607 = vector.extract_strided_slice %599 {offsets = [7, 0], sizes = [1, 32], strides = [1, 1]} : vector<16x32xf32> to vector<1x32xf32>
    %608 = vector.extract_strided_slice %599 {offsets = [8, 0], sizes = [1, 32], strides = [1, 1]} : vector<16x32xf32> to vector<1x32xf32>
    %609 = vector.extract_strided_slice %599 {offsets = [9, 0], sizes = [1, 32], strides = [1, 1]} : vector<16x32xf32> to vector<1x32xf32>
    %610 = vector.extract_strided_slice %599 {offsets = [10, 0], sizes = [1, 32], strides = [1, 1]} : vector<16x32xf32> to vector<1x32xf32>
    %611 = vector.extract_strided_slice %599 {offsets = [11, 0], sizes = [1, 32], strides = [1, 1]} : vector<16x32xf32> to vector<1x32xf32>
    %612 = vector.extract_strided_slice %599 {offsets = [12, 0], sizes = [1, 32], strides = [1, 1]} : vector<16x32xf32> to vector<1x32xf32>
    %613 = vector.extract_strided_slice %599 {offsets = [13, 0], sizes = [1, 32], strides = [1, 1]} : vector<16x32xf32> to vector<1x32xf32>
    %614 = vector.extract_strided_slice %599 {offsets = [14, 0], sizes = [1, 32], strides = [1, 1]} : vector<16x32xf32> to vector<1x32xf32>
    %615 = vector.extract_strided_slice %599 {offsets = [15, 0], sizes = [1, 32], strides = [1, 1]} : vector<16x32xf32> to vector<1x32xf32>
    %616 = tpu.concatenate %600, %601, %602, %603, %604, %605, %606, %607, %608, %609, %610, %611, %612, %613, %614, %615 in 1 : vector<1x32xf32>, vector<1x32xf32>, vector<1x32xf32>, vector<1x32xf32>, vector<1x32xf32>, vector<1x32xf32>, vector<1x32xf32>, vector<1x32xf32>, vector<1x32xf32>, vector<1x32xf32>, vector<1x32xf32>, vector<1x32xf32>, vector<1x32xf32>, vector<1x32xf32>, vector<1x32xf32>, vector<1x32xf32> -> vector<1x512xf32>
    %c0_223 = arith.constant 0 : index
    %c0_224 = arith.constant 0 : index
    %c0_225 = arith.constant 0 : index
    %617 = vector.load %arg6[%c0_223, %c0_224, %c0_225] : memref<1x1x512xf32, #tpu.memory_space<vmem>>, vector<1x1x512xf32>
    %618 = vector.shape_cast %617 : vector<1x1x512xf32> to vector<1x512xf32>
    %619 = vector.shape_cast %616 : vector<1x512xf32> to vector<1x1x512xf32>
    tpu.vector_store %arg6[%c0_223, %c0_224, %c0_225], %619 {strides = array<i32>} : memref<1x1x512xf32, #tpu.memory_space<vmem>>, vector<1x1x512xf32>,
    return
  }
  func.func @transform_0(%arg0: i32) -> i32 {
    %c0_i32 = arith.constant 0 : i32
    %c0_i32_0 = arith.constant 0 : i32
    return %c0_i32 : i32
  }
  func.func @transform_1(%arg0: i32) -> (i32, i32, i32) {
    %c0_i32 = arith.constant 0 : i32
    %c0_i32_0 = arith.constant 0 : i32
    %c0_i32_1 = arith.constant 0 : i32
    return %arg0, %c0_i32, %c0_i32_0 : i32, i32, i32
  }
  func.func @transform_2(%arg0: i32) -> (i32, i32) {
    %c0_i32 = arith.constant 0 : i32
    %c0_i32_0 = arith.constant 0 : i32
    %c0_i32_1 = arith.constant 0 : i32
    return %c0_i32, %c0_i32_0 : i32, i32
  }
  func.func @transform_3(%arg0: i32) -> (i32, i32) {
    %c0_i32 = arith.constant 0 : i32
    %c0_i32_0 = arith.constant 0 : i32
    %c0_i32_1 = arith.constant 0 : i32
    return %c0_i32, %c0_i32_0 : i32, i32
  }
  func.func @transform_4(%arg0: i32) -> (i32, i32) {
    %c0_i32 = arith.constant 0 : i32
    %c0_i32_0 = arith.constant 0 : i32
    %c0_i32_1 = arith.constant 0 : i32
    return %c0_i32, %c0_i32_0 : i32, i32
  }
  func.func @transform_5(%arg0: i32) -> (i32, i32, i32) {
    %c0_i32 = arith.constant 0 : i32
    %c0_i32_0 = arith.constant 0 : i32
    %c0_i32_1 = arith.constant 0 : i32
    return %arg0, %c0_i32, %c0_i32_0 : i32, i32, i32
  }
}

</mosaic_0001>

<llo_original>
// kernel: s3prl_forward.1
$region0: #{s3prl_forward.1}
  #allocation0 [shape = 'u32[]', space=smem, size = 0x4, offset = 0x4, fixed_abs, tag = 'smem constant byte address 0x4 - core index']
  #allocation1 [shape = 'u32[144,128]{1,0:T(1,128)}', space=vmem, size = 0x12000, scoped, tag = 'internal scratch']
  %s0 = inlined_call_operand.vmem [shape: f32[3], index: 0, kind: input, shape index: {}]
  %s1 = inlined_call_operand.vmem [shape: f32[2,4,64], index: 1, kind: input, shape index: {}]
  %s2 = inlined_call_operand.vmem [shape: f32[1,1024], index: 2, kind: input, shape index: {}]
  %s3 = inlined_call_operand.vmem [shape: f32[32,512], index: 3, kind: input, shape index: {}]
  %s4 = inlined_call_operand.vmem [shape: f32[128,128], index: 4, kind: input, shape index: {}]
  %s5 = inlined_call_operand.vmem [shape: f32[2,1,512], index: 5, kind: output, shape index: {}]
  %s6 = sld [smem:[#allocation0]]
  $region57: #{s3prl_forward.1} parent=0
    _
  %s8 = ssub.s32 1, %s6
  %s9 = scalar_select 0, %s8, %s6
  $region1: #{s3prl_forward.1} parent=0
    #allocation2 [shape = 'u8[512]{0}', space=smem, size = 0x200, scoped, tag = 'input window, operand 0, single buffered']
    #allocation3 [shape = 's32[2]{0}', space=sflag, size = 0x8, scoped, tag = 'scoped memory for s3prl_forward.1']
    %10 = vsyncpa [#allocation3], 0
    loop: start=0, step=1, limit=4
    $region2: #{s3prl_forward.1} parent=1 // loop_pre_header
      _
    $region3: #{s3prl_forward.1} parent=1 // loop_header
      %s12 = sphi 0, %s16
      %p13 = scmp.ge.s32.totalorder %s12, 4
      %s20 = sphi 0, %s20
      %s22 = sphi 0, %s20
      %s23 = sphi 0, %s22
      %s37 = sphi 0, %s23
      %s43 = sphi 0, %s45
      %s46 = sphi 0, %s43
      %s47 = sphi 0, %s46
      %s63 = sphi 0, %s47
      %s67 = sphi 0, %s67
      %s69 = sphi 0, %s67
      %s70 = sphi 0, %s69
      %s84 = sphi 0, %s70
      %s88 = sphi 0, %s88
      %s90 = sphi 0, %s88
      %s91 = sphi 0, %s90
      %s105 = sphi 0, %s91
      %s109 = sphi 0, %s109
      %s111 = sphi 0, %s109
      %s112 = sphi 0, %s111
      %s126 = sphi 0, %s112
      %s132 = sphi 0, %s134
      %s135 = sphi 0, %s132
      %s136 = sphi 0, %s135
      %s152 = sphi 0, %s136
    $region4: #{s3prl_forward.1} parent=1 // loop_header_branch
      %15 = sbr.rel (%p13) target = $region8
    $region5: #{s3prl_forward.1} parent=1 // loop_body
      %s17 = ssub.s32 %s12, 1
      %s18 = ssub.s32 %s12, 2
      %s19 = sadd.s32 %s12, 1
      %s21 = sadd.s32 %s20, 1
      %p24 = scmp.eq.s32.totalorder %s12, 1
      %p25 = scmp.ne.s32.totalorder %s20, %s22
      %p26 = scmp.eq.s32.totalorder %s12, 0
      %p27 = por %p25, %p26
      %p28 = scmp.ne.s32.totalorder %s20, %s22
      %p29 = scmp.eq.s32.totalorder %s17, 1
      %p30 = por %p28, %p29
      %p31 = scmp.ne.s32.totalorder %s22, %s23
      %p32 = scmp.eq.s32.totalorder %s17, 0
      %p33 = por %p31, %p32
      %p34 = scmp.ne.s32.totalorder %s22, %s23
      %p35 = scmp.eq.s32.totalorder %s18, 1
      %p36 = por %p34, %p35
      %p38 = scmp.ne.s32.totalorder %s23, %s37
      %p39 = scmp.eq.s32.totalorder %s18, 0
      %p40 = por %p38, %p39
      %s41 = ssub.s32 %s12, %s19
      %p42 = scmp.eq.s32.totalorder %s41, 0
      %s44 = sadd.s32 %s43, 1
      %s45 = scalar_select %p42, %s43, %s44
      %p48 = pneg %p42
      %p49 = scmp.eq.s32.totalorder %s12, 1
      %p50 = por %p48, %p49
      %p51 = scmp.ne.s32.totalorder %s43, %s46
      %p52 = scmp.eq.s32.totalorder %s12, 0
      %p53 = por %p51, %p52
      %p54 = scmp.ne.s32.totalorder %s43, %s46
      %p55 = scmp.eq.s32.totalorder %s17, 1
      %p56 = por %p54, %p55
      %p57 = scmp.ne.s32.totalorder %s46, %s47
      %p58 = scmp.eq.s32.totalorder %s17, 0
      %p59 = por %p57, %p58
      %p60 = scmp.ne.s32.totalorder %s46, %s47
      %p61 = scmp.eq.s32.totalorder %s18, 1
      %p62 = por %p60, %p61
      %p64 = scmp.ne.s32.totalorder %s47, %s63
      %p65 = scmp.eq.s32.totalorder %s18, 0
      %p66 = por %p64, %p65
      %s68 = sadd.s32 %s67, 1
      %p71 = scmp.eq.s32.totalorder %s12, 1
      %p72 = scmp.ne.s32.totalorder %s67, %s69
      %p73 = scmp.eq.s32.totalorder %s12, 0
      %p74 = por %p72, %p73
      %p75 = scmp.ne.s32.totalorder %s67, %s69
      %p76 = scmp.eq.s32.totalorder %s17, 1
      %p77 = por %p75, %p76
      %p78 = scmp.ne.s32.totalorder %s69, %s70
      %p79 = scmp.eq.s32.totalorder %s17, 0
      %p80 = por %p78, %p79
      %p81 = scmp.ne.s32.totalorder %s69, %s70
      %p82 = scmp.eq.s32.totalorder %s18, 1
      %p83 = por %p81, %p82
      %p85 = scmp.ne.s32.totalorder %s70, %s84
      %p86 = scmp.eq.s32.totalorder %s18, 0
      %p87 = por %p85, %p86
      %s89 = sadd.s32 %s88, 1
      %p92 = scmp.eq.s32.totalorder %s12, 1
      %p93 = scmp.ne.s32.totalorder %s88, %s90
      %p94 = scmp.eq.s32.totalorder %s12, 0
      %p95 = por %p93, %p94
      %p96 = scmp.ne.s32.totalorder %s88, %s90
      %p97 = scmp.eq.s32.totalorder %s17, 1
      %p98 = por %p96, %p97
      %p99 = scmp.ne.s32.totalorder %s90, %s91
      %p100 = scmp.eq.s32.totalorder %s17, 0
      %p101 = por %p99, %p100
      %p102 = scmp.ne.s32.totalorder %s90, %s91
      %p103 = scmp.eq.s32.totalorder %s18, 1
      %p104 = por %p102, %p103
      %p106 = scmp.ne.s32.totalorder %s91, %s105
      %p107 = scmp.eq.s32.totalorder %s18, 0
      %p108 = por %p106, %p107
      %s110 = sadd.s32 %s109, 1
      %p113 = scmp.eq.s32.totalorder %s12, 1
      %p114 = scmp.ne.s32.totalorder %s109, %s111
      %p115 = scmp.eq.s32.totalorder %s12, 0
      %p116 = por %p114, %p115
      %p117 = scmp.ne.s32.totalorder %s109, %s111
      %p118 = scmp.eq.s32.totalorder %s17, 1
      %p119 = por %p117, %p118
      %p120 = scmp.ne.s32.totalorder %s111, %s112
      %p121 = scmp.eq.s32.totalorder %s17, 0
      %p122 = por %p120, %p121
      %p123 = scmp.ne.s32.totalorder %s111, %s112
      %p124 = scmp.eq.s32.totalorder %s18, 1
      %p125 = por %p123, %p124
      %p127 = scmp.ne.s32.totalorder %s112, %s126
      %p128 = scmp.eq.s32.totalorder %s18, 0
      %p129 = por %p127, %p128
      %s130 = ssub.s32 %s12, %s19
      %p131 = scmp.eq.s32.totalorder %s130, 0
      %s133 = sadd.s32 %s132, 1
      %s134 = scalar_select %p131, %s132, %s133
      %p137 = pneg %p131
      %p138 = scmp.eq.s32.totalorder %s12, 1
      %p139 = por %p137, %p138
      %p140 = scmp.ne.s32.totalorder %s132, %s135
      %p141 = scmp.eq.s32.totalorder %s12, 0
      %p142 = por %p140, %p141
      %p143 = scmp.ne.s32.totalorder %s132, %s135
      %p144 = scmp.eq.s32.totalorder %s17, 1
      %p145 = por %p143, %p144
      %p146 = scmp.ne.s32.totalorder %s135, %s136
      %p147 = scmp.eq.s32.totalorder %s17, 0
      %p148 = por %p146, %p147
      %p149 = scmp.ne.s32.totalorder %s135, %s136
      %p150 = scmp.eq.s32.totalorder %s18, 1
      %p151 = por %p149, %p150
      %p153 = scmp.ne.s32.totalorder %s136, %s152
      %p154 = scmp.eq.s32.totalorder %s18, 0
      %p155 = por %p153, %p154
      %p156 = scmp.le.s32.totalorder 1, %s12
      %p157 = scmp.lt.s32.totalorder %s12, 3
      %p158 = pnand %p156, %p157
      %p159 = pneg %p158
      // Predicated region
      $region9: #{s3prl_forward.1} parent=5 // pred_check
        _
      $region10: #{s3prl_forward.1} parent=5 // pred_check_branch
        %161 = sbr.rel (%p158) target = $region12
      $region11: #{s3prl_forward.1} parent=5 // pred_region
        %s162 = ssub.s32 %s12, 1
        // Predicated region
        $region13: #{s3prl_forward.1} parent=11 // pred_check
          %p163 = pneg %p33
        $region14: #{s3prl_forward.1} parent=11 // pred_check_branch
          %165 = sbr.rel (%p163) target = $region16
        $region15: #{s3prl_forward.1} parent=11 // pred_region
          %s167 = ssub.s32 16, 16
          %168 = vsyncadd [#allocation3], %s167
          %s170 = sshll.u32 %s0, 4
          %s171 = int_to_ptr.vmem [resolvable:$true] %s170
          %173 = dma.vmem_to_smem %s171, 16, [#allocation2], [#allocation3]
        $region16: #{s3prl_forward.1} parent=11 // pred_fallthru
          _
        // Predicated region
        $region17: #{s3prl_forward.1} parent=11 // pred_check
          %p174 = pneg %p80
        $region18: #{s3prl_forward.1} parent=11 // pred_check_branch
          %176 = sbr.rel (%p174) target = $region20
        $region19: #{s3prl_forward.1} parent=11 // pred_region
          _
        $region20: #{s3prl_forward.1} parent=11 // pred_fallthru
          _
        // Predicated region
        $region21: #{s3prl_forward.1} parent=11 // pred_check
          %p177 = pneg %p101
        $region22: #{s3prl_forward.1} parent=11 // pred_check_branch
          %179 = sbr.rel (%p177) target = $region24
        $region23: #{s3prl_forward.1} parent=11 // pred_region
          _
        $region24: #{s3prl_forward.1} parent=11 // pred_fallthru
          _
        // Predicated region
        $region25: #{s3prl_forward.1} parent=11 // pred_check
          %p180 = pneg %p122
        $region26: #{s3prl_forward.1} parent=11 // pred_check_branch
          %182 = sbr.rel (%p180) target = $region28
        $region27: #{s3prl_forward.1} parent=11 // pred_region
          _
        $region28: #{s3prl_forward.1} parent=11 // pred_fallthru
          _
      $region12: #{s3prl_forward.1} parent=5 // pred_fallthru
        _
      %p183 = scmp.lt.s32.totalorder %s12, 2
      // Predicated region
      $region29: #{s3prl_forward.1} parent=5 // pred_check
        %p184 = pneg %p183
      $region30: #{s3prl_forward.1} parent=5 // pred_check_branch
        %186 = sbr.rel (%p184) target = $region32
      $region31: #{s3prl_forward.1} parent=5 // pred_region
        // Predicated region
        $region33: #{s3prl_forward.1} parent=31 // pred_check
          %p187 = pneg %p53
        $region34: #{s3prl_forward.1} parent=31 // pred_check_branch
          %189 = sbr.rel (%p187) target = $region36
        $region35: #{s3prl_forward.1} parent=31 // pred_region
          %p190 = scmp.lt.s32.totalorder %s12, 1
          %s191 = scalar_select %p190, %s12, 1
          %s192 = smul.addr %s191, 4
          %s193 = scalar_lea.vmem %s1, %s192
        $region36: #{s3prl_forward.1} parent=31 // pred_fallthru
          _
      $region32: #{s3prl_forward.1} parent=5 // pred_fallthru
        _
      %p194 = scmp.le.s32.totalorder 1, %s12
      %p195 = scmp.lt.s32.totalorder %s12, 3
      %p196 = pnand %p194, %p195
      %p197 = pneg %p196
      // Predicated region
      $region37: #{s3prl_forward.1} parent=5 // pred_check
        _
      $region38: #{s3prl_forward.1} parent=5 // pred_check_branch
        %199 = sbr.rel (%p196) target = $region40
      $region39: #{s3prl_forward.1} parent=5 // pred_region
        %s200 = ssub.s32 %s12, 1
        // Predicated region
        $region41: #{s3prl_forward.1} parent=39 // pred_check
          %p201 = pneg %p33
        $region42: #{s3prl_forward.1} parent=39 // pred_check_branch
          %203 = sbr.rel (%p201) target = $region44
        $region43: #{s3prl_forward.1} parent=39 // pred_region
          %204 = dma.done [#allocation3], 16
        $region44: #{s3prl_forward.1} parent=39 // pred_fallthru
          _
        %205 = sfence
        %p206 = pneg %p33
        %p207 = pneg %p30
        %p208 = scmp.lt.s32.totalorder %s17, 1
        %s209 = scalar_select %p208, %s17, 1
        %s210 = smul.addr %s209, 4
        %s211 = scalar_lea.vmem %s1, %s210
        %p212 = pneg %p59
        %p213 = pneg %p56
        %p214 = pneg %p80
        %p215 = pneg %p77
        %p216 = pneg %p101
        %p217 = pneg %p98
        %p218 = pneg %p122
        %p219 = pneg %p119
        %p220 = pneg %p148
        %p221 = pneg %p145
        %p222 = scmp.lt.s32.totalorder %s17, 1
        %s223 = scalar_select %p222, %s17, 1
        %s224 = smul.addr %s223, 4
        %s225 = scalar_lea.vmem %s5, %s224
        %p226 = scmp.lt.s32.totalorder %s17, 1
        %s227 = scalar_select %p226, %s17, 1
        %s228 = smul.addr %s227, 4
        %s229 = scalar_lea.vmem %s1, %s228
        %p230 = scmp.lt.s32.totalorder %s17, 1
        %s231 = scalar_select %p230, %s17, 1
        %s232 = smul.addr %s231, 4
        %s233 = scalar_lea.vmem %s5, %s232
        %v234 = vld [vmem:[%s229] sm:$0xf]
        %vm235 = vcmask 519168
        %v236 = vsel %vm235, %v234, 0.0
        %237 = vadd.xlane.f32.xlu0 %v236
        %v238 = vpop.xlane.xlu0 %237
        %vm239 = vcmask 1043456
        %v240 = vsel %vm239, %v238, 0.0
        %v241 = vrot.slane %v240, 4
        %v242 = vadd.f32 %v240, %v241
        %v243 = vrot.slane %v242, 2
        %v244 = vadd.f32 %v242, %v243
        %v245 = vrot.slane %v244, 1
        %v246 = vadd.f32 %v244, %v245
        %v247 = vrcp.pop 256.0
        %v248 = vmul.f32 %v246, %v247
        %v249 = vsub.f32 %v234, %v248
        %v250 = vmul.f32 %v249, %v249
        %v251 = vsel %vm235, %v250, 0.0
        %252 = vadd.xlane.f32.xlu0 %v251
        %v253 = vpop.xlane.xlu0 %252
        %v254 = vsel %vm239, %v253, 0.0
        %v255 = vrot.slane %v254, 4
        %v256 = vadd.f32 %v254, %v255
        %v257 = vrot.slane %v256, 2
        %v258 = vadd.f32 %v256, %v257
        %v259 = vrot.slane %v258, 1
        %v260 = vadd.f32 %v258, %v259
        %v261 = vrcp.pop 255.0
        %v262 = vmul.f32 %v260, %v261
        %v263 = vrsqrt.pop %v262
        %v264 = vmul.f32 %v262, %v263
        %vm265 = vcmp.eq.f32.partialorder %v262, inf
        %v266 = vsel %vm265, %v262, %v264
        %vm267 = vcmp.eq.f32.partialorder %v262, 0.0
        %v268 = vand.u32 %v262, 2147483648
        %v269 = vsel %vm267, %v268, %v266
        %v270 = vadd.f32 %v269, 1e-05
        %v271 = vrsqrt.pop %v270
        %v272 = vmul.f32 %v249, %v271
        %v273 = vld [vmem:[%s3] sm:$0xf]
        %274 = vxpose.xlu0.b32.start [1/16] %v272, 128
        %275 = vxpose.xlu0.b32.cont [2/16] 0.0, 128
        %276 = vxpose.xlu0.b32.cont [3/16] 0.0, 128
        %277 = vxpose.xlu0.b32.cont [4/16] 0.0, 128
        %278 = vxpose.xlu0.b32.cont [5/16] 0.0, 128
        %279 = vxpose.xlu0.b32.cont [6/16] 0.0, 128
        %280 = vxpose.xlu0.b32.cont [7/16] 0.0, 128
        %281 = vxpose.xlu0.b32.cont [8/16] 0.0, 128
        %282 = vxpose.xlu0.b32.cont [9/16] 0.0, 128
        %283 = vxpose.xlu0.b32.cont [10/16] 0.0, 128
        %284 = vxpose.xlu0.b32.cont [11/16] 0.0, 128
        %285 = vxpose.xlu0.b32.cont [12/16] 0.0, 128
        %286 = vxpose.xlu0.b32.cont [13/16] 0.0, 128
        %287 = vxpose.xlu0.b32.cont [14/16] 0.0, 128
        %288 = vxpose.xlu0.b32.cont [15/16] 0.0, 128
        %289 = vxpose.xlu0.b32.end [16/16] 0.0, 128
        %v290 = vpop.trf.xlu0
        %v291 = vpop.trf.xlu0
        %v292 = vpop.trf.xlu0
        %v293 = vpop.trf.xlu0
        %v294 = vpop.trf.xlu0
        %v295 = vpop.trf.xlu0
        %v296 = vpop.trf.xlu0
        %v297 = vpop.trf.xlu0
        %v298 = vpop.trf.xlu0
        %v299 = vpop.trf.xlu0
        %v300 = vpop.trf.xlu0
        %v301 = vpop.trf.xlu0
        %v302 = vpop.trf.xlu0
        %v303 = vpop.trf.xlu0
        %v304 = vpop.trf.xlu0
        %v305 = vpop.trf.xlu0
        %vm306 = vcmask 31744
        %v308 = vsel %vm306, %v290, 0
        %v311 = vsel %vm306, %v291, 0
        %v314 = vsel %vm306, %v292, 0
        %v317 = vsel %vm306, %v293, 0
        %v320 = vsel %vm306, %v294, 0
        %v323 = vsel %vm306, %v295, 0
        %v326 = vsel %vm306, %v296, 0
        %v329 = vsel %vm306, %v297, 0
        %v332 = vsel %vm239, %v273, 0
        %334 = vmatprep.subr.mxu0 0.0
        %335 = vmatpush1.msra.mxu0 %v332
        %336 = vmatprep.subr.mxu0 0.0
        %337 = vmatpush1.msra.mxu0 0.0
        %338 = vmatprep.subr.mxu0 0.0
        %339 = vmatpush1.msra.mxu0 0.0
        %340 = vmatprep.subr.mxu0 0.0
        %341 = vmatpush1.msra.mxu0 0.0
        %342 = vmatprep.subr.mxu0 0.0
        %343 = vmatpush1.msra.mxu0 0.0
        %344 = vmatprep.subr.mxu0 0.0
        %345 = vmatpush1.msra.mxu0 0.0
        %346 = vmatprep.subr.mxu0 0.0
        %347 = vmatpush1.msra.mxu0 0.0
        %348 = vmatprep.subr.mxu0 0.0
        %349 = vmatpush1.msra.mxu0 0.0
        %350 = vmatprep.subr.mxu0 0.0
        %351 = vmatpush1.msra.mxu0 0.0
        %352 = vmatprep.subr.mxu0 0.0
        %353 = vmatpush1.msra.mxu0 0.0
        %354 = vmatprep.subr.mxu0 0.0
        %355 = vmatpush1.msra.mxu0 0.0
        %356 = vmatprep.subr.mxu0 0.0
        %357 = vmatpush1.msra.mxu0 0.0
        %358 = vmatprep.subr.mxu0 0.0
        %359 = vmatpush1.msra.mxu0 0.0
        %360 = vmatprep.subr.mxu0 0.0
        %361 = vmatpush1.msra.mxu0 0.0
        %362 = vmatprep.subr.mxu0 0.0
        %363 = vmatpush1.msra.mxu0 0.0
        %364 = vmatprep.subr.mxu0 0.0
        %365 = vmatpush1.msra.mxu0 0.0
        %366 = vmatprep.subr.mxu0 0.0
        %367 = vmatpush1.msra.mxu0 0.0
        %368 = vmatprep.subr.mxu0 0.0
        %369 = vmatpush1.msra.mxu0 0.0
        %370 = vmatprep.subr.mxu0 0.0
        %371 = vmatpush1.msra.mxu0 0.0
        %372 = vmatprep.subr.mxu0 0.0
        %373 = vmatpush1.msra.mxu0 0.0
        %374 = vmatprep.subr.mxu0 0.0
        %375 = vmatpush1.msra.mxu0 0.0
        %376 = vmatprep.subr.mxu0 0.0
        %377 = vmatpush1.msra.mxu0 0.0
        %378 = vmatprep.subr.mxu0 0.0
        %379 = vmatpush1.msra.mxu0 0.0
        %380 = vmatprep.subr.mxu0 0.0
        %381 = vmatpush1.msra.mxu0 0.0
        %382 = vmatprep.subr.mxu0 0.0
        %383 = vmatpush1.msra.mxu0 0.0
        %384 = vmatprep.subr.mxu0 0.0
        %385 = vmatpush1.msra.mxu0 0.0
        %386 = vmatprep.subr.mxu0 0.0
        %387 = vmatpush1.msra.mxu0 0.0
        %388 = vmatprep.subr.mxu0 0.0
        %389 = vmatpush1.msra.mxu0 0.0
        %390 = vmatprep.subr.mxu0 0.0
        %391 = vmatpush1.msra.mxu0 0.0
        %392 = vmatprep.subr.mxu0 0.0
        %393 = vmatpush1.msra.mxu0 0.0
        %394 = vmatprep.subr.mxu0 0.0
        %395 = vmatpush1.msra.mxu0 0.0
        %396 = vmatprep.subr.mxu0 0.0
        %397 = vmatpush1.msra.mxu0 0.0
        %398 = vmatprep.mubr.f32.mxu0 0.0
        %399 = vmatmul.mubr.f32.gmra.mrb[0].mxu0 %v308
        %v400 = vpop.f32.mrb[0].mxu0
        %v401 = vadd.f32 0.0, %v400
        %v402 = vpop.f32.mrb[0].mxu0
        %403 = vmatprep.mubr.f32.mxu0 0.0
        %404 = vmatmul.mubr.f32.gmra.mrb[0].mxu0 %v311
        %v405 = vpop.f32.mrb[0].mxu0
        %v406 = vadd.f32 0.0, %v405
        %v407 = vpop.f32.mrb[0].mxu0
        %408 = vmatprep.mubr.f32.mxu0 0.0
        %409 = vmatmul.mubr.f32.gmra.mrb[0].mxu0 %v314
        %v410 = vpop.f32.mrb[0].mxu0
        %v411 = vadd.f32 0.0, %v410
        %v412 = vpop.f32.mrb[0].mxu0
        %413 = vmatprep.mubr.f32.mxu0 0.0
        %414 = vmatmul.mubr.f32.gmra.mrb[0].mxu0 %v317
        %v415 = vpop.f32.mrb[0].mxu0
        %v416 = vadd.f32 0.0, %v415
        %v417 = vpop.f32.mrb[0].mxu0
        %418 = vmatprep.mubr.f32.mxu0 0.0
        %419 = vmatmul.mubr.f32.gmra.mrb[0].mxu0 %v320
        %v420 = vpop.f32.mrb[0].mxu0
        %v421 = vadd.f32 0.0, %v420
        %v422 = vpop.f32.mrb[0].mxu0
        %423 = vmatprep.mubr.f32.mxu0 0.0
        %424 = vmatmul.mubr.f32.gmra.mrb[0].mxu0 %v323
        %v425 = vpop.f32.mrb[0].mxu0
        %v426 = vadd.f32 0.0, %v425
        %v427 = vpop.f32.mrb[0].mxu0
        %428 = vmatprep.mubr.f32.mxu0 0.0
        %429 = vmatmul.mubr.f32.gmra.mrb[0].mxu0 %v326
        %v430 = vpop.f32.mrb[0].mxu0
        %v431 = vadd.f32 0.0, %v430
        %v432 = vpop.f32.mrb[0].mxu0
        %433 = vmatprep.mubr.f32.mxu0 0.0
        %434 = vmatmul.mubr.f32.gmra.mrb[0].mxu0 %v329
        %v435 = vpop.f32.mrb[0].mxu0
        %v436 = vadd.f32 0.0, %v435
        %v437 = vpop.f32.mrb[0].mxu0
        %438 = vdwg.mxu0
        %vm439 = vcmask 261120
        %v440 = vsel %vm439, %v401, 0.0
        %v441 = vsel %vm439, %v406, 0.0
        %v442 = vadd.f32 %v440, %v441
        %v443 = vsel %vm439, %v411, 0.0
        %v444 = vadd.f32 %v442, %v443
        %v445 = vsel %vm439, %v416, 0.0
        %v446 = vadd.f32 %v444, %v445
        %v447 = vsel %vm439, %v421, 0.0
        %v448 = vadd.f32 %v446, %v447
        %v449 = vsel %vm439, %v426, 0.0
        %v450 = vadd.f32 %v448, %v449
        %v451 = vsel %vm439, %v431, 0.0
        %v452 = vadd.f32 %v450, %v451
        %v453 = vsel %vm439, %v436, 0.0
        %v454 = vadd.f32 %v452, %v453
        %v455 = vrot.slane %v454, 4
        %v456 = vadd.f32 %v454, %v455
        %v457 = vrot.slane %v456, 2
        %v458 = vadd.f32 %v456, %v457
        %v459 = vrot.slane %v458, 1
        %v460 = vadd.f32 %v458, %v459
        %v461 = vrcp.pop 64.0
        %v462 = vmul.f32 %v460, %v461
        %v463 = vsub.f32 %v401, %v462
        %v464 = vsub.f32 %v406, %v462
        %v465 = vsub.f32 %v411, %v462
        %v466 = vsub.f32 %v416, %v462
        %v467 = vsub.f32 %v421, %v462
        %v468 = vsub.f32 %v426, %v462
        %v469 = vsub.f32 %v431, %v462
        %v470 = vsub.f32 %v436, %v462
        %v471 = vmul.f32 %v463, %v463
        %v472 = vmul.f32 %v464, %v464
        %v473 = vmul.f32 %v465, %v465
        %v474 = vmul.f32 %v466, %v466
        %v475 = vmul.f32 %v467, %v467
        %v476 = vmul.f32 %v468, %v468
        %v477 = vmul.f32 %v469, %v469
        %v478 = vmul.f32 %v470, %v470
        %v479 = vsel %vm439, %v471, 0.0
        %v480 = vsel %vm439, %v472, 0.0
        %v481 = vadd.f32 %v479, %v480
        %v482 = vsel %vm439, %v473, 0.0
        %v483 = vadd.f32 %v481, %v482
        %v484 = vsel %vm439, %v474, 0.0
        %v485 = vadd.f32 %v483, %v484
        %v486 = vsel %vm439, %v475, 0.0
        %v487 = vadd.f32 %v485, %v486
        %v488 = vsel %vm439, %v476, 0.0
        %v489 = vadd.f32 %v487, %v488
        %v490 = vsel %vm439, %v477, 0.0
        %v491 = vadd.f32 %v489, %v490
        %v492 = vsel %vm439, %v478, 0.0
        %v493 = vadd.f32 %v491, %v492
        %v494 = vrot.slane %v493, 4
        %v495 = vadd.f32 %v493, %v494
        %v496 = vrot.slane %v495, 2
        %v497 = vadd.f32 %v495, %v496
        %v498 = vrot.slane %v497, 1
        %v499 = vadd.f32 %v497, %v498
        %v500 = vmul.f32 %v499, %v461
        %v501 = vadd.f32 %v500, 1e-05
        %v502 = vrsqrt.pop %v501
        %v503 = vmul.f32 %v463, %v502
        %v504 = vmul.f32 %v464, %v502
        %v505 = vmul.f32 %v465, %v502
        %v506 = vmul.f32 %v466, %v502
        %v507 = vmul.f32 %v467, %v502
        %v508 = vmul.f32 %v468, %v502
        %v509 = vmul.f32 %v469, %v502
        %v510 = vmul.f32 %v470, %v502
        %v511 = vld [vmem:[%s2] sm:$0x1]
        %v513 = vlaneseq
        %v514 = vshrl.u32 %v513, 7
        %v515 = vsub.s32 0, %v514
        %v516 = vrot.slane %v511, %v515
        %v518 = vmul.f32 %v503, %v516
        %v519 = vmul.f32 %v504, %v516
        %v520 = vmul.f32 %v505, %v516
        %v521 = vmul.f32 %v506, %v516
        %v522 = vmul.f32 %v507, %v516
        %v523 = vmul.f32 %v508, %v516
        %v524 = vmul.f32 %v509, %v516
        %v525 = vmul.f32 %v510, %v516
        %526 = vrot.lane.b32.xlu0 %v516, 96
        %v527 = vpop.permute.xlu0 %526
        %v529 = vadd.f32 %v518, %v527
        %v530 = vadd.f32 %v519, %v527
        %v531 = vadd.f32 %v520, %v527
        %v532 = vadd.f32 %v521, %v527
        %v533 = vadd.f32 %v522, %v527
        %v534 = vadd.f32 %v523, %v527
        %v535 = vadd.f32 %v524, %v527
        %v536 = vadd.f32 %v525, %v527
        %v537 = vmul.f32 %v529, 0.5
        %v538 = vmul.f32 %v530, 0.5
        %v539 = vmul.f32 %v531, 0.5
        %v540 = vmul.f32 %v532, 0.5
        %v541 = vmul.f32 %v533, 0.5
        %v542 = vmul.f32 %v534, 0.5
        %v543 = vmul.f32 %v535, 0.5
        %v544 = vmul.f32 %v536, 0.5
        %v545 = vmul.f32 %v529, 0.70710677
        %v546 = vmul.f32 %v530, 0.70710677
        %v547 = vmul.f32 %v531, 0.70710677
        %v548 = vmul.f32 %v532, 0.70710677
        %v549 = vmul.f32 %v533, 0.70710677
        %v550 = vmul.f32 %v534, 0.70710677
        %v551 = vmul.f32 %v535, 0.70710677
        %v552 = vmul.f32 %v536, 0.70710677
        %v553 = vand.u32 2147483647, %v545
        %v554 = vand.u32 2147483647, %v546
        %v555 = vand.u32 2147483647, %v547
        %v556 = vand.u32 2147483647, %v548
        %v557 = vand.u32 2147483647, %v549
        %v558 = vand.u32 2147483647, %v550
        %v559 = vand.u32 2147483647, %v551
        %v560 = vand.u32 2147483647, %v552
        %v561 = vmul.f32 %v553, 0.3275911
        %v562 = vmul.f32 %v554, 0.3275911
        %v563 = vmul.f32 %v555, 0.3275911
        %v564 = vmul.f32 %v556, 0.3275911
        %v565 = vmul.f32 %v557, 0.3275911
        %v566 = vmul.f32 %v558, 0.3275911
        %v567 = vmul.f32 %v559, 0.3275911
        %v568 = vmul.f32 %v560, 0.3275911
        %v569 = vadd.f32 %v561, 1.0
        %v570 = vadd.f32 %v562, 1.0
        %v571 = vadd.f32 %v563, 1.0
        %v572 = vadd.f32 %v564, 1.0
        %v573 = vadd.f32 %v565, 1.0
        %v574 = vadd.f32 %v566, 1.0
        %v575 = vadd.f32 %v567, 1.0
        %v576 = vadd.f32 %v568, 1.0
        %v577 = vrcp.pop %v569
        %v578 = vmul.f32 1.0, %v577
        %v579 = vrcp.pop %v570
        %v580 = vmul.f32 1.0, %v579
        %v581 = vrcp.pop %v571
        %v582 = vmul.f32 1.0, %v581
        %v583 = vrcp.pop %v572
        %v584 = vmul.f32 1.0, %v583
        %v585 = vrcp.pop %v573
        %v586 = vmul.f32 1.0, %v585
        %v587 = vrcp.pop %v574
        %v588 = vmul.f32 1.0, %v587
        %v589 = vrcp.pop %v575
        %v590 = vmul.f32 1.0, %v589
        %v591 = vrcp.pop %v576
        %v592 = vmul.f32 1.0, %v591
        %v593 = vmul.f32 %v578, 1.0614054
        %v594 = vmul.f32 %v580, 1.0614054
        %v595 = vmul.f32 %v582, 1.0614054
        %v596 = vmul.f32 %v584, 1.0614054
        %v597 = vmul.f32 %v586, 1.0614054
        %v598 = vmul.f32 %v588, 1.0614054
        %v599 = vmul.f32 %v590, 1.0614054
        %v600 = vmul.f32 %v592, 1.0614054
        %v601 = vadd.f32 %v593, -1.4531521
        %v602 = vadd.f32 %v594, -1.4531521
        %v603 = vadd.f32 %v595, -1.4531521
        %v604 = vadd.f32 %v596, -1.4531521
        %v605 = vadd.f32 %v597, -1.4531521
        %v606 = vadd.f32 %v598, -1.4531521
        %v607 = vadd.f32 %v599, -1.4531521
        %v608 = vadd.f32 %v600, -1.4531521
        %v609 = vmul.f32 %v578, %v601
        %v610 = vmul.f32 %v580, %v602
        %v611 = vmul.f32 %v582, %v603
        %v612 = vmul.f32 %v584, %v604
        %v613 = vmul.f32 %v586, %v605
        %v614 = vmul.f32 %v588, %v606
        %v615 = vmul.f32 %v590, %v607
        %v616 = vmul.f32 %v592, %v608
        %v617 = vadd.f32 %v609, 1.4214138
        %v618 = vadd.f32 %v610, 1.4214138
        %v619 = vadd.f32 %v611, 1.4214138
        %v620 = vadd.f32 %v612, 1.4214138
        %v621 = vadd.f32 %v613, 1.4214138
        %v622 = vadd.f32 %v614, 1.4214138
        %v623 = vadd.f32 %v615, 1.4214138
        %v624 = vadd.f32 %v616, 1.4214138
        %v625 = vmul.f32 %v578, %v617
        %v626 = vmul.f32 %v580, %v618
        %v627 = vmul.f32 %v582, %v619
        %v628 = vmul.f32 %v584, %v620
        %v629 = vmul.f32 %v586, %v621
        %v630 = vmul.f32 %v588, %v622
        %v631 = vmul.f32 %v590, %v623
        %v632 = vmul.f32 %v592, %v624
        %v633 = vadd.f32 %v625, -0.28449672
        %v634 = vadd.f32 %v626, -0.28449672
        %v635 = vadd.f32 %v627, -0.28449672
        %v636 = vadd.f32 %v628, -0.28449672
        %v637 = vadd.f32 %v629, -0.28449672
        %v638 = vadd.f32 %v630, -0.28449672
        %v639 = vadd.f32 %v631, -0.28449672
        %v640 = vadd.f32 %v632, -0.28449672
        %v641 = vmul.f32 %v578, %v633
        %v642 = vmul.f32 %v580, %v634
        %v643 = vmul.f32 %v582, %v635
        %v644 = vmul.f32 %v584, %v636
        %v645 = vmul.f32 %v586, %v637
        %v646 = vmul.f32 %v588, %v638
        %v647 = vmul.f32 %v590, %v639
        %v648 = vmul.f32 %v592, %v640
        %v649 = vadd.f32 %v641, 0.2548296
        %v650 = vadd.f32 %v642, 0.2548296
        %v651 = vadd.f32 %v643, 0.2548296
        %v652 = vadd.f32 %v644, 0.2548296
        %v653 = vadd.f32 %v645, 0.2548296
        %v654 = vadd.f32 %v646, 0.2548296
        %v655 = vadd.f32 %v647, 0.2548296
        %v656 = vadd.f32 %v648, 0.2548296
        %v657 = vmul.f32 %v578, %v649
        %v658 = vmul.f32 %v580, %v650
        %v659 = vmul.f32 %v582, %v651
        %v660 = vmul.f32 %v584, %v652
        %v661 = vmul.f32 %v586, %v653
        %v662 = vmul.f32 %v588, %v654
        %v663 = vmul.f32 %v590, %v655
        %v664 = vmul.f32 %v592, %v656
        %v665 = vsub.f32 0.0, %v553
        %v666 = vsub.f32 0.0, %v554
        %v667 = vsub.f32 0.0, %v555
        %v668 = vsub.f32 0.0, %v556
        %v669 = vsub.f32 0.0, %v557
        %v670 = vsub.f32 0.0, %v558
        %v671 = vsub.f32 0.0, %v559
        %v672 = vsub.f32 0.0, %v560
        %v673 = vmul.f32 %v665, %v553
        %v674 = vmul.f32 %v666, %v554
        %v675 = vmul.f32 %v667, %v555
        %v676 = vmul.f32 %v668, %v556
        %v677 = vmul.f32 %v669, %v557
        %v678 = vmul.f32 %v670, %v558
        %v679 = vmul.f32 %v671, %v559
        %v680 = vmul.f32 %v672, %v560
        %v681 = vmul.f32 %v673, 1.442695
        %v682 = vpow.pop %v681
        %v683 = vmul.f32 %v674, 1.442695
        %v684 = vpow.pop %v683
        %v685 = vmul.f32 %v675, 1.442695
        %v686 = vpow.pop %v685
        %v687 = vmul.f32 %v676, 1.442695
        %v688 = vpow.pop %v687
        %v689 = vmul.f32 %v677, 1.442695
        %v690 = vpow.pop %v689
        %v691 = vmul.f32 %v678, 1.442695
        %v692 = vpow.pop %v691
        %v693 = vmul.f32 %v679, 1.442695
        %v694 = vpow.pop %v693
        %v695 = vmul.f32 %v680, 1.442695
        %v696 = vpow.pop %v695
        %v697 = vmul.f32 %v657, %v682
        %v698 = vmul.f32 %v658, %v684
        %v699 = vmul.f32 %v659, %v686
        %v700 = vmul.f32 %v660, %v688
        %v701 = vmul.f32 %v661, %v690
        %v702 = vmul.f32 %v662, %v692
        %v703 = vmul.f32 %v663, %v694
        %v704 = vmul.f32 %v664, %v696
        %v705 = vsub.f32 1.0, %v697
        %v706 = vsub.f32 1.0, %v698
        %v707 = vsub.f32 1.0, %v699
        %v708 = vsub.f32 1.0, %v700
        %v709 = vsub.f32 1.0, %v701
        %v710 = vsub.f32 1.0, %v702
        %v711 = vsub.f32 1.0, %v703
        %v712 = vsub.f32 1.0, %v704
        %vm713 = vcmp.lt.f32.partialorder %v545, 0.0
        %vm714 = vcmp.lt.f32.partialorder %v546, 0.0
        %vm715 = vcmp.lt.f32.partialorder %v547, 0.0
        %vm716 = vcmp.lt.f32.partialorder %v548, 0.0
        %vm717 = vcmp.lt.f32.partialorder %v549, 0.0
        %vm718 = vcmp.lt.f32.partialorder %v550, 0.0
        %vm719 = vcmp.lt.f32.partialorder %v551, 0.0
        %vm720 = vcmp.lt.f32.partialorder %v552, 0.0
        %v721 = vsub.f32 0.0, %v705
        %v722 = vsub.f32 0.0, %v706
        %v723 = vsub.f32 0.0, %v707
        %v724 = vsub.f32 0.0, %v708
        %v725 = vsub.f32 0.0, %v709
        %v726 = vsub.f32 0.0, %v710
        %v727 = vsub.f32 0.0, %v711
        %v728 = vsub.f32 0.0, %v712
        %v729 = vsel %vm713, %v721, %v705
        %v730 = vsel %vm714, %v722, %v706
        %v731 = vsel %vm715, %v723, %v707
        %v732 = vsel %vm716, %v724, %v708
        %v733 = vsel %vm717, %v725, %v709
        %v734 = vsel %vm718, %v726, %v710
        %v735 = vsel %vm719, %v727, %v711
        %v736 = vsel %vm720, %v728, %v712
        %v737 = vadd.f32 %v729, 1.0
        %v738 = vadd.f32 %v730, 1.0
        %v739 = vadd.f32 %v731, 1.0
        %v740 = vadd.f32 %v732, 1.0
        %v741 = vadd.f32 %v733, 1.0
        %v742 = vadd.f32 %v734, 1.0
        %v743 = vadd.f32 %v735, 1.0
        %v744 = vadd.f32 %v736, 1.0
        %v745 = vmul.f32 %v537, %v737
        %v746 = vmul.f32 %v538, %v738
        %v747 = vmul.f32 %v539, %v739
        %v748 = vmul.f32 %v540, %v740
        %v749 = vmul.f32 %v541, %v741
        %v750 = vmul.f32 %v542, %v742
        %v751 = vmul.f32 %v543, %v743
        %v752 = vmul.f32 %v544, %v744
        %755 = vrot.lane.b32.xlu0 %v747, 32
        %v756 = vpop.permute.xlu0 %755
        %757 = vrot.lane.b32.xlu0 %v748, 32
        %v758 = vpop.permute.xlu0 %757
        %763 = vrot.lane.b32.xlu0 %v749, 64
        %v764 = vpop.permute.xlu0 %763
        %765 = vrot.lane.b32.xlu0 %v750, 64
        %v766 = vpop.permute.xlu0 %765
        %771 = vrot.lane.b32.xlu0 %v751, 96
        %v772 = vpop.permute.xlu0 %771
        %773 = vrot.lane.b32.xlu0 %v752, 96
        %v774 = vpop.permute.xlu0 %773
        %v777 = vsel %vm439, %v745, %v756
        %v778 = vsel %vm439, %v746, %v758
        %vm779 = vcmask 523264
        %v780 = vsel %vm779, %v777, %v764
        %v781 = vsel %vm779, %v778, %v766
        %vm782 = vcmask 785408
        %v783 = vsel %vm782, %v780, %v772
        %v784 = vsel %vm782, %v781, %v774
        %v785 = vld [vmem:[%s4] sm:$0xff]
        %v786 = vld [vmem:[%s4 + $0x8] sm:$0xff]
        %v787 = vld [vmem:[%s4 + $0x10] sm:$0xff]
        %v788 = vld [vmem:[%s4 + $0x18] sm:$0xff]
        %v789 = vld [vmem:[%s4 + $0x20] sm:$0xff]
        %v790 = vld [vmem:[%s4 + $0x28] sm:$0xff]
        %v791 = vld [vmem:[%s4 + $0x30] sm:$0xff]
        %v792 = vld [vmem:[%s4 + $0x38] sm:$0xff]
        %v793 = vld [vmem:[%s4 + $0x40] sm:$0xff]
        %v794 = vld [vmem:[%s4 + $0x48] sm:$0xff]
        %v795 = vld [vmem:[%s4 + $0x50] sm:$0xff]
        %v796 = vld [vmem:[%s4 + $0x58] sm:$0xff]
        %v797 = vld [vmem:[%s4 + $0x60] sm:$0xff]
        %v798 = vld [vmem:[%s4 + $0x68] sm:$0xff]
        %v799 = vld [vmem:[%s4 + $0x70] sm:$0xff]
        %v800 = vld [vmem:[%s4 + $0x78] sm:$0xff]
        %801 = vmatprep.subr.mxu0 0.0
        %802 = vmatpush1.msra.mxu0 %v785
        %803 = vmatprep.subr.mxu0 0.0
        %804 = vmatpush1.msra.mxu0 %v786
        %805 = vmatprep.subr.mxu0 0.0
        %806 = vmatpush1.msra.mxu0 %v787
        %807 = vmatprep.subr.mxu0 0.0
        %808 = vmatpush1.msra.mxu0 %v788
        %809 = vmatprep.subr.mxu0 0.0
        %810 = vmatpush1.msra.mxu0 %v789
        %811 = vmatprep.subr.mxu0 0.0
        %812 = vmatpush1.msra.mxu0 %v790
        %813 = vmatprep.subr.mxu0 0.0
        %814 = vmatpush1.msra.mxu0 %v791
        %815 = vmatprep.subr.mxu0 0.0
        %816 = vmatpush1.msra.mxu0 %v792
        %817 = vmatprep.subr.mxu0 0.0
        %818 = vmatpush1.msra.mxu0 %v793
        %819 = vmatprep.subr.mxu0 0.0
        %820 = vmatpush1.msra.mxu0 %v794
        %821 = vmatprep.subr.mxu0 0.0
        %822 = vmatpush1.msra.mxu0 %v795
        %823 = vmatprep.subr.mxu0 0.0
        %824 = vmatpush1.msra.mxu0 %v796
        %825 = vmatprep.subr.mxu0 0.0
        %826 = vmatpush1.msra.mxu0 %v797
        %827 = vmatprep.subr.mxu0 0.0
        %828 = vmatpush1.msra.mxu0 %v798
        %829 = vmatprep.subr.mxu0 0.0
        %830 = vmatpush1.msra.mxu0 %v799
        %831 = vmatprep.subr.mxu0 0.0
        %832 = vmatpush1.msra.mxu0 %v800
        %833 = vmatprep.subr.mxu0 0.0
        %834 = vmatpush1.msra.mxu0 0.0
        %835 = vmatprep.subr.mxu0 0.0
        %836 = vmatpush1.msra.mxu0 0.0
        %837 = vmatprep.subr.mxu0 0.0
        %838 = vmatpush1.msra.mxu0 0.0
        %839 = vmatprep.subr.mxu0 0.0
        %840 = vmatpush1.msra.mxu0 0.0
        %841 = vmatprep.subr.mxu0 0.0
        %842 = vmatpush1.msra.mxu0 0.0
        %843 = vmatprep.subr.mxu0 0.0
        %844 = vmatpush1.msra.mxu0 0.0
        %845 = vmatprep.subr.mxu0 0.0
        %846 = vmatpush1.msra.mxu0 0.0
        %847 = vmatprep.subr.mxu0 0.0
        %848 = vmatpush1.msra.mxu0 0.0
        %849 = vmatprep.subr.mxu0 0.0
        %850 = vmatpush1.msra.mxu0 0.0
        %851 = vmatprep.subr.mxu0 0.0
        %852 = vmatpush1.msra.mxu0 0.0
        %853 = vmatprep.subr.mxu0 0.0
        %854 = vmatpush1.msra.mxu0 0.0
        %855 = vmatprep.subr.mxu0 0.0
        %856 = vmatpush1.msra.mxu0 0.0
        %857 = vmatprep.subr.mxu0 0.0
        %858 = vmatpush1.msra.mxu0 0.0
        %859 = vmatprep.subr.mxu0 0.0
        %860 = vmatpush1.msra.mxu0 0.0
        %861 = vmatprep.subr.mxu0 0.0
        %862 = vmatpush1.msra.mxu0 0.0
        %863 = vmatprep.subr.mxu0 0.0
        %864 = vmatpush1.msra.mxu0 0.0
        %865 = vmatprep.mubr.f32.mxu0 0.0
        %866 = vmatmul.mubr.f32.gmra.mrb[0].mxu0 %v783
        %v867 = vpop.f32.mrb[0].mxu0
        %v868 = vadd.f32 0.0, %v867
        %v869 = vpop.f32.mrb[0].mxu0
        %870 = vmatprep.mubr.f32.mxu0 0.0
        %871 = vmatmul.mubr.f32.gmra.mrb[0].mxu0 %v784
        %v872 = vpop.f32.mrb[0].mxu0
        %v873 = vadd.f32 0.0, %v872
        %v874 = vpop.f32.mrb[0].mxu0
        %875 = vdwg.mxu0
        %v876 = vmul.f32 %v868, 0.5
        %v877 = vmul.f32 %v873, 0.5
        %v878 = vmul.f32 %v868, 0.70710677
        %v879 = vmul.f32 %v873, 0.70710677
        %v880 = vand.u32 2147483647, %v878
        %v881 = vand.u32 2147483647, %v879
        %v882 = vmul.f32 %v880, 0.3275911
        %v883 = vmul.f32 %v881, 0.3275911
        %v884 = vadd.f32 %v882, 1.0
        %v885 = vadd.f32 %v883, 1.0
        %v886 = vrcp.pop %v884
        %v887 = vmul.f32 1.0, %v886
        %v888 = vrcp.pop %v885
        %v889 = vmul.f32 1.0, %v888
        %v890 = vmul.f32 %v887, 1.0614054
        %v891 = vmul.f32 %v889, 1.0614054
        %v892 = vadd.f32 %v890, -1.4531521
        %v893 = vadd.f32 %v891, -1.4531521
        %v894 = vmul.f32 %v887, %v892
        %v895 = vmul.f32 %v889, %v893
        %v896 = vadd.f32 %v894, 1.4214138
        %v897 = vadd.f32 %v895, 1.4214138
        %v898 = vmul.f32 %v887, %v896
        %v899 = vmul.f32 %v889, %v897
        %v900 = vadd.f32 %v898, -0.28449672
        %v901 = vadd.f32 %v899, -0.28449672
        %v902 = vmul.f32 %v887, %v900
        %v903 = vmul.f32 %v889, %v901
        %v904 = vadd.f32 %v902, 0.2548296
        %v905 = vadd.f32 %v903, 0.2548296
        %v906 = vmul.f32 %v887, %v904
        %v907 = vmul.f32 %v889, %v905
        %v908 = vsub.f32 0.0, %v880
        %v909 = vsub.f32 0.0, %v881
        %v910 = vmul.f32 %v908, %v880
        %v911 = vmul.f32 %v909, %v881
        %v912 = vmul.f32 %v910, 1.442695
        %v913 = vpow.pop %v912
        %v914 = vmul.f32 %v911, 1.442695
        %v915 = vpow.pop %v914
        %v916 = vmul.f32 %v906, %v913
        %v917 = vmul.f32 %v907, %v915
        %v918 = vsub.f32 1.0, %v916
        %v919 = vsub.f32 1.0, %v917
        %vm920 = vcmp.lt.f32.partialorder %v878, 0.0
        %vm921 = vcmp.lt.f32.partialorder %v879, 0.0
        %v922 = vsub.f32 0.0, %v918
        %v923 = vsub.f32 0.0, %v919
        %v924 = vsel %vm920, %v922, %v918
        %v925 = vsel %vm921, %v923, %v919
        %v926 = vadd.f32 %v924, 1.0
        %v927 = vadd.f32 %v925, 1.0
        %v928 = vmul.f32 %v876, %v926
        %v929 = vmul.f32 %v877, %v927
        %v930 = vsel %vm439, %v928, 0.0
        %931 = vadd.xlane.f32.xlu0 %v930
        %v932 = vpop.xlane.xlu0 %931
        %v933 = vsel %vm439, %v929, 0.0
        %934 = vadd.xlane.f32.xlu0 %v933
        %v935 = vpop.xlane.xlu0 %934
        %v936 = vrcp.pop 32.0
        %v937 = vmul.f32 %v932, %v936
        %v938 = vmul.f32 %v935, %v936
        %v939 = vsub.f32 %v928, %v937
        %v940 = vsub.f32 %v929, %v938
        %v941 = vmul.f32 %v939, %v939
        %v942 = vmul.f32 %v940, %v940
        %v943 = vsel %vm439, %v941, 0.0
        %944 = vadd.xlane.f32.xlu0 %v943
        %v945 = vpop.xlane.xlu0 %944
        %v946 = vsel %vm439, %v942, 0.0
        %947 = vadd.xlane.f32.xlu0 %v946
        %v948 = vpop.xlane.xlu0 %947
        %v949 = vmul.f32 %v945, %v936
        %v950 = vmul.f32 %v948, %v936
        %v951 = vadd.f32 %v949, 1e-05
        %v952 = vadd.f32 %v950, 1e-05
        %v953 = vrsqrt.pop %v951
        %v954 = vrsqrt.pop %v952
        %v955 = vmul.f32 %v939, %v953
        %v956 = vmul.f32 %v940, %v954
        %957 = vrot.lane.b32.xlu0 %v516, 64
        %v958 = vpop.permute.xlu0 %957
        %v960 = vmul.f32 %v955, %v958
        %v961 = vmul.f32 %v956, %v958
        %962 = vrot.lane.b32.xlu0 %v516, 32
        %v963 = vpop.permute.xlu0 %962
        %v965 = vadd.f32 %v960, %v963
        %v966 = vadd.f32 %v961, %v963
        %v967 = vld [vmem:[%s3] sm:$0xff]
        %v968 = vld [vmem:[%s3 + $0x20] sm:$0xff]
        %v969 = vld [vmem:[%s3 + $0x40] sm:$0xff]
        %v970 = vld [vmem:[%s3 + $0x60] sm:$0xff]
        %v971 = vld [vmem:[%s2 + $0x1] sm:$0x1]
        %v973 = vlaneseq
        %v974 = vshrl.u32 %v973, 7
        %v975 = vsub.s32 0, %v974
        %v976 = vrot.slane %v971, %v975
        %982 = vrot.lane.b32.xlu0 %v967, 96
        %v983 = vpop.permute.xlu0 %982
        %984 = vrot.lane.b32.xlu0 %v968, 96
        %v985 = vpop.permute.xlu0 %984
        %986 = vrot.lane.b32.xlu0 %v969, 96
        %v987 = vpop.permute.xlu0 %986
        %988 = vrot.lane.b32.xlu0 %v970, 96
        %v989 = vpop.permute.xlu0 %988
        %v995 = vsel %vm439, %v965, 0
        %v998 = vsel %vm439, %v966, 0
        %1000 = vmatprep.subr.mxu0 0.0
        %1001 = vmatpush1.msra.mxu0 %v983
        %1002 = vmatprep.subr.mxu0 0.0
        %1003 = vmatpush1.msra.mxu0 %v985
        %1004 = vmatprep.subr.mxu0 0.0
        %1005 = vmatpush1.msra.mxu0 %v987
        %1006 = vmatprep.subr.mxu0 0.0
        %1007 = vmatpush1.msra.mxu0 %v989
        %1008 = vmatprep.subr.mxu0 0.0
        %1009 = vmatpush1.msra.mxu0 0.0
        %1010 = vmatprep.subr.mxu0 0.0
        %1011 = vmatpush1.msra.mxu0 0.0
        %1012 = vmatprep.subr.mxu0 0.0
        %1013 = vmatpush1.msra.mxu0 0.0
        %1014 = vmatprep.subr.mxu0 0.0
        %1015 = vmatpush1.msra.mxu0 0.0
        %1016 = vmatprep.subr.mxu0 0.0
        %1017 = vmatpush1.msra.mxu0 0.0
        %1018 = vmatprep.subr.mxu0 0.0
        %1019 = vmatpush1.msra.mxu0 0.0
        %1020 = vmatprep.subr.mxu0 0.0
        %1021 = vmatpush1.msra.mxu0 0.0
        %1022 = vmatprep.subr.mxu0 0.0
        %1023 = vmatpush1.msra.mxu0 0.0
        %1024 = vmatprep.subr.mxu0 0.0
        %1025 = vmatpush1.msra.mxu0 0.0
        %1026 = vmatprep.subr.mxu0 0.0
        %1027 = vmatpush1.msra.mxu0 0.0
        %1028 = vmatprep.subr.mxu0 0.0
        %1029 = vmatpush1.msra.mxu0 0.0
        %1030 = vmatprep.subr.mxu0 0.0
        %1031 = vmatpush1.msra.mxu0 0.0
        %1032 = vmatprep.subr.mxu0 0.0
        %1033 = vmatpush1.msra.mxu0 0.0
        %1034 = vmatprep.subr.mxu0 0.0
        %1035 = vmatpush1.msra.mxu0 0.0
        %1036 = vmatprep.subr.mxu0 0.0
        %1037 = vmatpush1.msra.mxu0 0.0
        %1038 = vmatprep.subr.mxu0 0.0
        %1039 = vmatpush1.msra.mxu0 0.0
        %1040 = vmatprep.subr.mxu0 0.0
        %1041 = vmatpush1.msra.mxu0 0.0
        %1042 = vmatprep.subr.mxu0 0.0
        %1043 = vmatpush1.msra.mxu0 0.0
        %1044 = vmatprep.subr.mxu0 0.0
        %1045 = vmatpush1.msra.mxu0 0.0
        %1046 = vmatprep.subr.mxu0 0.0
        %1047 = vmatpush1.msra.mxu0 0.0
        %1048 = vmatprep.subr.mxu0 0.0
        %1049 = vmatpush1.msra.mxu0 0.0
        %1050 = vmatprep.subr.mxu0 0.0
        %1051 = vmatpush1.msra.mxu0 0.0
        %1052 = vmatprep.subr.mxu0 0.0
        %1053 = vmatpush1.msra.mxu0 0.0
        %1054 = vmatprep.subr.mxu0 0.0
        %1055 = vmatpush1.msra.mxu0 0.0
        %1056 = vmatprep.subr.mxu0 0.0
        %1057 = vmatpush1.msra.mxu0 0.0
        %1058 = vmatprep.subr.mxu0 0.0
        %1059 = vmatpush1.msra.mxu0 0.0
        %1060 = vmatprep.subr.mxu0 0.0
        %1061 = vmatpush1.msra.mxu0 0.0
        %1062 = vmatprep.subr.mxu0 0.0
        %1063 = vmatpush1.msra.mxu0 0.0
        %1064 = vmatprep.mubr.f32.mxu0 0.0
        %1065 = vmatmul.mubr.f32.gmra.mrb[0].mxu0 %v995
        %v1066 = vpop.f32.mrb[0].mxu0
        %v1067 = vadd.f32 %v976, %v1066
        %v1068 = vpop.f32.mrb[0].mxu0
        %1069 = vmatprep.mubr.f32.mxu0 0.0
        %1070 = vmatmul.mubr.f32.gmra.mrb[0].mxu0 %v998
        %v1071 = vpop.f32.mrb[0].mxu0
        %v1072 = vadd.f32 %v976, %v1071
        %v1073 = vpop.f32.mrb[0].mxu0
        %1074 = vdwg.mxu0
        %vm1077 = vcmask 1041408
        %v1078 = vrot.slane %v1067, 6
        %v1079 = vrot.slane %v1072, 6
        %v1080 = vsel %vm1077, %v1078, %v1079
        %v1083 = vsel %vm1077, 0.0, %v1078
        %vm1084 = vcmask 1040384
        %v1085 = vrot.slane %v1067, 7
        %v1086 = vrot.slane %v1072, 7
        %v1087 = vsel %vm1084, %v1085, %v1086
        %v1089 = vsel %vm1084, 0.0, %v1085
        %vm1090 = vcmask 1046528
        %v1091 = vrot.slane %v1067, 1
        %v1092 = vrot.slane %v1072, 1
        %v1093 = vsel %vm1090, %v1091, %v1092
        %v1095 = vsel %vm1090, %v1092, 0.0
        %1097 = vrot.lane.b32.xlu0 %v1089, 32
        %v1098 = vpop.permute.xlu0 %1097
        %1099 = vrot.lane.b32.xlu0 %v1087, 32
        %v1100 = vpop.permute.xlu0 %1099
        %1103 = vrot.lane.b32.xlu0 %v1067, 64
        %v1104 = vpop.permute.xlu0 %1103
        %1105 = vrot.lane.b32.xlu0 %v1072, 64
        %v1106 = vpop.permute.xlu0 %1105
        %1110 = vrot.lane.b32.xlu0 %v1093, 96
        %v1111 = vpop.permute.xlu0 %1110
        %1112 = vrot.lane.b32.xlu0 %v1095, 96
        %v1113 = vpop.permute.xlu0 %1112
        %v1116 = vsel %vm439, %v1083, %v1098
        %v1117 = vsel %vm439, %v1080, %v1100
        %v1118 = vsel %vm779, %v1116, %v1104
        %v1119 = vsel %vm779, %v1117, %v1106
        %v1120 = vsel %vm782, %v1118, %v1111
        %v1121 = vsel %vm782, %v1119, %v1113
        %1138 = vrot.lane.b32.xlu0 %v785, 96
        %v1139 = vpop.permute.xlu0 %1138
        %1140 = vrot.lane.b32.xlu0 %v786, 96
        %v1141 = vpop.permute.xlu0 %1140
        %1142 = vrot.lane.b32.xlu0 %v787, 96
        %v1143 = vpop.permute.xlu0 %1142
        %1144 = vrot.lane.b32.xlu0 %v788, 96
        %v1145 = vpop.permute.xlu0 %1144
        %1146 = vrot.lane.b32.xlu0 %v789, 96
        %v1147 = vpop.permute.xlu0 %1146
        %1148 = vrot.lane.b32.xlu0 %v790, 96
        %v1149 = vpop.permute.xlu0 %1148
        %1150 = vrot.lane.b32.xlu0 %v791, 96
        %v1151 = vpop.permute.xlu0 %1150
        %1152 = vrot.lane.b32.xlu0 %v792, 96
        %v1153 = vpop.permute.xlu0 %1152
        %1154 = vrot.lane.b32.xlu0 %v793, 96
        %v1155 = vpop.permute.xlu0 %1154
        %1156 = vrot.lane.b32.xlu0 %v794, 96
        %v1157 = vpop.permute.xlu0 %1156
        %1158 = vrot.lane.b32.xlu0 %v795, 96
        %v1159 = vpop.permute.xlu0 %1158
        %1160 = vrot.lane.b32.xlu0 %v796, 96
        %v1161 = vpop.permute.xlu0 %1160
        %1162 = vrot.lane.b32.xlu0 %v797, 96
        %v1163 = vpop.permute.xlu0 %1162
        %1164 = vrot.lane.b32.xlu0 %v798, 96
        %v1165 = vpop.permute.xlu0 %1164
        %1166 = vrot.lane.b32.xlu0 %v799, 96
        %v1167 = vpop.permute.xlu0 %1166
        %1168 = vrot.lane.b32.xlu0 %v800, 96
        %v1169 = vpop.permute.xlu0 %1168
        %1186 = vrot.lane.b32.xlu0 %v976, 96
        %v1187 = vpop.permute.xlu0 %1186
        %1189 = vmatprep.subr.mxu0 0.0
        %1190 = vmatpush1.msra.mxu0 %v1139
        %1191 = vmatprep.subr.mxu0 0.0
        %1192 = vmatpush1.msra.mxu0 %v1141
        %1193 = vmatprep.subr.mxu0 0.0
        %1194 = vmatpush1.msra.mxu0 %v1143
        %1195 = vmatprep.subr.mxu0 0.0
        %1196 = vmatpush1.msra.mxu0 %v1145
        %1197 = vmatprep.subr.mxu0 0.0
        %1198 = vmatpush1.msra.mxu0 %v1147
        %1199 = vmatprep.subr.mxu0 0.0
        %1200 = vmatpush1.msra.mxu0 %v1149
        %1201 = vmatprep.subr.mxu0 0.0
        %1202 = vmatpush1.msra.mxu0 %v1151
        %1203 = vmatprep.subr.mxu0 0.0
        %1204 = vmatpush1.msra.mxu0 %v1153
        %1205 = vmatprep.subr.mxu0 0.0
        %1206 = vmatpush1.msra.mxu0 %v1155
        %1207 = vmatprep.subr.mxu0 0.0
        %1208 = vmatpush1.msra.mxu0 %v1157
        %1209 = vmatprep.subr.mxu0 0.0
        %1210 = vmatpush1.msra.mxu0 %v1159
        %1211 = vmatprep.subr.mxu0 0.0
        %1212 = vmatpush1.msra.mxu0 %v1161
        %1213 = vmatprep.subr.mxu0 0.0
        %1214 = vmatpush1.msra.mxu0 %v1163
        %1215 = vmatprep.subr.mxu0 0.0
        %1216 = vmatpush1.msra.mxu0 %v1165
        %1217 = vmatprep.subr.mxu0 0.0
        %1218 = vmatpush1.msra.mxu0 %v1167
        %1219 = vmatprep.subr.mxu0 0.0
        %1220 = vmatpush1.msra.mxu0 %v1169
        %1221 = vmatprep.subr.mxu0 0.0
        %1222 = vmatpush1.msra.mxu0 0.0
        %1223 = vmatprep.subr.mxu0 0.0
        %1224 = vmatpush1.msra.mxu0 0.0
        %1225 = vmatprep.subr.mxu0 0.0
        %1226 = vmatpush1.msra.mxu0 0.0
        %1227 = vmatprep.subr.mxu0 0.0
        %1228 = vmatpush1.msra.mxu0 0.0
        %1229 = vmatprep.subr.mxu0 0.0
        %1230 = vmatpush1.msra.mxu0 0.0
        %1231 = vmatprep.subr.mxu0 0.0
        %1232 = vmatpush1.msra.mxu0 0.0
        %1233 = vmatprep.subr.mxu0 0.0
        %1234 = vmatpush1.msra.mxu0 0.0
        %1235 = vmatprep.subr.mxu0 0.0
        %1236 = vmatpush1.msra.mxu0 0.0
        %1237 = vmatprep.subr.mxu0 0.0
        %1238 = vmatpush1.msra.mxu0 0.0
        %1239 = vmatprep.subr.mxu0 0.0
        %1240 = vmatpush1.msra.mxu0 0.0
        %1241 = vmatprep.subr.mxu0 0.0
        %1242 = vmatpush1.msra.mxu0 0.0
        %1243 = vmatprep.subr.mxu0 0.0
        %1244 = vmatpush1.msra.mxu0 0.0
        %1245 = vmatprep.subr.mxu0 0.0
        %1246 = vmatpush1.msra.mxu0 0.0
        %1247 = vmatprep.subr.mxu0 0.0
        %1248 = vmatpush1.msra.mxu0 0.0
        %1249 = vmatprep.subr.mxu0 0.0
        %1250 = vmatpush1.msra.mxu0 0.0
        %1251 = vmatprep.subr.mxu0 0.0
        %1252 = vmatpush1.msra.mxu0 0.0
        %1253 = vmatprep.mubr.f32.mxu0 0.0
        %1254 = vmatmul.mubr.f32.gmra.mrb[0].mxu0 %v1120
        %v1255 = vpop.f32.mrb[0].mxu0
        %v1256 = vadd.f32 %v1187, %v1255
        %v1257 = vpop.f32.mrb[0].mxu0
        %1258 = vmatprep.mubr.f32.mxu0 0.0
        %1259 = vmatmul.mubr.f32.gmra.mrb[0].mxu0 %v1121
        %v1260 = vpop.f32.mrb[0].mxu0
        %v1261 = vadd.f32 %v1187, %v1260
        %v1262 = vpop.f32.mrb[0].mxu0
        %1263 = vdwg.mxu0
        %v1264 = vmul.f32 %v1256, 0.5
        %v1265 = vmul.f32 %v1261, 0.5
        %v1266 = vmul.f32 %v1256, 0.70710677
        %v1267 = vmul.f32 %v1261, 0.70710677
        %v1268 = vand.u32 2147483647, %v1266
        %v1269 = vand.u32 2147483647, %v1267
        %v1270 = vmul.f32 %v1268, 0.3275911
        %v1271 = vmul.f32 %v1269, 0.3275911
        %v1272 = vadd.f32 %v1270, 1.0
        %v1273 = vadd.f32 %v1271, 1.0
        %v1274 = vrcp.pop %v1272
        %v1275 = vmul.f32 1.0, %v1274
        %v1276 = vrcp.pop %v1273
        %v1277 = vmul.f32 1.0, %v1276
        %v1278 = vmul.f32 %v1275, 1.0614054
        %v1279 = vmul.f32 %v1277, 1.0614054
        %v1280 = vadd.f32 %v1278, -1.4531521
        %v1281 = vadd.f32 %v1279, -1.4531521
        %v1282 = vmul.f32 %v1275, %v1280
        %v1283 = vmul.f32 %v1277, %v1281
        %v1284 = vadd.f32 %v1282, 1.4214138
        %v1285 = vadd.f32 %v1283, 1.4214138
        %v1286 = vmul.f32 %v1275, %v1284
        %v1287 = vmul.f32 %v1277, %v1285
        %v1288 = vadd.f32 %v1286, -0.28449672
        %v1289 = vadd.f32 %v1287, -0.28449672
        %v1290 = vmul.f32 %v1275, %v1288
        %v1291 = vmul.f32 %v1277, %v1289
        %v1292 = vadd.f32 %v1290, 0.2548296
        %v1293 = vadd.f32 %v1291, 0.2548296
        %v1294 = vmul.f32 %v1275, %v1292
        %v1295 = vmul.f32 %v1277, %v1293
        %v1296 = vsub.f32 0.0, %v1268
        %v1297 = vsub.f32 0.0, %v1269
        %v1298 = vmul.f32 %v1296, %v1268
        %v1299 = vmul.f32 %v1297, %v1269
        %v1300 = vmul.f32 %v1298, 1.442695
        %v1301 = vpow.pop %v1300
        %v1302 = vmul.f32 %v1299, 1.442695
        %v1303 = vpow.pop %v1302
        %v1304 = vmul.f32 %v1294, %v1301
        %v1305 = vmul.f32 %v1295, %v1303
        %v1306 = vsub.f32 1.0, %v1304
        %v1307 = vsub.f32 1.0, %v1305
        %vm1308 = vcmp.lt.f32.partialorder %v1266, 0.0
        %vm1309 = vcmp.lt.f32.partialorder %v1267, 0.0
        %v1310 = vsub.f32 0.0, %v1306
        %v1311 = vsub.f32 0.0, %v1307
        %v1312 = vsel %vm1308, %v1310, %v1306
        %v1313 = vsel %vm1309, %v1311, %v1307
        %v1314 = vadd.f32 %v1312, 1.0
        %v1315 = vadd.f32 %v1313, 1.0
        %v1316 = vmul.f32 %v1264, %v1314
        %v1317 = vmul.f32 %v1265, %v1315
        %v1318 = vadd.f32 %v1316, %v1067
        %v1319 = vadd.f32 %v1317, %v1072
        %v1320 = vsel %vm439, %v1318, 0.0
        %1321 = vadd.xlane.f32.xlu0 %v1320
        %v1322 = vpop.xlane.xlu0 %1321
        %v1323 = vsel %vm439, %v1319, 0.0
        %1324 = vadd.xlane.f32.xlu0 %v1323
        %v1325 = vpop.xlane.xlu0 %1324
        %v1326 = vmul.f32 %v1322, %v936
        %v1327 = vmul.f32 %v1325, %v936
        %v1328 = vsub.f32 %v1318, %v1326
        %v1329 = vsub.f32 %v1319, %v1327
        %v1330 = vmul.f32 %v1328, %v1328
        %v1331 = vmul.f32 %v1329, %v1329
        %v1332 = vsel %vm439, %v1330, 0.0
        %1333 = vadd.xlane.f32.xlu0 %v1332
        %v1334 = vpop.xlane.xlu0 %1333
        %v1335 = vsel %vm439, %v1331, 0.0
        %1336 = vadd.xlane.f32.xlu0 %v1335
        %v1337 = vpop.xlane.xlu0 %1336
        %v1338 = vmul.f32 %v1334, %v936
        %v1339 = vmul.f32 %v1337, %v936
        %v1340 = vadd.f32 %v1338, 1e-05
        %v1341 = vadd.f32 %v1339, 1e-05
        %v1342 = vrsqrt.pop %v1340
        %v1343 = vrsqrt.pop %v1341
        %v1344 = vmul.f32 %v1328, %v1342
        %v1345 = vmul.f32 %v1329, %v1343
        %1346 = vrot.lane.b32.xlu0 %v976, 64
        %v1347 = vpop.permute.xlu0 %1346
        %v1349 = vmul.f32 %v1344, %v1347
        %v1350 = vmul.f32 %v1345, %v1347
        %1351 = vrot.lane.b32.xlu0 %v976, 32
        %v1352 = vpop.permute.xlu0 %1351
        %v1354 = vadd.f32 %v1349, %v1352
        %v1355 = vadd.f32 %v1350, %v1352
        %s1356 = sld [smem:[#allocation2]]
        %v1357 = vstv %s1356
        %v1358 = vmul.f32 %v1357, %v1354
        %v1359 = vmul.f32 %v1357, %v1355
        %v1360 = vld [vmem:[%s3] sm:$0xff]
        %v1361 = vld [vmem:[%s3 + $0x8] sm:$0xff]
        %v1362 = vld [vmem:[%s3 + $0x20] sm:$0xff]
        %v1363 = vld [vmem:[%s3 + $0x28] sm:$0xff]
        %v1364 = vld [vmem:[%s3 + $0x40] sm:$0xff]
        %v1365 = vld [vmem:[%s3 + $0x48] sm:$0xff]
        %v1366 = vld [vmem:[%s3 + $0x60] sm:$0xff]
        %v1367 = vld [vmem:[%s3 + $0x68] sm:$0xff]
        %v1368 = vld [vmem:[%s2 + $0x2] sm:$0x1]
        %v1370 = vlaneseq
        %v1371 = vshrl.u32 %v1370, 7
        %v1372 = vsub.s32 0, %v1371
        %v1373 = vrot.slane %v1368, %v1372
        %1383 = vrot.lane.b32.xlu0 %v1360, 64
        %v1384 = vpop.permute.xlu0 %1383
        %1385 = vrot.lane.b32.xlu0 %v1361, 64
        %v1386 = vpop.permute.xlu0 %1385
        %1387 = vrot.lane.b32.xlu0 %v1362, 64
        %v1388 = vpop.permute.xlu0 %1387
        %1389 = vrot.lane.b32.xlu0 %v1363, 64
        %v1390 = vpop.permute.xlu0 %1389
        %1391 = vrot.lane.b32.xlu0 %v1364, 64
        %v1392 = vpop.permute.xlu0 %1391
        %1393 = vrot.lane.b32.xlu0 %v1365, 64
        %v1394 = vpop.permute.xlu0 %1393
        %1395 = vrot.lane.b32.xlu0 %v1366, 64
        %v1396 = vpop.permute.xlu0 %1395
        %1397 = vrot.lane.b32.xlu0 %v1367, 64
        %v1398 = vpop.permute.xlu0 %1397
        %v1399 = vsel %vm779, %v1384, %v1386
        %v1400 = vsel %vm779, %v1388, %v1390
        %v1401 = vsel %vm779, %v1392, %v1394
        %v1402 = vsel %vm779, %v1396, %v1398
        %v1408 = vsel %vm439, %v1354, 0
        %v1411 = vsel %vm439, %v1355, 0
        %1413 = vmatprep.subr.mxu0 0.0
        %1414 = vmatpush1.msra.mxu0 %v1399
        %1415 = vmatprep.subr.mxu0 0.0
        %1416 = vmatpush1.msra.mxu0 %v1400
        %1417 = vmatprep.subr.mxu0 0.0
        %1418 = vmatpush1.msra.mxu0 %v1401
        %1419 = vmatprep.subr.mxu0 0.0
        %1420 = vmatpush1.msra.mxu0 %v1402
        %1421 = vmatprep.subr.mxu0 0.0
        %1422 = vmatpush1.msra.mxu0 0.0
        %1423 = vmatprep.subr.mxu0 0.0
        %1424 = vmatpush1.msra.mxu0 0.0
        %1425 = vmatprep.subr.mxu0 0.0
        %1426 = vmatpush1.msra.mxu0 0.0
        %1427 = vmatprep.subr.mxu0 0.0
        %1428 = vmatpush1.msra.mxu0 0.0
        %1429 = vmatprep.subr.mxu0 0.0
        %1430 = vmatpush1.msra.mxu0 0.0
        %1431 = vmatprep.subr.mxu0 0.0
        %1432 = vmatpush1.msra.mxu0 0.0
        %1433 = vmatprep.subr.mxu0 0.0
        %1434 = vmatpush1.msra.mxu0 0.0
        %1435 = vmatprep.subr.mxu0 0.0
        %1436 = vmatpush1.msra.mxu0 0.0
        %1437 = vmatprep.subr.mxu0 0.0
        %1438 = vmatpush1.msra.mxu0 0.0
        %1439 = vmatprep.subr.mxu0 0.0
        %1440 = vmatpush1.msra.mxu0 0.0
        %1441 = vmatprep.subr.mxu0 0.0
        %1442 = vmatpush1.msra.mxu0 0.0
        %1443 = vmatprep.subr.mxu0 0.0
        %1444 = vmatpush1.msra.mxu0 0.0
        %1445 = vmatprep.subr.mxu0 0.0
        %1446 = vmatpush1.msra.mxu0 0.0
        %1447 = vmatprep.subr.mxu0 0.0
        %1448 = vmatpush1.msra.mxu0 0.0
        %1449 = vmatprep.subr.mxu0 0.0
        %1450 = vmatpush1.msra.mxu0 0.0
        %1451 = vmatprep.subr.mxu0 0.0
        %1452 = vmatpush1.msra.mxu0 0.0
        %1453 = vmatprep.subr.mxu0 0.0
        %1454 = vmatpush1.msra.mxu0 0.0
        %1455 = vmatprep.subr.mxu0 0.0
        %1456 = vmatpush1.msra.mxu0 0.0
        %1457 = vmatprep.subr.mxu0 0.0
        %1458 = vmatpush1.msra.mxu0 0.0
        %1459 = vmatprep.subr.mxu0 0.0
        %1460 = vmatpush1.msra.mxu0 0.0
        %1461 = vmatprep.subr.mxu0 0.0
        %1462 = vmatpush1.msra.mxu0 0.0
        %1463 = vmatprep.subr.mxu0 0.0
        %1464 = vmatpush1.msra.mxu0 0.0
        %1465 = vmatprep.subr.mxu0 0.0
        %1466 = vmatpush1.msra.mxu0 0.0
        %1467 = vmatprep.subr.mxu0 0.0
        %1468 = vmatpush1.msra.mxu0 0.0
        %1469 = vmatprep.subr.mxu0 0.0
        %1470 = vmatpush1.msra.mxu0 0.0
        %1471 = vmatprep.subr.mxu0 0.0
        %1472 = vmatpush1.msra.mxu0 0.0
        %1473 = vmatprep.subr.mxu0 0.0
        %1474 = vmatpush1.msra.mxu0 0.0
        %1475 = vmatprep.subr.mxu0 0.0
        %1476 = vmatpush1.msra.mxu0 0.0
        %1477 = vmatprep.mubr.f32.mxu0 0.0
        %1478 = vmatmul.mubr.f32.gmra.mrb[0].mxu0 %v1408
        %v1479 = vpop.f32.mrb[0].mxu0
        %v1480 = vadd.f32 %v1373, %v1479
        %v1481 = vpop.f32.mrb[0].mxu0
        %1482 = vmatprep.mubr.f32.mxu0 0.0
        %1483 = vmatmul.mubr.f32.gmra.mrb[0].mxu0 %v1411
        %v1484 = vpop.f32.mrb[0].mxu0
        %v1485 = vadd.f32 %v1373, %v1484
        %v1486 = vpop.f32.mrb[0].mxu0
        %1487 = vdwg.mxu0
        %1490 = vrot.lane.b32.xlu0 %v1480, 96
        %v1491 = vpop.permute.xlu0 %1490
        %1492 = vrot.lane.b32.xlu0 %v1485, 96
        %v1493 = vpop.permute.xlu0 %1492
        %vm1494 = vcmask 64512
        %v1495 = vsel %vm1494, %v1480, 0
        %v1497 = vsel %vm1494, %v1485, 0
        %v1499 = vsel %vm1494, %v1491, 0
        %v1501 = vsel %vm1494, %v1493, 0
        %1503 = vmatprep.subr.mxu0 0.0
        %1504 = vmatpush1.xpose.msra.mxu0 %v1499
        %1505 = vmatprep.subr.mxu0 0.0
        %1506 = vmatpush1.xpose.msra.mxu0 %v1501
        %1507 = vmatprep.subr.mxu0 0.0
        %1508 = vmatpush1.xpose.msra.mxu0 0.0
        %1509 = vmatprep.subr.mxu0 0.0
        %1510 = vmatpush1.xpose.msra.mxu0 0.0
        %1511 = vmatprep.subr.mxu0 0.0
        %1512 = vmatpush1.xpose.msra.mxu0 0.0
        %1513 = vmatprep.subr.mxu0 0.0
        %1514 = vmatpush1.xpose.msra.mxu0 0.0
        %1515 = vmatprep.subr.mxu0 0.0
        %1516 = vmatpush1.xpose.msra.mxu0 0.0
        %1517 = vmatprep.subr.mxu0 0.0
        %1518 = vmatpush1.xpose.msra.mxu0 0.0
        %1519 = vmatprep.subr.mxu0 0.0
        %1520 = vmatpush1.xpose.msra.mxu0 0.0
        %1521 = vmatprep.subr.mxu0 0.0
        %1522 = vmatpush1.xpose.msra.mxu0 0.0
        %1523 = vmatprep.subr.mxu0 0.0
        %1524 = vmatpush1.xpose.msra.mxu0 0.0
        %1525 = vmatprep.subr.mxu0 0.0
        %1526 = vmatpush1.xpose.msra.mxu0 0.0
        %1527 = vmatprep.subr.mxu0 0.0
        %1528 = vmatpush1.xpose.msra.mxu0 0.0
        %1529 = vmatprep.subr.mxu0 0.0
        %1530 = vmatpush1.xpose.msra.mxu0 0.0
        %1531 = vmatprep.subr.mxu0 0.0
        %1532 = vmatpush1.xpose.msra.mxu0 0.0
        %1533 = vmatprep.subr.mxu0 0.0
        %1534 = vmatpush1.xpose.msra.mxu0 0.0
        %1535 = vmatprep.subr.mxu0 0.0
        %1536 = vmatpush1.xpose.msra.mxu0 0.0
        %1537 = vmatprep.subr.mxu0 0.0
        %1538 = vmatpush1.xpose.msra.mxu0 0.0
        %1539 = vmatprep.subr.mxu0 0.0
        %1540 = vmatpush1.xpose.msra.mxu0 0.0
        %1541 = vmatprep.subr.mxu0 0.0
        %1542 = vmatpush1.xpose.msra.mxu0 0.0
        %1543 = vmatprep.subr.mxu0 0.0
        %1544 = vmatpush1.xpose.msra.mxu0 0.0
        %1545 = vmatprep.subr.mxu0 0.0
        %1546 = vmatpush1.xpose.msra.mxu0 0.0
        %1547 = vmatprep.subr.mxu0 0.0
        %1548 = vmatpush1.xpose.msra.mxu0 0.0
        %1549 = vmatprep.subr.mxu0 0.0
        %1550 = vmatpush1.xpose.msra.mxu0 0.0
        %1551 = vmatprep.subr.mxu0 0.0
        %1552 = vmatpush1.xpose.msra.mxu0 0.0
        %1553 = vmatprep.subr.mxu0 0.0
        %1554 = vmatpush1.xpose.msra.mxu0 0.0
        %1555 = vmatprep.subr.mxu0 0.0
        %1556 = vmatpush1.xpose.msra.mxu0 0.0
        %1557 = vmatprep.subr.mxu0 0.0
        %1558 = vmatpush1.xpose.msra.mxu0 0.0
        %1559 = vmatprep.subr.mxu0 0.0
        %1560 = vmatpush1.xpose.msra.mxu0 0.0
        %1561 = vmatprep.subr.mxu0 0.0
        %1562 = vmatpush1.xpose.msra.mxu0 0.0
        %1563 = vmatprep.subr.mxu0 0.0
        %1564 = vmatpush1.xpose.msra.mxu0 0.0
        %1565 = vmatprep.subr.mxu0 0.0
        %1566 = vmatpush1.xpose.msra.mxu0 0.0
        %1567 = vmatprep.mubr.f32.mxu0 0.0
        %1568 = vmatmul.mubr.f32.gmra.mrb[0].mxu0 %v1495
        %v1569 = vpop.f32.mrb[0].mxu0
        %v1570 = vadd.f32 0.0, %v1569
        %v1571 = vpop.f32.mrb[0].mxu0
        %1572 = vmatprep.mubr.f32.mxu0 0.0
        %1573 = vmatmul.mubr.f32.gmra.mrb[0].mxu0 %v1497
        %v1574 = vpop.f32.mrb[0].mxu0
        %v1575 = vadd.f32 0.0, %v1574
        %v1576 = vpop.f32.mrb[0].mxu0
        %1577 = vdwg.mxu0
        %v1578 = vmul.f32 %v1570, 0.35355338
        %v1579 = vmul.f32 %v1575, 0.35355338
        %vm1580 = vcmask 130048
        %v1581 = vsel %vm1580, %v1578, -inf
        %1582 = vmax.xlane.f32.xlu0 %v1581
        %v1583 = vpop.xlane.xlu0 %1582
        %v1584 = vsel %vm1580, %v1579, -inf
        %1585 = vmax.xlane.f32.xlu0 %v1584
        %v1586 = vpop.xlane.xlu0 %1585
        %v1587 = vsub.f32 %v1578, %v1583
        %v1588 = vsub.f32 %v1579, %v1586
        %v1589 = vmul.f32 %v1587, 1.442695
        %v1590 = vpow.pop %v1589
        %v1591 = vmul.f32 %v1588, 1.442695
        %v1592 = vpow.pop %v1591
        %v1593 = vsel %vm1580, %v1590, 0.0
        %1594 = vadd.xlane.f32.xlu0 %v1593
        %v1595 = vpop.xlane.xlu0 %1594
        %v1596 = vsel %vm1580, %v1592, 0.0
        %1597 = vadd.xlane.f32.xlu0 %v1596
        %v1598 = vpop.xlane.xlu0 %1597
        %v1599 = vrcp.pop %v1595
        %v1600 = vrcp.pop %v1598
        %v1601 = vmul.f32 %v1590, %v1599
        %v1602 = vmul.f32 %v1592, %v1600
        %1603 = vrot.lane.b32.xlu0 %v1480, 64
        %v1604 = vpop.permute.xlu0 %1603
        %1605 = vrot.lane.b32.xlu0 %v1485, 64
        %v1606 = vpop.permute.xlu0 %1605
        %v1610 = vsel %vm1580, %v1601, 0
        %v1613 = vsel %vm1580, %v1602, 0
        %1615 = vmatprep.subr.mxu0 0.0
        %1616 = vmatpush1.msra.mxu0 %v1604
        %1617 = vmatprep.subr.mxu0 0.0
        %1618 = vmatpush1.msra.mxu0 %v1606
        %1619 = vmatprep.subr.mxu0 0.0
        %1620 = vmatpush1.msra.mxu0 0.0
        %1621 = vmatprep.subr.mxu0 0.0
        %1622 = vmatpush1.msra.mxu0 0.0
        %1623 = vmatprep.subr.mxu0 0.0
        %1624 = vmatpush1.msra.mxu0 0.0
        %1625 = vmatprep.subr.mxu0 0.0
        %1626 = vmatpush1.msra.mxu0 0.0
        %1627 = vmatprep.subr.mxu0 0.0
        %1628 = vmatpush1.msra.mxu0 0.0
        %1629 = vmatprep.subr.mxu0 0.0
        %1630 = vmatpush1.msra.mxu0 0.0
        %1631 = vmatprep.subr.mxu0 0.0
        %1632 = vmatpush1.msra.mxu0 0.0
        %1633 = vmatprep.subr.mxu0 0.0
        %1634 = vmatpush1.msra.mxu0 0.0
        %1635 = vmatprep.subr.mxu0 0.0
        %1636 = vmatpush1.msra.mxu0 0.0
        %1637 = vmatprep.subr.mxu0 0.0
        %1638 = vmatpush1.msra.mxu0 0.0
        %1639 = vmatprep.subr.mxu0 0.0
        %1640 = vmatpush1.msra.mxu0 0.0
        %1641 = vmatprep.subr.mxu0 0.0
        %1642 = vmatpush1.msra.mxu0 0.0
        %1643 = vmatprep.subr.mxu0 0.0
        %1644 = vmatpush1.msra.mxu0 0.0
        %1645 = vmatprep.subr.mxu0 0.0
        %1646 = vmatpush1.msra.mxu0 0.0
        %1647 = vmatprep.subr.mxu0 0.0
        %1648 = vmatpush1.msra.mxu0 0.0
        %1649 = vmatprep.subr.mxu0 0.0
        %1650 = vmatpush1.msra.mxu0 0.0
        %1651 = vmatprep.subr.mxu0 0.0
        %1652 = vmatpush1.msra.mxu0 0.0
        %1653 = vmatprep.subr.mxu0 0.0
        %1654 = vmatpush1.msra.mxu0 0.0
        %1655 = vmatprep.subr.mxu0 0.0
        %1656 = vmatpush1.msra.mxu0 0.0
        %1657 = vmatprep.subr.mxu0 0.0
        %1658 = vmatpush1.msra.mxu0 0.0
        %1659 = vmatprep.subr.mxu0 0.0
        %1660 = vmatpush1.msra.mxu0 0.0
        %1661 = vmatprep.subr.mxu0 0.0
        %1662 = vmatpush1.msra.mxu0 0.0
        %1663 = vmatprep.subr.mxu0 0.0
        %1664 = vmatpush1.msra.mxu0 0.0
        %1665 = vmatprep.subr.mxu0 0.0
        %1666 = vmatpush1.msra.mxu0 0.0
        %1667 = vmatprep.subr.mxu0 0.0
        %1668 = vmatpush1.msra.mxu0 0.0
        %1669 = vmatprep.subr.mxu0 0.0
        %1670 = vmatpush1.msra.mxu0 0.0
        %1671 = vmatprep.subr.mxu0 0.0
        %1672 = vmatpush1.msra.mxu0 0.0
        %1673 = vmatprep.subr.mxu0 0.0
        %1674 = vmatpush1.msra.mxu0 0.0
        %1675 = vmatprep.subr.mxu0 0.0
        %1676 = vmatpush1.msra.mxu0 0.0
        %1677 = vmatprep.subr.mxu0 0.0
        %1678 = vmatpush1.msra.mxu0 0.0
        %1679 = vmatprep.mubr.f32.mxu0 0.0
        %1680 = vmatmul.mubr.f32.gmra.mrb[0].mxu0 %v1610
        %v1681 = vpop.f32.mrb[0].mxu0
        %v1682 = vadd.f32 0.0, %v1681
        %v1683 = vpop.f32.mrb[0].mxu0
        %1684 = vmatprep.mubr.f32.mxu0 0.0
        %1685 = vmatmul.mubr.f32.gmra.mrb[0].mxu0 %v1613
        %v1686 = vpop.f32.mrb[0].mxu0
        %v1687 = vadd.f32 0.0, %v1686
        %v1688 = vpop.f32.mrb[0].mxu0
        %1689 = vdwg.mxu0
        %1690 = vrot.lane.b32.xlu0 %v1480, 120
        %v1691 = vpop.permute.xlu0 %1690
        %1692 = vrot.lane.b32.xlu0 %v1485, 120
        %v1693 = vpop.permute.xlu0 %1692
        %1694 = vrot.lane.b32.xlu0 %v1480, 88
        %v1695 = vpop.permute.xlu0 %1694
        %1696 = vrot.lane.b32.xlu0 %v1485, 88
        %v1697 = vpop.permute.xlu0 %1696
        %v1698 = vsel %vm1494, %v1691, 0
        %v1700 = vsel %vm1494, %v1693, 0
        %v1702 = vsel %vm1494, %v1695, 0
        %v1704 = vsel %vm1494, %v1697, 0
        %1706 = vmatprep.subr.mxu0 0.0
        %1707 = vmatpush1.xpose.msra.mxu0 %v1702
        %1708 = vmatprep.subr.mxu0 0.0
        %1709 = vmatpush1.xpose.msra.mxu0 %v1704
        %1710 = vmatprep.subr.mxu0 0.0
        %1711 = vmatpush1.xpose.msra.mxu0 0.0
        %1712 = vmatprep.subr.mxu0 0.0
        %1713 = vmatpush1.xpose.msra.mxu0 0.0
        %1714 = vmatprep.subr.mxu0 0.0
        %1715 = vmatpush1.xpose.msra.mxu0 0.0
        %1716 = vmatprep.subr.mxu0 0.0
        %1717 = vmatpush1.xpose.msra.mxu0 0.0
        %1718 = vmatprep.subr.mxu0 0.0
        %1719 = vmatpush1.xpose.msra.mxu0 0.0
        %1720 = vmatprep.subr.mxu0 0.0
        %1721 = vmatpush1.xpose.msra.mxu0 0.0
        %1722 = vmatprep.subr.mxu0 0.0
        %1723 = vmatpush1.xpose.msra.mxu0 0.0
        %1724 = vmatprep.subr.mxu0 0.0
        %1725 = vmatpush1.xpose.msra.mxu0 0.0
        %1726 = vmatprep.subr.mxu0 0.0
        %1727 = vmatpush1.xpose.msra.mxu0 0.0
        %1728 = vmatprep.subr.mxu0 0.0
        %1729 = vmatpush1.xpose.msra.mxu0 0.0
        %1730 = vmatprep.subr.mxu0 0.0
        %1731 = vmatpush1.xpose.msra.mxu0 0.0
        %1732 = vmatprep.subr.mxu0 0.0
        %1733 = vmatpush1.xpose.msra.mxu0 0.0
        %1734 = vmatprep.subr.mxu0 0.0
        %1735 = vmatpush1.xpose.msra.mxu0 0.0
        %1736 = vmatprep.subr.mxu0 0.0
        %1737 = vmatpush1.xpose.msra.mxu0 0.0
        %1738 = vmatprep.subr.mxu0 0.0
        %1739 = vmatpush1.xpose.msra.mxu0 0.0
        %1740 = vmatprep.subr.mxu0 0.0
        %1741 = vmatpush1.xpose.msra.mxu0 0.0
        %1742 = vmatprep.subr.mxu0 0.0
        %1743 = vmatpush1.xpose.msra.mxu0 0.0
        %1744 = vmatprep.subr.mxu0 0.0
        %1745 = vmatpush1.xpose.msra.mxu0 0.0
        %1746 = vmatprep.subr.mxu0 0.0
        %1747 = vmatpush1.xpose.msra.mxu0 0.0
        %1748 = vmatprep.subr.mxu0 0.0
        %1749 = vmatpush1.xpose.msra.mxu0 0.0
        %1750 = vmatprep.subr.mxu0 0.0
        %1751 = vmatpush1.xpose.msra.mxu0 0.0
        %1752 = vmatprep.subr.mxu0 0.0
        %1753 = vmatpush1.xpose.msra.mxu0 0.0
        %1754 = vmatprep.subr.mxu0 0.0
        %1755 = vmatpush1.xpose.msra.mxu0 0.0
        %1756 = vmatprep.subr.mxu0 0.0
        %1757 = vmatpush1.xpose.msra.mxu0 0.0
        %1758 = vmatprep.subr.mxu0 0.0
        %1759 = vmatpush1.xpose.msra.mxu0 0.0
        %1760 = vmatprep.subr.mxu0 0.0
        %1761 = vmatpush1.xpose.msra.mxu0 0.0
        %1762 = vmatprep.subr.mxu0 0.0
        %1763 = vmatpush1.xpose.msra.mxu0 0.0
        %1764 = vmatprep.subr.mxu0 0.0
        %1765 = vmatpush1.xpose.msra.mxu0 0.0
        %1766 = vmatprep.subr.mxu0 0.0
        %1767 = vmatpush1.xpose.msra.mxu0 0.0
        %1768 = vmatprep.subr.mxu0 0.0
        %1769 = vmatpush1.xpose.msra.mxu0 0.0
        %1770 = vmatprep.mubr.f32.mxu0 0.0
        %1771 = vmatmul.mubr.f32.gmra.mrb[0].mxu0 %v1698
        %v1772 = vpop.f32.mrb[0].mxu0
        %v1773 = vadd.f32 0.0, %v1772
        %v1774 = vpop.f32.mrb[0].mxu0
        %1775 = vmatprep.mubr.f32.mxu0 0.0
        %1776 = vmatmul.mubr.f32.gmra.mrb[0].mxu0 %v1700
        %v1777 = vpop.f32.mrb[0].mxu0
        %v1778 = vadd.f32 0.0, %v1777
        %v1779 = vpop.f32.mrb[0].mxu0
        %1780 = vdwg.mxu0
        %v1781 = vmul.f32 %v1773, 0.35355338
        %v1782 = vmul.f32 %v1778, 0.35355338
        %v1783 = vsel %vm1580, %v1781, -inf
        %1784 = vmax.xlane.f32.xlu0 %v1783
        %v1785 = vpop.xlane.xlu0 %1784
        %v1786 = vsel %vm1580, %v1782, -inf
        %1787 = vmax.xlane.f32.xlu0 %v1786
        %v1788 = vpop.xlane.xlu0 %1787
        %v1789 = vsub.f32 %v1781, %v1785
        %v1790 = vsub.f32 %v1782, %v1788
        %v1791 = vmul.f32 %v1789, 1.442695
        %v1792 = vpow.pop %v1791
        %v1793 = vmul.f32 %v1790, 1.442695
        %v1794 = vpow.pop %v1793
        %v1795 = vsel %vm1580, %v1792, 0.0
        %1796 = vadd.xlane.f32.xlu0 %v1795
        %v1797 = vpop.xlane.xlu0 %1796
        %v1798 = vsel %vm1580, %v1794, 0.0
        %1799 = vadd.xlane.f32.xlu0 %v1798
        %v1800 = vpop.xlane.xlu0 %1799
        %v1801 = vrcp.pop %v1797
        %v1802 = vrcp.pop %v1800
        %v1803 = vmul.f32 %v1792, %v1801
        %v1804 = vmul.f32 %v1794, %v1802
        %1805 = vrot.lane.b32.xlu0 %v1480, 56
        %v1806 = vpop.permute.xlu0 %1805
        %1807 = vrot.lane.b32.xlu0 %v1485, 56
        %v1808 = vpop.permute.xlu0 %1807
        %v1812 = vsel %vm1580, %v1803, 0
        %v1815 = vsel %vm1580, %v1804, 0
        %1817 = vmatprep.subr.mxu0 0.0
        %1818 = vmatpush1.msra.mxu0 %v1806
        %1819 = vmatprep.subr.mxu0 0.0
        %1820 = vmatpush1.msra.mxu0 %v1808
        %1821 = vmatprep.subr.mxu0 0.0
        %1822 = vmatpush1.msra.mxu0 0.0
        %1823 = vmatprep.subr.mxu0 0.0
        %1824 = vmatpush1.msra.mxu0 0.0
        %1825 = vmatprep.subr.mxu0 0.0
        %1826 = vmatpush1.msra.mxu0 0.0
        %1827 = vmatprep.subr.mxu0 0.0
        %1828 = vmatpush1.msra.mxu0 0.0
        %1829 = vmatprep.subr.mxu0 0.0
        %1830 = vmatpush1.msra.mxu0 0.0
        %1831 = vmatprep.subr.mxu0 0.0
        %1832 = vmatpush1.msra.mxu0 0.0
        %1833 = vmatprep.subr.mxu0 0.0
        %1834 = vmatpush1.msra.mxu0 0.0
        %1835 = vmatprep.subr.mxu0 0.0
        %1836 = vmatpush1.msra.mxu0 0.0
        %1837 = vmatprep.subr.mxu0 0.0
        %1838 = vmatpush1.msra.mxu0 0.0
        %1839 = vmatprep.subr.mxu0 0.0
        %1840 = vmatpush1.msra.mxu0 0.0
        %1841 = vmatprep.subr.mxu0 0.0
        %1842 = vmatpush1.msra.mxu0 0.0
        %1843 = vmatprep.subr.mxu0 0.0
        %1844 = vmatpush1.msra.mxu0 0.0
        %1845 = vmatprep.subr.mxu0 0.0
        %1846 = vmatpush1.msra.mxu0 0.0
        %1847 = vmatprep.subr.mxu0 0.0
        %1848 = vmatpush1.msra.mxu0 0.0
        %1849 = vmatprep.subr.mxu0 0.0
        %1850 = vmatpush1.msra.mxu0 0.0
        %1851 = vmatprep.subr.mxu0 0.0
        %1852 = vmatpush1.msra.mxu0 0.0
        %1853 = vmatprep.subr.mxu0 0.0
        %1854 = vmatpush1.msra.mxu0 0.0
        %1855 = vmatprep.subr.mxu0 0.0
        %1856 = vmatpush1.msra.mxu0 0.0
        %1857 = vmatprep.subr.mxu0 0.0
        %1858 = vmatpush1.msra.mxu0 0.0
        %1859 = vmatprep.subr.mxu0 0.0
        %1860 = vmatpush1.msra.mxu0 0.0
        %1861 = vmatprep.subr.mxu0 0.0
        %1862 = vmatpush1.msra.mxu0 0.0
        %1863 = vmatprep.subr.mxu0 0.0
        %1864 = vmatpush1.msra.mxu0 0.0
        %1865 = vmatprep.subr.mxu0 0.0
        %1866 = vmatpush1.msra.mxu0 0.0
        %1867 = vmatprep.subr.mxu0 0.0
        %1868 = vmatpush1.msra.mxu0 0.0
        %1869 = vmatprep.subr.mxu0 0.0
        %1870 = vmatpush1.msra.mxu0 0.0
        %1871 = vmatprep.subr.mxu0 0.0
        %1872 = vmatpush1.msra.mxu0 0.0
        %1873 = vmatprep.subr.mxu0 0.0
        %1874 = vmatpush1.msra.mxu0 0.0
        %1875 = vmatprep.subr.mxu0 0.0
        %1876 = vmatpush1.msra.mxu0 0.0
        %1877 = vmatprep.subr.mxu0 0.0
        %1878 = vmatpush1.msra.mxu0 0.0
        %1879 = vmatprep.subr.mxu0 0.0
        %1880 = vmatpush1.msra.mxu0 0.0
        %1881 = vmatprep.mubr.f32.mxu0 0.0
        %1882 = vmatmul.mubr.f32.gmra.mrb[0].mxu0 %v1812
        %v1883 = vpop.f32.mrb[0].mxu0
        %v1884 = vadd.f32 0.0, %v1883
        %v1885 = vpop.f32.mrb[0].mxu0
        %1886 = vmatprep.mubr.f32.mxu0 0.0
        %1887 = vmatmul.mubr.f32.gmra.mrb[0].mxu0 %v1815
        %v1888 = vpop.f32.mrb[0].mxu0
        %v1889 = vadd.f32 0.0, %v1888
        %v1890 = vpop.f32.mrb[0].mxu0
        %1891 = vdwg.mxu0
        %1892 = vrot.lane.b32.xlu0 %v1480, 112
        %v1893 = vpop.permute.xlu0 %1892
        %1894 = vrot.lane.b32.xlu0 %v1485, 112
        %v1895 = vpop.permute.xlu0 %1894
        %1896 = vrot.lane.b32.xlu0 %v1480, 80
        %v1897 = vpop.permute.xlu0 %1896
        %1898 = vrot.lane.b32.xlu0 %v1485, 80
        %v1899 = vpop.permute.xlu0 %1898
        %v1900 = vsel %vm1494, %v1893, 0
        %v1902 = vsel %vm1494, %v1895, 0
        %v1904 = vsel %vm1494, %v1897, 0
        %v1906 = vsel %vm1494, %v1899, 0
        %1908 = vmatprep.subr.mxu0 0.0
        %1909 = vmatpush1.xpose.msra.mxu0 %v1904
        %1910 = vmatprep.subr.mxu0 0.0
        %1911 = vmatpush1.xpose.msra.mxu0 %v1906
        %1912 = vmatprep.subr.mxu0 0.0
        %1913 = vmatpush1.xpose.msra.mxu0 0.0
        %1914 = vmatprep.subr.mxu0 0.0
        %1915 = vmatpush1.xpose.msra.mxu0 0.0
        %1916 = vmatprep.subr.mxu0 0.0
        %1917 = vmatpush1.xpose.msra.mxu0 0.0
        %1918 = vmatprep.subr.mxu0 0.0
        %1919 = vmatpush1.xpose.msra.mxu0 0.0
        %1920 = vmatprep.subr.mxu0 0.0
        %1921 = vmatpush1.xpose.msra.mxu0 0.0
        %1922 = vmatprep.subr.mxu0 0.0
        %1923 = vmatpush1.xpose.msra.mxu0 0.0
        %1924 = vmatprep.subr.mxu0 0.0
        %1925 = vmatpush1.xpose.msra.mxu0 0.0
        %1926 = vmatprep.subr.mxu0 0.0
        %1927 = vmatpush1.xpose.msra.mxu0 0.0
        %1928 = vmatprep.subr.mxu0 0.0
        %1929 = vmatpush1.xpose.msra.mxu0 0.0
        %1930 = vmatprep.subr.mxu0 0.0
        %1931 = vmatpush1.xpose.msra.mxu0 0.0
        %1932 = vmatprep.subr.mxu0 0.0
        %1933 = vmatpush1.xpose.msra.mxu0 0.0
        %1934 = vmatprep.subr.mxu0 0.0
        %1935 = vmatpush1.xpose.msra.mxu0 0.0
        %1936 = vmatprep.subr.mxu0 0.0
        %1937 = vmatpush1.xpose.msra.mxu0 0.0
        %1938 = vmatprep.subr.mxu0 0.0
        %1939 = vmatpush1.xpose.msra.mxu0 0.0
        %1940 = vmatprep.subr.mxu0 0.0
        %1941 = vmatpush1.xpose.msra.mxu0 0.0
        %1942 = vmatprep.subr.mxu0 0.0
        %1943 = vmatpush1.xpose.msra.mxu0 0.0
        %1944 = vmatprep.subr.mxu0 0.0
        %1945 = vmatpush1.xpose.msra.mxu0 0.0
        %1946 = vmatprep.subr.mxu0 0.0
        %1947 = vmatpush1.xpose.msra.mxu0 0.0
        %1948 = vmatprep.subr.mxu0 0.0
        %1949 = vmatpush1.xpose.msra.mxu0 0.0
        %1950 = vmatprep.subr.mxu0 0.0
        %1951 = vmatpush1.xpose.msra.mxu0 0.0
        %1952 = vmatprep.subr.mxu0 0.0
        %1953 = vmatpush1.xpose.msra.mxu0 0.0
        %1954 = vmatprep.subr.mxu0 0.0
        %1955 = vmatpush1.xpose.msra.mxu0 0.0
        %1956 = vmatprep.subr.mxu0 0.0
        %1957 = vmatpush1.xpose.msra.mxu0 0.0
        %1958 = vmatprep.subr.mxu0 0.0
        %1959 = vmatpush1.xpose.msra.mxu0 0.0
        %1960 = vmatprep.subr.mxu0 0.0
        %1961 = vmatpush1.xpose.msra.mxu0 0.0
        %1962 = vmatprep.subr.mxu0 0.0
        %1963 = vmatpush1.xpose.msra.mxu0 0.0
        %1964 = vmatprep.subr.mxu0 0.0
        %1965 = vmatpush1.xpose.msra.mxu0 0.0
        %1966 = vmatprep.subr.mxu0 0.0
        %1967 = vmatpush1.xpose.msra.mxu0 0.0
        %1968 = vmatprep.subr.mxu0 0.0
        %1969 = vmatpush1.xpose.msra.mxu0 0.0
        %1970 = vmatprep.subr.mxu0 0.0
        %1971 = vmatpush1.xpose.msra.mxu0 0.0
        %1972 = vmatprep.mubr.f32.mxu0 0.0
        %1973 = vmatmul.mubr.f32.gmra.mrb[0].mxu0 %v1900
        %v1974 = vpop.f32.mrb[0].mxu0
        %v1975 = vadd.f32 0.0, %v1974
        %v1976 = vpop.f32.mrb[0].mxu0
        %1977 = vmatprep.mubr.f32.mxu0 0.0
        %1978 = vmatmul.mubr.f32.gmra.mrb[0].mxu0 %v1902
        %v1979 = vpop.f32.mrb[0].mxu0
        %v1980 = vadd.f32 0.0, %v1979
        %v1981 = vpop.f32.mrb[0].mxu0
        %1982 = vdwg.mxu0
        %v1983 = vmul.f32 %v1975, 0.35355338
        %v1984 = vmul.f32 %v1980, 0.35355338
        %v1985 = vsel %vm1580, %v1983, -inf
        %1986 = vmax.xlane.f32.xlu0 %v1985
        %v1987 = vpop.xlane.xlu0 %1986
        %v1988 = vsel %vm1580, %v1984, -inf
        %1989 = vmax.xlane.f32.xlu0 %v1988
        %v1990 = vpop.xlane.xlu0 %1989
        %v1991 = vsub.f32 %v1983, %v1987
        %v1992 = vsub.f32 %v1984, %v1990
        %v1993 = vmul.f32 %v1991, 1.442695
        %v1994 = vpow.pop %v1993
        %v1995 = vmul.f32 %v1992, 1.442695
        %v1996 = vpow.pop %v1995
        %v1997 = vsel %vm1580, %v1994, 0.0
        %1998 = vadd.xlane.f32.xlu0 %v1997
        %v1999 = vpop.xlane.xlu0 %1998
        %v2000 = vsel %vm1580, %v1996, 0.0
        %2001 = vadd.xlane.f32.xlu0 %v2000
        %v2002 = vpop.xlane.xlu0 %2001
        %v2003 = vrcp.pop %v1999
        %v2004 = vrcp.pop %v2002
        %v2005 = vmul.f32 %v1994, %v2003
        %v2006 = vmul.f32 %v1996, %v2004
        %2007 = vrot.lane.b32.xlu0 %v1480, 48
        %v2008 = vpop.permute.xlu0 %2007
        %2009 = vrot.lane.b32.xlu0 %v1485, 48
        %v2010 = vpop.permute.xlu0 %2009
        %v2014 = vsel %vm1580, %v2005, 0
        %v2017 = vsel %vm1580, %v2006, 0
        %2019 = vmatprep.subr.mxu0 0.0
        %2020 = vmatpush1.msra.mxu0 %v2008
        %2021 = vmatprep.subr.mxu0 0.0
        %2022 = vmatpush1.msra.mxu0 %v2010
        %2023 = vmatprep.subr.mxu0 0.0
        %2024 = vmatpush1.msra.mxu0 0.0
        %2025 = vmatprep.subr.mxu0 0.0
        %2026 = vmatpush1.msra.mxu0 0.0
        %2027 = vmatprep.subr.mxu0 0.0
        %2028 = vmatpush1.msra.mxu0 0.0
        %2029 = vmatprep.subr.mxu0 0.0
        %2030 = vmatpush1.msra.mxu0 0.0
        %2031 = vmatprep.subr.mxu0 0.0
        %2032 = vmatpush1.msra.mxu0 0.0
        %2033 = vmatprep.subr.mxu0 0.0
        %2034 = vmatpush1.msra.mxu0 0.0
        %2035 = vmatprep.subr.mxu0 0.0
        %2036 = vmatpush1.msra.mxu0 0.0
        %2037 = vmatprep.subr.mxu0 0.0
        %2038 = vmatpush1.msra.mxu0 0.0
        %2039 = vmatprep.subr.mxu0 0.0
        %2040 = vmatpush1.msra.mxu0 0.0
        %2041 = vmatprep.subr.mxu0 0.0
        %2042 = vmatpush1.msra.mxu0 0.0
        %2043 = vmatprep.subr.mxu0 0.0
        %2044 = vmatpush1.msra.mxu0 0.0
        %2045 = vmatprep.subr.mxu0 0.0
        %2046 = vmatpush1.msra.mxu0 0.0
        %2047 = vmatprep.subr.mxu0 0.0
        %2048 = vmatpush1.msra.mxu0 0.0
        %2049 = vmatprep.subr.mxu0 0.0
        %2050 = vmatpush1.msra.mxu0 0.0
        %2051 = vmatprep.subr.mxu0 0.0
        %2052 = vmatpush1.msra.mxu0 0.0
        %2053 = vmatprep.subr.mxu0 0.0
        %2054 = vmatpush1.msra.mxu0 0.0
        %2055 = vmatprep.subr.mxu0 0.0
        %2056 = vmatpush1.msra.mxu0 0.0
        %2057 = vmatprep.subr.mxu0 0.0
        %2058 = vmatpush1.msra.mxu0 0.0
        %2059 = vmatprep.subr.mxu0 0.0
        %2060 = vmatpush1.msra.mxu0 0.0
        %2061 = vmatprep.subr.mxu0 0.0
        %2062 = vmatpush1.msra.mxu0 0.0
        %2063 = vmatprep.subr.mxu0 0.0
        %2064 = vmatpush1.msra.mxu0 0.0
        %2065 = vmatprep.subr.mxu0 0.0
        %2066 = vmatpush1.msra.mxu0 0.0
        %2067 = vmatprep.subr.mxu0 0.0
        %2068 = vmatpush1.msra.mxu0 0.0
        %2069 = vmatprep.subr.mxu0 0.0
        %2070 = vmatpush1.msra.mxu0 0.0
        %2071 = vmatprep.subr.mxu0 0.0
        %2072 = vmatpush1.msra.mxu0 0.0
        %2073 = vmatprep.subr.mxu0 0.0
        %2074 = vmatpush1.msra.mxu0 0.0
        %2075 = vmatprep.subr.mxu0 0.0
        %2076 = vmatpush1.msra.mxu0 0.0
        %2077 = vmatprep.subr.mxu0 0.0
        %2078 = vmatpush1.msra.mxu0 0.0
        %2079 = vmatprep.subr.mxu0 0.0
        %2080 = vmatpush1.msra.mxu0 0.0
        %2081 = vmatprep.subr.mxu0 0.0
        %2082 = vmatpush1.msra.mxu0 0.0
        %2083 = vmatprep.mubr.f32.mxu0 0.0
        %2084 = vmatmul.mubr.f32.gmra.mrb[0].mxu0 %v2014
        %v2085 = vpop.f32.mrb[0].mxu0
        %v2086 = vadd.f32 0.0, %v2085
        %v2087 = vpop.f32.mrb[0].mxu0
        %2088 = vmatprep.mubr.f32.mxu0 0.0
        %2089 = vmatmul.mubr.f32.gmra.mrb[0].mxu0 %v2017
        %v2090 = vpop.f32.mrb[0].mxu0
        %v2091 = vadd.f32 0.0, %v2090
        %v2092 = vpop.f32.mrb[0].mxu0
        %2093 = vdwg.mxu0
        %2094 = vrot.lane.b32.xlu0 %v1480, 104
        %v2095 = vpop.permute.xlu0 %2094
        %2096 = vrot.lane.b32.xlu0 %v1485, 104
        %v2097 = vpop.permute.xlu0 %2096
        %2098 = vrot.lane.b32.xlu0 %v1480, 72
        %v2099 = vpop.permute.xlu0 %2098
        %2100 = vrot.lane.b32.xlu0 %v1485, 72
        %v2101 = vpop.permute.xlu0 %2100
        %v2102 = vsel %vm1494, %v2095, 0
        %v2104 = vsel %vm1494, %v2097, 0
        %v2106 = vsel %vm1494, %v2099, 0
        %v2108 = vsel %vm1494, %v2101, 0
        %2110 = vmatprep.subr.mxu0 0.0
        %2111 = vmatpush1.xpose.msra.mxu0 %v2106
        %2112 = vmatprep.subr.mxu0 0.0
        %2113 = vmatpush1.xpose.msra.mxu0 %v2108
        %2114 = vmatprep.subr.mxu0 0.0
        %2115 = vmatpush1.xpose.msra.mxu0 0.0
        %2116 = vmatprep.subr.mxu0 0.0
        %2117 = vmatpush1.xpose.msra.mxu0 0.0
        %2118 = vmatprep.subr.mxu0 0.0
        %2119 = vmatpush1.xpose.msra.mxu0 0.0
        %2120 = vmatprep.subr.mxu0 0.0
        %2121 = vmatpush1.xpose.msra.mxu0 0.0
        %2122 = vmatprep.subr.mxu0 0.0
        %2123 = vmatpush1.xpose.msra.mxu0 0.0
        %2124 = vmatprep.subr.mxu0 0.0
        %2125 = vmatpush1.xpose.msra.mxu0 0.0
        %2126 = vmatprep.subr.mxu0 0.0
        %2127 = vmatpush1.xpose.msra.mxu0 0.0
        %2128 = vmatprep.subr.mxu0 0.0
        %2129 = vmatpush1.xpose.msra.mxu0 0.0
        %2130 = vmatprep.subr.mxu0 0.0
        %2131 = vmatpush1.xpose.msra.mxu0 0.0
        %2132 = vmatprep.subr.mxu0 0.0
        %2133 = vmatpush1.xpose.msra.mxu0 0.0
        %2134 = vmatprep.subr.mxu0 0.0
        %2135 = vmatpush1.xpose.msra.mxu0 0.0
        %2136 = vmatprep.subr.mxu0 0.0
        %2137 = vmatpush1.xpose.msra.mxu0 0.0
        %2138 = vmatprep.subr.mxu0 0.0
        %2139 = vmatpush1.xpose.msra.mxu0 0.0
        %2140 = vmatprep.subr.mxu0 0.0
        %2141 = vmatpush1.xpose.msra.mxu0 0.0
        %2142 = vmatprep.subr.mxu0 0.0
        %2143 = vmatpush1.xpose.msra.mxu0 0.0
        %2144 = vmatprep.subr.mxu0 0.0
        %2145 = vmatpush1.xpose.msra.mxu0 0.0
        %2146 = vmatprep.subr.mxu0 0.0
        %2147 = vmatpush1.xpose.msra.mxu0 0.0
        %2148 = vmatprep.subr.mxu0 0.0
        %2149 = vmatpush1.xpose.msra.mxu0 0.0
        %2150 = vmatprep.subr.mxu0 0.0
        %2151 = vmatpush1.xpose.msra.mxu0 0.0
        %2152 = vmatprep.subr.mxu0 0.0
        %2153 = vmatpush1.xpose.msra.mxu0 0.0
        %2154 = vmatprep.subr.mxu0 0.0
        %2155 = vmatpush1.xpose.msra.mxu0 0.0
        %2156 = vmatprep.subr.mxu0 0.0
        %2157 = vmatpush1.xpose.msra.mxu0 0.0
        %2158 = vmatprep.subr.mxu0 0.0
        %2159 = vmatpush1.xpose.msra.mxu0 0.0
        %2160 = vmatprep.subr.mxu0 0.0
        %2161 = vmatpush1.xpose.msra.mxu0 0.0
        %2162 = vmatprep.subr.mxu0 0.0
        %2163 = vmatpush1.xpose.msra.mxu0 0.0
        %2164 = vmatprep.subr.mxu0 0.0
        %2165 = vmatpush1.xpose.msra.mxu0 0.0
        %2166 = vmatprep.subr.mxu0 0.0
        %2167 = vmatpush1.xpose.msra.mxu0 0.0
        %2168 = vmatprep.subr.mxu0 0.0
        %2169 = vmatpush1.xpose.msra.mxu0 0.0
        %2170 = vmatprep.subr.mxu0 0.0
        %2171 = vmatpush1.xpose.msra.mxu0 0.0
        %2172 = vmatprep.subr.mxu0 0.0
        %2173 = vmatpush1.xpose.msra.mxu0 0.0
        %2174 = vmatprep.mubr.f32.mxu0 0.0
        %2175 = vmatmul.mubr.f32.gmra.mrb[0].mxu0 %v2102
        %v2176 = vpop.f32.mrb[0].mxu0
        %v2177 = vadd.f32 0.0, %v2176
        %v2178 = vpop.f32.mrb[0].mxu0
        %2179 = vmatprep.mubr.f32.mxu0 0.0
        %2180 = vmatmul.mubr.f32.gmra.mrb[0].mxu0 %v2104
        %v2181 = vpop.f32.mrb[0].mxu0
        %v2182 = vadd.f32 0.0, %v2181
        %v2183 = vpop.f32.mrb[0].mxu0
        %2184 = vdwg.mxu0
        %v2185 = vmul.f32 %v2177, 0.35355338
        %v2186 = vmul.f32 %v2182, 0.35355338
        %v2187 = vsel %vm1580, %v2185, -inf
        %2188 = vmax.xlane.f32.xlu0 %v2187
        %v2189 = vpop.xlane.xlu0 %2188
        %v2190 = vsel %vm1580, %v2186, -inf
        %2191 = vmax.xlane.f32.xlu0 %v2190
        %v2192 = vpop.xlane.xlu0 %2191
        %v2193 = vsub.f32 %v2185, %v2189
        %v2194 = vsub.f32 %v2186, %v2192
        %v2195 = vmul.f32 %v2193, 1.442695
        %v2196 = vpow.pop %v2195
        %v2197 = vmul.f32 %v2194, 1.442695
        %v2198 = vpow.pop %v2197
        %v2199 = vsel %vm1580, %v2196, 0.0
        %2200 = vadd.xlane.f32.xlu0 %v2199
        %v2201 = vpop.xlane.xlu0 %2200
        %v2202 = vsel %vm1580, %v2198, 0.0
        %2203 = vadd.xlane.f32.xlu0 %v2202
        %v2204 = vpop.xlane.xlu0 %2203
        %v2205 = vrcp.pop %v2201
        %v2206 = vrcp.pop %v2204
        %v2207 = vmul.f32 %v2196, %v2205
        %v2208 = vmul.f32 %v2198, %v2206
        %2209 = vrot.lane.b32.xlu0 %v1480, 40
        %v2210 = vpop.permute.xlu0 %2209
        %2211 = vrot.lane.b32.xlu0 %v1485, 40
        %v2212 = vpop.permute.xlu0 %2211
        %v2216 = vsel %vm1580, %v2207, 0
        %v2219 = vsel %vm1580, %v2208, 0
        %2221 = vmatprep.subr.mxu0 0.0
        %2222 = vmatpush1.msra.mxu0 %v2210
        %2223 = vmatprep.subr.mxu0 0.0
        %2224 = vmatpush1.msra.mxu0 %v2212
        %2225 = vmatprep.subr.mxu0 0.0
        %2226 = vmatpush1.msra.mxu0 0.0
        %2227 = vmatprep.subr.mxu0 0.0
        %2228 = vmatpush1.msra.mxu0 0.0
        %2229 = vmatprep.subr.mxu0 0.0
        %2230 = vmatpush1.msra.mxu0 0.0
        %2231 = vmatprep.subr.mxu0 0.0
        %2232 = vmatpush1.msra.mxu0 0.0
        %2233 = vmatprep.subr.mxu0 0.0
        %2234 = vmatpush1.msra.mxu0 0.0
        %2235 = vmatprep.subr.mxu0 0.0
        %2236 = vmatpush1.msra.mxu0 0.0
        %2237 = vmatprep.subr.mxu0 0.0
        %2238 = vmatpush1.msra.mxu0 0.0
        %2239 = vmatprep.subr.mxu0 0.0
        %2240 = vmatpush1.msra.mxu0 0.0
        %2241 = vmatprep.subr.mxu0 0.0
        %2242 = vmatpush1.msra.mxu0 0.0
        %2243 = vmatprep.subr.mxu0 0.0
        %2244 = vmatpush1.msra.mxu0 0.0
        %2245 = vmatprep.subr.mxu0 0.0
        %2246 = vmatpush1.msra.mxu0 0.0
        %2247 = vmatprep.subr.mxu0 0.0
        %2248 = vmatpush1.msra.mxu0 0.0
        %2249 = vmatprep.subr.mxu0 0.0
        %2250 = vmatpush1.msra.mxu0 0.0
        %2251 = vmatprep.subr.mxu0 0.0
        %2252 = vmatpush1.msra.mxu0 0.0
        %2253 = vmatprep.subr.mxu0 0.0
        %2254 = vmatpush1.msra.mxu0 0.0
        %2255 = vmatprep.subr.mxu0 0.0
        %2256 = vmatpush1.msra.mxu0 0.0
        %2257 = vmatprep.subr.mxu0 0.0
        %2258 = vmatpush1.msra.mxu0 0.0
        %2259 = vmatprep.subr.mxu0 0.0
        %2260 = vmatpush1.msra.mxu0 0.0
        %2261 = vmatprep.subr.mxu0 0.0
        %2262 = vmatpush1.msra.mxu0 0.0
        %2263 = vmatprep.subr.mxu0 0.0
        %2264 = vmatpush1.msra.mxu0 0.0
        %2265 = vmatprep.subr.mxu0 0.0
        %2266 = vmatpush1.msra.mxu0 0.0
        %2267 = vmatprep.subr.mxu0 0.0
        %2268 = vmatpush1.msra.mxu0 0.0
        %2269 = vmatprep.subr.mxu0 0.0
        %2270 = vmatpush1.msra.mxu0 0.0
        %2271 = vmatprep.subr.mxu0 0.0
        %2272 = vmatpush1.msra.mxu0 0.0
        %2273 = vmatprep.subr.mxu0 0.0
        %2274 = vmatpush1.msra.mxu0 0.0
        %2275 = vmatprep.subr.mxu0 0.0
        %2276 = vmatpush1.msra.mxu0 0.0
        %2277 = vmatprep.subr.mxu0 0.0
        %2278 = vmatpush1.msra.mxu0 0.0
        %2279 = vmatprep.subr.mxu0 0.0
        %2280 = vmatpush1.msra.mxu0 0.0
        %2281 = vmatprep.subr.mxu0 0.0
        %2282 = vmatpush1.msra.mxu0 0.0
        %2283 = vmatprep.subr.mxu0 0.0
        %2284 = vmatpush1.msra.mxu0 0.0
        %2285 = vmatprep.mubr.f32.mxu0 0.0
        %2286 = vmatmul.mubr.f32.gmra.mrb[0].mxu0 %v2216
        %v2287 = vpop.f32.mrb[0].mxu0
        %v2288 = vadd.f32 0.0, %v2287
        %v2289 = vpop.f32.mrb[0].mxu0
        %2290 = vmatprep.mubr.f32.mxu0 0.0
        %2291 = vmatmul.mubr.f32.gmra.mrb[0].mxu0 %v2219
        %v2292 = vpop.f32.mrb[0].mxu0
        %v2293 = vadd.f32 0.0, %v2292
        %v2294 = vpop.f32.mrb[0].mxu0
        %2295 = vdwg.mxu0
        %2298 = vrot.lane.b32.xlu0 %v1884, 8
        %v2299 = vpop.permute.xlu0 %2298
        %2300 = vrot.lane.b32.xlu0 %v1889, 8
        %v2301 = vpop.permute.xlu0 %2300
        %2306 = vrot.lane.b32.xlu0 %v2086, 16
        %v2307 = vpop.permute.xlu0 %2306
        %2308 = vrot.lane.b32.xlu0 %v2091, 16
        %v2309 = vpop.permute.xlu0 %2308
        %2314 = vrot.lane.b32.xlu0 %v2288, 24
        %v2315 = vpop.permute.xlu0 %2314
        %2316 = vrot.lane.b32.xlu0 %v2293, 24
        %v2317 = vpop.permute.xlu0 %2316
        %v2320 = vsel %vm1494, %v1682, %v2299
        %v2321 = vsel %vm1494, %v1687, %v2301
        %v2322 = vsel %vm1580, %v2320, %v2307
        %v2323 = vsel %vm1580, %v2321, %v2309
        %vm2324 = vcmask 195584
        %v2325 = vsel %vm2324, %v2322, %v2315
        %v2326 = vsel %vm2324, %v2323, %v2317
        %2327 = vrot.lane.b32.xlu0 %v1361, 96
        %v2328 = vpop.permute.xlu0 %2327
        %2329 = vrot.lane.b32.xlu0 %v1363, 96
        %v2330 = vpop.permute.xlu0 %2329
        %2331 = vrot.lane.b32.xlu0 %v1365, 96
        %v2332 = vpop.permute.xlu0 %2331
        %2333 = vrot.lane.b32.xlu0 %v1367, 96
        %v2334 = vpop.permute.xlu0 %2333
        %2339 = vrot.lane.b32.xlu0 %v1373, 32
        %v2340 = vpop.permute.xlu0 %2339
        %v2343 = vsel %vm439, %v2325, 0
        %v2346 = vsel %vm439, %v2326, 0
        %2348 = vmatprep.subr.mxu0 0.0
        %2349 = vmatpush1.msra.mxu0 %v2328
        %2350 = vmatprep.subr.mxu0 0.0
        %2351 = vmatpush1.msra.mxu0 %v2330
        %2352 = vmatprep.subr.mxu0 0.0
        %2353 = vmatpush1.msra.mxu0 %v2332
        %2354 = vmatprep.subr.mxu0 0.0
        %2355 = vmatpush1.msra.mxu0 %v2334
        %2356 = vmatprep.subr.mxu0 0.0
        %2357 = vmatpush1.msra.mxu0 0.0
        %2358 = vmatprep.subr.mxu0 0.0
        %2359 = vmatpush1.msra.mxu0 0.0
        %2360 = vmatprep.subr.mxu0 0.0
        %2361 = vmatpush1.msra.mxu0 0.0
        %2362 = vmatprep.subr.mxu0 0.0
        %2363 = vmatpush1.msra.mxu0 0.0
        %2364 = vmatprep.subr.mxu0 0.0
        %2365 = vmatpush1.msra.mxu0 0.0
        %2366 = vmatprep.subr.mxu0 0.0
        %2367 = vmatpush1.msra.mxu0 0.0
        %2368 = vmatprep.subr.mxu0 0.0
        %2369 = vmatpush1.msra.mxu0 0.0
        %2370 = vmatprep.subr.mxu0 0.0
        %2371 = vmatpush1.msra.mxu0 0.0
        %2372 = vmatprep.subr.mxu0 0.0
        %2373 = vmatpush1.msra.mxu0 0.0
        %2374 = vmatprep.subr.mxu0 0.0
        %2375 = vmatpush1.msra.mxu0 0.0
        %2376 = vmatprep.subr.mxu0 0.0
        %2377 = vmatpush1.msra.mxu0 0.0
        %2378 = vmatprep.subr.mxu0 0.0
        %2379 = vmatpush1.msra.mxu0 0.0
        %2380 = vmatprep.subr.mxu0 0.0
        %2381 = vmatpush1.msra.mxu0 0.0
        %2382 = vmatprep.subr.mxu0 0.0
        %2383 = vmatpush1.msra.mxu0 0.0
        %2384 = vmatprep.subr.mxu0 0.0
        %2385 = vmatpush1.msra.mxu0 0.0
        %2386 = vmatprep.subr.mxu0 0.0
        %2387 = vmatpush1.msra.mxu0 0.0
        %2388 = vmatprep.subr.mxu0 0.0
        %2389 = vmatpush1.msra.mxu0 0.0
        %2390 = vmatprep.subr.mxu0 0.0
        %2391 = vmatpush1.msra.mxu0 0.0
        %2392 = vmatprep.subr.mxu0 0.0
        %2393 = vmatpush1.msra.mxu0 0.0
        %2394 = vmatprep.subr.mxu0 0.0
        %2395 = vmatpush1.msra.mxu0 0.0
        %2396 = vmatprep.subr.mxu0 0.0
        %2397 = vmatpush1.msra.mxu0 0.0
        %2398 = vmatprep.subr.mxu0 0.0
        %2399 = vmatpush1.msra.mxu0 0.0
        %2400 = vmatprep.subr.mxu0 0.0
        %2401 = vmatpush1.msra.mxu0 0.0
        %2402 = vmatprep.subr.mxu0 0.0
        %2403 = vmatpush1.msra.mxu0 0.0
        %2404 = vmatprep.subr.mxu0 0.0
        %2405 = vmatpush1.msra.mxu0 0.0
        %2406 = vmatprep.subr.mxu0 0.0
        %2407 = vmatpush1.msra.mxu0 0.0
        %2408 = vmatprep.subr.mxu0 0.0
        %2409 = vmatpush1.msra.mxu0 0.0
        %2410 = vmatprep.subr.mxu0 0.0
        %2411 = vmatpush1.msra.mxu0 0.0
        %2412 = vmatprep.mubr.f32.mxu0 0.0
        %2413 = vmatmul.mubr.f32.gmra.mrb[0].mxu0 %v2343
        %v2414 = vpop.f32.mrb[0].mxu0
        %v2415 = vadd.f32 %v2340, %v2414
        %v2416 = vpop.f32.mrb[0].mxu0
        %2417 = vmatprep.mubr.f32.mxu0 0.0
        %2418 = vmatmul.mubr.f32.gmra.mrb[0].mxu0 %v2346
        %v2419 = vpop.f32.mrb[0].mxu0
        %v2420 = vadd.f32 %v2340, %v2419
        %v2421 = vpop.f32.mrb[0].mxu0
        %2422 = vdwg.mxu0
        %v2423 = vadd.f32 %v1354, %v2415
        %v2424 = vadd.f32 %v1355, %v2420
        %v2425 = vld [vmem:[%s2 + $0x3] sm:$0x1]
        %v2426 = vsel %vm439, %v2423, 0.0
        %2427 = vadd.xlane.f32.xlu0 %v2426
        %v2428 = vpop.xlane.xlu0 %2427
        %v2429 = vsel %vm439, %v2424, 0.0
        %2430 = vadd.xlane.f32.xlu0 %v2429
        %v2431 = vpop.xlane.xlu0 %2430
        %v2432 = vmul.f32 %v2428, %v936
        %v2433 = vmul.f32 %v2431, %v936
        %v2434 = vsub.f32 %v2423, %v2432
        %v2435 = vsub.f32 %v2424, %v2433
        %v2436 = vmul.f32 %v2434, %v2434
        %v2437 = vmul.f32 %v2435, %v2435
        %v2438 = vsel %vm439, %v2436, 0.0
        %2439 = vadd.xlane.f32.xlu0 %v2438
        %v2440 = vpop.xlane.xlu0 %2439
        %v2441 = vsel %vm439, %v2437, 0.0
        %2442 = vadd.xlane.f32.xlu0 %v2441
        %v2443 = vpop.xlane.xlu0 %2442
        %v2444 = vmul.f32 %v2440, %v936
        %v2445 = vmul.f32 %v2443, %v936
        %v2446 = vadd.f32 %v2444, 1e-05
        %v2447 = vadd.f32 %v2445, 1e-05
        %v2448 = vrsqrt.pop %v2446
        %v2449 = vrsqrt.pop %v2447
        %v2450 = vmul.f32 %v2434, %v2448
        %v2451 = vmul.f32 %v2435, %v2449
        %v2453 = vlaneseq
        %v2454 = vshrl.u32 %v2453, 7
        %v2455 = vsub.s32 0, %v2454
        %v2456 = vrot.slane %v2425, %v2455
        %v2458 = vmul.f32 %v2450, %v2456
        %v2459 = vmul.f32 %v2451, %v2456
        %2460 = vrot.lane.b32.xlu0 %v2456, 96
        %v2461 = vpop.permute.xlu0 %2460
        %v2463 = vadd.f32 %v2458, %v2461
        %v2464 = vadd.f32 %v2459, %v2461
        %2469 = vrot.lane.b32.xlu0 %v2456, 64
        %v2470 = vpop.permute.xlu0 %2469
        %v2473 = vsel %vm439, %v2463, 0
        %v2476 = vsel %vm439, %v2464, 0
        %2478 = vmatprep.subr.mxu0 0.0
        %2479 = vmatpush1.msra.mxu0 %v1386
        %2480 = vmatprep.subr.mxu0 0.0
        %2481 = vmatpush1.msra.mxu0 %v1390
        %2482 = vmatprep.subr.mxu0 0.0
        %2483 = vmatpush1.msra.mxu0 %v1394
        %2484 = vmatprep.subr.mxu0 0.0
        %2485 = vmatpush1.msra.mxu0 %v1398
        %2486 = vmatprep.subr.mxu0 0.0
        %2487 = vmatpush1.msra.mxu0 0.0
        %2488 = vmatprep.subr.mxu0 0.0
        %2489 = vmatpush1.msra.mxu0 0.0
        %2490 = vmatprep.subr.mxu0 0.0
        %2491 = vmatpush1.msra.mxu0 0.0
        %2492 = vmatprep.subr.mxu0 0.0
        %2493 = vmatpush1.msra.mxu0 0.0
        %2494 = vmatprep.subr.mxu0 0.0
        %2495 = vmatpush1.msra.mxu0 0.0
        %2496 = vmatprep.subr.mxu0 0.0
        %2497 = vmatpush1.msra.mxu0 0.0
        %2498 = vmatprep.subr.mxu0 0.0
        %2499 = vmatpush1.msra.mxu0 0.0
        %2500 = vmatprep.subr.mxu0 0.0
        %2501 = vmatpush1.msra.mxu0 0.0
        %2502 = vmatprep.subr.mxu0 0.0
        %2503 = vmatpush1.msra.mxu0 0.0
        %2504 = vmatprep.subr.mxu0 0.0
        %2505 = vmatpush1.msra.mxu0 0.0
        %2506 = vmatprep.subr.mxu0 0.0
        %2507 = vmatpush1.msra.mxu0 0.0
        %2508 = vmatprep.subr.mxu0 0.0
        %2509 = vmatpush1.msra.mxu0 0.0
        %2510 = vmatprep.subr.mxu0 0.0
        %2511 = vmatpush1.msra.mxu0 0.0
        %2512 = vmatprep.subr.mxu0 0.0
        %2513 = vmatpush1.msra.mxu0 0.0
        %2514 = vmatprep.subr.mxu0 0.0
        %2515 = vmatpush1.msra.mxu0 0.0
        %2516 = vmatprep.subr.mxu0 0.0
        %2517 = vmatpush1.msra.mxu0 0.0
        %2518 = vmatprep.subr.mxu0 0.0
        %2519 = vmatpush1.msra.mxu0 0.0
        %2520 = vmatprep.subr.mxu0 0.0
        %2521 = vmatpush1.msra.mxu0 0.0
        %2522 = vmatprep.subr.mxu0 0.0
        %2523 = vmatpush1.msra.mxu0 0.0
        %2524 = vmatprep.subr.mxu0 0.0
        %2525 = vmatpush1.msra.mxu0 0.0
        %2526 = vmatprep.subr.mxu0 0.0
        %2527 = vmatpush1.msra.mxu0 0.0
        %2528 = vmatprep.subr.mxu0 0.0
        %2529 = vmatpush1.msra.mxu0 0.0
        %2530 = vmatprep.subr.mxu0 0.0
        %2531 = vmatpush1.msra.mxu0 0.0
        %2532 = vmatprep.subr.mxu0 0.0
        %2533 = vmatpush1.msra.mxu0 0.0
        %2534 = vmatprep.subr.mxu0 0.0
        %2535 = vmatpush1.msra.mxu0 0.0
        %2536 = vmatprep.subr.mxu0 0.0
        %2537 = vmatpush1.msra.mxu0 0.0
        %2538 = vmatprep.subr.mxu0 0.0
        %2539 = vmatpush1.msra.mxu0 0.0
        %2540 = vmatprep.subr.mxu0 0.0
        %2541 = vmatpush1.msra.mxu0 0.0
        %2542 = vmatprep.mubr.f32.mxu0 0.0
        %2543 = vmatmul.mubr.f32.gmra.mrb[0].mxu0 %v2473
        %v2544 = vpop.f32.mrb[0].mxu0
        %v2545 = vadd.f32 %v2470, %v2544
        %v2546 = vpop.f32.mrb[0].mxu0
        %2547 = vmatprep.mubr.f32.mxu0 0.0
        %2548 = vmatmul.mubr.f32.gmra.mrb[0].mxu0 %v2476
        %v2549 = vpop.f32.mrb[0].mxu0
        %v2550 = vadd.f32 %v2470, %v2549
        %v2551 = vpop.f32.mrb[0].mxu0
        %2552 = vdwg.mxu0
        %v2553 = vmul.f32 %v2545, 0.5
        %v2554 = vmul.f32 %v2550, 0.5
        %v2555 = vmul.f32 %v2545, 0.70710677
        %v2556 = vmul.f32 %v2550, 0.70710677
        %v2557 = vand.u32 2147483647, %v2555
        %v2558 = vand.u32 2147483647, %v2556
        %v2559 = vmul.f32 %v2557, 0.3275911
        %v2560 = vmul.f32 %v2558, 0.3275911
        %v2561 = vadd.f32 %v2559, 1.0
        %v2562 = vadd.f32 %v2560, 1.0
        %v2563 = vrcp.pop %v2561
        %v2564 = vmul.f32 1.0, %v2563
        %v2565 = vrcp.pop %v2562
        %v2566 = vmul.f32 1.0, %v2565
        %v2567 = vmul.f32 %v2564, 1.0614054
        %v2568 = vmul.f32 %v2566, 1.0614054
        %v2569 = vadd.f32 %v2567, -1.4531521
        %v2570 = vadd.f32 %v2568, -1.4531521
        %v2571 = vmul.f32 %v2564, %v2569
        %v2572 = vmul.f32 %v2566, %v2570
        %v2573 = vadd.f32 %v2571, 1.4214138
        %v2574 = vadd.f32 %v2572, 1.4214138
        %v2575 = vmul.f32 %v2564, %v2573
        %v2576 = vmul.f32 %v2566, %v2574
        %v2577 = vadd.f32 %v2575, -0.28449672
        %v2578 = vadd.f32 %v2576, -0.28449672
        %v2579 = vmul.f32 %v2564, %v2577
        %v2580 = vmul.f32 %v2566, %v2578
        %v2581 = vadd.f32 %v2579, 0.2548296
        %v2582 = vadd.f32 %v2580, 0.2548296
        %v2583 = vmul.f32 %v2564, %v2581
        %v2584 = vmul.f32 %v2566, %v2582
        %v2585 = vsub.f32 0.0, %v2557
        %v2586 = vsub.f32 0.0, %v2558
        %v2587 = vmul.f32 %v2585, %v2557
        %v2588 = vmul.f32 %v2586, %v2558
        %v2589 = vmul.f32 %v2587, 1.442695
        %v2590 = vpow.pop %v2589
        %v2591 = vmul.f32 %v2588, 1.442695
        %v2592 = vpow.pop %v2591
        %v2593 = vmul.f32 %v2583, %v2590
        %v2594 = vmul.f32 %v2584, %v2592
        %v2595 = vsub.f32 1.0, %v2593
        %v2596 = vsub.f32 1.0, %v2594
        %vm2597 = vcmp.lt.f32.partialorder %v2555, 0.0
        %vm2598 = vcmp.lt.f32.partialorder %v2556, 0.0
        %v2599 = vsub.f32 0.0, %v2595
        %v2600 = vsub.f32 0.0, %v2596
        %v2601 = vsel %vm2597, %v2599, %v2595
        %v2602 = vsel %vm2598, %v2600, %v2596
        %v2603 = vadd.f32 %v2601, 1.0
        %v2604 = vadd.f32 %v2602, 1.0
        %v2605 = vmul.f32 %v2553, %v2603
        %v2606 = vmul.f32 %v2554, %v2604
        %v2607 = vld [vmem:[%s4] sm:$0xff]
        %v2608 = vld [vmem:[%s4 + $0x8] sm:$0xff]
        %v2609 = vld [vmem:[%s4 + $0x10] sm:$0xff]
        %v2610 = vld [vmem:[%s4 + $0x18] sm:$0xff]
        %v2611 = vld [vmem:[%s4 + $0x20] sm:$0xff]
        %v2612 = vld [vmem:[%s4 + $0x28] sm:$0xff]
        %v2613 = vld [vmem:[%s4 + $0x30] sm:$0xff]
        %v2614 = vld [vmem:[%s4 + $0x38] sm:$0xff]
        %v2615 = vld [vmem:[%s2 + $0x4] sm:$0x1]
        %v2617 = vlaneseq
        %v2618 = vshrl.u32 %v2617, 7
        %v2619 = vsub.s32 0, %v2618
        %v2620 = vrot.slane %v2615, %v2619
        %2630 = vrot.lane.b32.xlu0 %v2607, 64
        %v2631 = vpop.permute.xlu0 %2630
        %2632 = vrot.lane.b32.xlu0 %v2608, 64
        %v2633 = vpop.permute.xlu0 %2632
        %2634 = vrot.lane.b32.xlu0 %v2609, 64
        %v2635 = vpop.permute.xlu0 %2634
        %2636 = vrot.lane.b32.xlu0 %v2610, 64
        %v2637 = vpop.permute.xlu0 %2636
        %2638 = vrot.lane.b32.xlu0 %v2611, 64
        %v2639 = vpop.permute.xlu0 %2638
        %2640 = vrot.lane.b32.xlu0 %v2612, 64
        %v2641 = vpop.permute.xlu0 %2640
        %2642 = vrot.lane.b32.xlu0 %v2613, 64
        %v2643 = vpop.permute.xlu0 %2642
        %2644 = vrot.lane.b32.xlu0 %v2614, 64
        %v2645 = vpop.permute.xlu0 %2644
        %v2655 = vsel %vm779, %v2605, 0
        %v2658 = vsel %vm779, %v2606, 0
        %2660 = vmatprep.subr.mxu0 0.0
        %2661 = vmatpush1.msra.mxu0 %v2631
        %2662 = vmatprep.subr.mxu0 0.0
        %2663 = vmatpush1.msra.mxu0 %v2633
        %2664 = vmatprep.subr.mxu0 0.0
        %2665 = vmatpush1.msra.mxu0 %v2635
        %2666 = vmatprep.subr.mxu0 0.0
        %2667 = vmatpush1.msra.mxu0 %v2637
        %2668 = vmatprep.subr.mxu0 0.0
        %2669 = vmatpush1.msra.mxu0 %v2639
        %2670 = vmatprep.subr.mxu0 0.0
        %2671 = vmatpush1.msra.mxu0 %v2641
        %2672 = vmatprep.subr.mxu0 0.0
        %2673 = vmatpush1.msra.mxu0 %v2643
        %2674 = vmatprep.subr.mxu0 0.0
        %2675 = vmatpush1.msra.mxu0 %v2645
        %2676 = vmatprep.subr.mxu0 0.0
        %2677 = vmatpush1.msra.mxu0 0.0
        %2678 = vmatprep.subr.mxu0 0.0
        %2679 = vmatpush1.msra.mxu0 0.0
        %2680 = vmatprep.subr.mxu0 0.0
        %2681 = vmatpush1.msra.mxu0 0.0
        %2682 = vmatprep.subr.mxu0 0.0
        %2683 = vmatpush1.msra.mxu0 0.0
        %2684 = vmatprep.subr.mxu0 0.0
        %2685 = vmatpush1.msra.mxu0 0.0
        %2686 = vmatprep.subr.mxu0 0.0
        %2687 = vmatpush1.msra.mxu0 0.0
        %2688 = vmatprep.subr.mxu0 0.0
        %2689 = vmatpush1.msra.mxu0 0.0
        %2690 = vmatprep.subr.mxu0 0.0
        %2691 = vmatpush1.msra.mxu0 0.0
        %2692 = vmatprep.subr.mxu0 0.0
        %2693 = vmatpush1.msra.mxu0 0.0
        %2694 = vmatprep.subr.mxu0 0.0
        %2695 = vmatpush1.msra.mxu0 0.0
        %2696 = vmatprep.subr.mxu0 0.0
        %2697 = vmatpush1.msra.mxu0 0.0
        %2698 = vmatprep.subr.mxu0 0.0
        %2699 = vmatpush1.msra.mxu0 0.0
        %2700 = vmatprep.subr.mxu0 0.0
        %2701 = vmatpush1.msra.mxu0 0.0
        %2702 = vmatprep.subr.mxu0 0.0
        %2703 = vmatpush1.msra.mxu0 0.0
        %2704 = vmatprep.subr.mxu0 0.0
        %2705 = vmatpush1.msra.mxu0 0.0
        %2706 = vmatprep.subr.mxu0 0.0
        %2707 = vmatpush1.msra.mxu0 0.0
        %2708 = vmatprep.subr.mxu0 0.0
        %2709 = vmatpush1.msra.mxu0 0.0
        %2710 = vmatprep.subr.mxu0 0.0
        %2711 = vmatpush1.msra.mxu0 0.0
        %2712 = vmatprep.subr.mxu0 0.0
        %2713 = vmatpush1.msra.mxu0 0.0
        %2714 = vmatprep.subr.mxu0 0.0
        %2715 = vmatpush1.msra.mxu0 0.0
        %2716 = vmatprep.subr.mxu0 0.0
        %2717 = vmatpush1.msra.mxu0 0.0
        %2718 = vmatprep.subr.mxu0 0.0
        %2719 = vmatpush1.msra.mxu0 0.0
        %2720 = vmatprep.subr.mxu0 0.0
        %2721 = vmatpush1.msra.mxu0 0.0
        %2722 = vmatprep.subr.mxu0 0.0
        %2723 = vmatpush1.msra.mxu0 0.0
        %2724 = vmatprep.mubr.f32.mxu0 0.0
        %2725 = vmatmul.mubr.f32.gmra.mrb[0].mxu0 %v2655
        %v2726 = vpop.f32.mrb[0].mxu0
        %v2727 = vadd.f32 %v2620, %v2726
        %v2728 = vpop.f32.mrb[0].mxu0
        %2729 = vmatprep.mubr.f32.mxu0 0.0
        %2730 = vmatmul.mubr.f32.gmra.mrb[0].mxu0 %v2658
        %v2731 = vpop.f32.mrb[0].mxu0
        %v2732 = vadd.f32 %v2620, %v2731
        %v2733 = vpop.f32.mrb[0].mxu0
        %2734 = vdwg.mxu0
        %v2735 = vadd.f32 %v2463, %v2727
        %v2736 = vadd.f32 %v2464, %v2732
        %v2737 = vsel %vm439, %v2735, 0.0
        %2738 = vadd.xlane.f32.xlu0 %v2737
        %v2739 = vpop.xlane.xlu0 %2738
        %v2740 = vsel %vm439, %v2736, 0.0
        %2741 = vadd.xlane.f32.xlu0 %v2740
        %v2742 = vpop.xlane.xlu0 %2741
        %v2743 = vmul.f32 %v2739, %v936
        %v2744 = vmul.f32 %v2742, %v936
        %v2745 = vsub.f32 %v2735, %v2743
        %v2746 = vsub.f32 %v2736, %v2744
        %v2747 = vmul.f32 %v2745, %v2745
        %v2748 = vmul.f32 %v2746, %v2746
        %v2749 = vsel %vm439, %v2747, 0.0
        %2750 = vadd.xlane.f32.xlu0 %v2749
        %v2751 = vpop.xlane.xlu0 %2750
        %v2752 = vsel %vm439, %v2748, 0.0
        %2753 = vadd.xlane.f32.xlu0 %v2752
        %v2754 = vpop.xlane.xlu0 %2753
        %v2755 = vmul.f32 %v2751, %v936
        %v2756 = vmul.f32 %v2754, %v936
        %v2757 = vadd.f32 %v2755, 1e-05
        %v2758 = vadd.f32 %v2756, 1e-05
        %v2759 = vrsqrt.pop %v2757
        %v2760 = vrsqrt.pop %v2758
        %v2761 = vmul.f32 %v2745, %v2759
        %v2762 = vmul.f32 %v2746, %v2760
        %2763 = vrot.lane.b32.xlu0 %v2620, 96
        %v2764 = vpop.permute.xlu0 %2763
        %v2766 = vmul.f32 %v2761, %v2764
        %v2767 = vmul.f32 %v2762, %v2764
        %2768 = vrot.lane.b32.xlu0 %v2620, 64
        %v2769 = vpop.permute.xlu0 %2768
        %v2771 = vadd.f32 %v2766, %v2769
        %v2772 = vadd.f32 %v2767, %v2769
        %s2773 = sld [smem:[#allocation2 + $0x1]]
        %v2774 = vstv %s2773
        %v2775 = vmul.f32 %v2774, %v2771
        %v2776 = vmul.f32 %v2774, %v2772
        %v2777 = vadd.f32 %v1358, %v2775
        %v2778 = vadd.f32 %v1359, %v2776
        %v2779 = vld [vmem:[%s3 + $0x10] sm:$0xff]
        %v2780 = vld [vmem:[%s3 + $0x30] sm:$0xff]
        %v2781 = vld [vmem:[%s3 + $0x50] sm:$0xff]
        %v2782 = vld [vmem:[%s3 + $0x70] sm:$0xff]
        %v2783 = vld [vmem:[%s2 + $0x4] sm:$0x3]
        %v2785 = vlaneseq
        %v2786 = vshrl.u32 %v2785, 7
        %v2787 = vsub.s32 0, %v2786
        %v2788 = vrot.slane %v2783, %v2787
        %v2789 = vlaneseq
        %v2790 = vshrl.u32 %v2789, 7
        %v2791 = vsub.s32 1, %v2790
        %v2792 = vrot.slane %v2783, %v2791
        %2793 = vrot.lane.b32.xlu0 %v2788, 32
        %v2794 = vpop.permute.xlu0 %2793
        %2795 = vrot.lane.b32.xlu0 %v2792, 32
        %v2796 = vpop.permute.xlu0 %2795
        %v2797 = vsel %vm439, %v2794, %v2796
        %v2800 = vsel %vm439, %v2771, 0
        %v2803 = vsel %vm439, %v2772, 0
        %2805 = vmatprep.subr.mxu0 0.0
        %2806 = vmatpush1.msra.mxu0 %v2779
        %2807 = vmatprep.subr.mxu0 0.0
        %2808 = vmatpush1.msra.mxu0 %v2780
        %2809 = vmatprep.subr.mxu0 0.0
        %2810 = vmatpush1.msra.mxu0 %v2781
        %2811 = vmatprep.subr.mxu0 0.0
        %2812 = vmatpush1.msra.mxu0 %v2782
        %2813 = vmatprep.subr.mxu0 0.0
        %2814 = vmatpush1.msra.mxu0 0.0
        %2815 = vmatprep.subr.mxu0 0.0
        %2816 = vmatpush1.msra.mxu0 0.0
        %2817 = vmatprep.subr.mxu0 0.0
        %2818 = vmatpush1.msra.mxu0 0.0
        %2819 = vmatprep.subr.mxu0 0.0
        %2820 = vmatpush1.msra.mxu0 0.0
        %2821 = vmatprep.subr.mxu0 0.0
        %2822 = vmatpush1.msra.mxu0 0.0
        %2823 = vmatprep.subr.mxu0 0.0
        %2824 = vmatpush1.msra.mxu0 0.0
        %2825 = vmatprep.subr.mxu0 0.0
        %2826 = vmatpush1.msra.mxu0 0.0
        %2827 = vmatprep.subr.mxu0 0.0
        %2828 = vmatpush1.msra.mxu0 0.0
        %2829 = vmatprep.subr.mxu0 0.0
        %2830 = vmatpush1.msra.mxu0 0.0
        %2831 = vmatprep.subr.mxu0 0.0
        %2832 = vmatpush1.msra.mxu0 0.0
        %2833 = vmatprep.subr.mxu0 0.0
        %2834 = vmatpush1.msra.mxu0 0.0
        %2835 = vmatprep.subr.mxu0 0.0
        %2836 = vmatpush1.msra.mxu0 0.0
        %2837 = vmatprep.subr.mxu0 0.0
        %2838 = vmatpush1.msra.mxu0 0.0
        %2839 = vmatprep.subr.mxu0 0.0
        %2840 = vmatpush1.msra.mxu0 0.0
        %2841 = vmatprep.subr.mxu0 0.0
        %2842 = vmatpush1.msra.mxu0 0.0
        %2843 = vmatprep.subr.mxu0 0.0
        %2844 = vmatpush1.msra.mxu0 0.0
        %2845 = vmatprep.subr.mxu0 0.0
        %2846 = vmatpush1.msra.mxu0 0.0
        %2847 = vmatprep.subr.mxu0 0.0
        %2848 = vmatpush1.msra.mxu0 0.0
        %2849 = vmatprep.subr.mxu0 0.0
        %2850 = vmatpush1.msra.mxu0 0.0
        %2851 = vmatprep.subr.mxu0 0.0
        %2852 = vmatpush1.msra.mxu0 0.0
        %2853 = vmatprep.subr.mxu0 0.0
        %2854 = vmatpush1.msra.mxu0 0.0
        %2855 = vmatprep.subr.mxu0 0.0
        %2856 = vmatpush1.msra.mxu0 0.0
        %2857 = vmatprep.subr.mxu0 0.0
        %2858 = vmatpush1.msra.mxu0 0.0
        %2859 = vmatprep.subr.mxu0 0.0
        %2860 = vmatpush1.msra.mxu0 0.0
        %2861 = vmatprep.subr.mxu0 0.0
        %2862 = vmatpush1.msra.mxu0 0.0
        %2863 = vmatprep.subr.mxu0 0.0
        %2864 = vmatpush1.msra.mxu0 0.0
        %2865 = vmatprep.subr.mxu0 0.0
        %2866 = vmatpush1.msra.mxu0 0.0
        %2867 = vmatprep.subr.mxu0 0.0
        %2868 = vmatpush1.msra.mxu0 0.0
        %2869 = vmatprep.mubr.f32.mxu0 0.0
        %2870 = vmatmul.mubr.f32.gmra.mrb[0].mxu0 %v2800
        %v2871 = vpop.f32.mrb[0].mxu0
        %v2872 = vadd.f32 %v2797, %v2871
        %v2873 = vpop.f32.mrb[0].mxu0
        %2874 = vmatprep.mubr.f32.mxu0 0.0
        %2875 = vmatmul.mubr.f32.gmra.mrb[0].mxu0 %v2803
        %v2876 = vpop.f32.mrb[0].mxu0
        %v2877 = vadd.f32 %v2797, %v2876
        %v2878 = vpop.f32.mrb[0].mxu0
        %2879 = vdwg.mxu0
        %2882 = vrot.lane.b32.xlu0 %v2872, 96
        %v2883 = vpop.permute.xlu0 %2882
        %2884 = vrot.lane.b32.xlu0 %v2877, 96
        %v2885 = vpop.permute.xlu0 %2884
        %v2886 = vsel %vm1494, %v2872, 0
        %v2888 = vsel %vm1494, %v2877, 0
        %v2890 = vsel %vm1494, %v2883, 0
        %v2892 = vsel %vm1494, %v2885, 0
        %2894 = vmatprep.subr.mxu0 0.0
        %2895 = vmatpush1.xpose.msra.mxu0 %v2890
        %2896 = vmatprep.subr.mxu0 0.0
        %2897 = vmatpush1.xpose.msra.mxu0 %v2892
        %2898 = vmatprep.subr.mxu0 0.0
        %2899 = vmatpush1.xpose.msra.mxu0 0.0
        %2900 = vmatprep.subr.mxu0 0.0
        %2901 = vmatpush1.xpose.msra.mxu0 0.0
        %2902 = vmatprep.subr.mxu0 0.0
        %2903 = vmatpush1.xpose.msra.mxu0 0.0
        %2904 = vmatprep.subr.mxu0 0.0
        %2905 = vmatpush1.xpose.msra.mxu0 0.0
        %2906 = vmatprep.subr.mxu0 0.0
        %2907 = vmatpush1.xpose.msra.mxu0 0.0
        %2908 = vmatprep.subr.mxu0 0.0
        %2909 = vmatpush1.xpose.msra.mxu0 0.0
        %2910 = vmatprep.subr.mxu0 0.0
        %2911 = vmatpush1.xpose.msra.mxu0 0.0
        %2912 = vmatprep.subr.mxu0 0.0
        %2913 = vmatpush1.xpose.msra.mxu0 0.0
        %2914 = vmatprep.subr.mxu0 0.0
        %2915 = vmatpush1.xpose.msra.mxu0 0.0
        %2916 = vmatprep.subr.mxu0 0.0
        %2917 = vmatpush1.xpose.msra.mxu0 0.0
        %2918 = vmatprep.subr.mxu0 0.0
        %2919 = vmatpush1.xpose.msra.mxu0 0.0
        %2920 = vmatprep.subr.mxu0 0.0
        %2921 = vmatpush1.xpose.msra.mxu0 0.0
        %2922 = vmatprep.subr.mxu0 0.0
        %2923 = vmatpush1.xpose.msra.mxu0 0.0
        %2924 = vmatprep.subr.mxu0 0.0
        %2925 = vmatpush1.xpose.msra.mxu0 0.0
        %2926 = vmatprep.subr.mxu0 0.0
        %2927 = vmatpush1.xpose.msra.mxu0 0.0
        %2928 = vmatprep.subr.mxu0 0.0
        %2929 = vmatpush1.xpose.msra.mxu0 0.0
        %2930 = vmatprep.subr.mxu0 0.0
        %2931 = vmatpush1.xpose.msra.mxu0 0.0
        %2932 = vmatprep.subr.mxu0 0.0
        %2933 = vmatpush1.xpose.msra.mxu0 0.0
        %2934 = vmatprep.subr.mxu0 0.0
        %2935 = vmatpush1.xpose.msra.mxu0 0.0
        %2936 = vmatprep.subr.mxu0 0.0
        %2937 = vmatpush1.xpose.msra.mxu0 0.0
        %2938 = vmatprep.subr.mxu0 0.0
        %2939 = vmatpush1.xpose.msra.mxu0 0.0
        %2940 = vmatprep.subr.mxu0 0.0
        %2941 = vmatpush1.xpose.msra.mxu0 0.0
        %2942 = vmatprep.subr.mxu0 0.0
        %2943 = vmatpush1.xpose.msra.mxu0 0.0
        %2944 = vmatprep.subr.mxu0 0.0
        %2945 = vmatpush1.xpose.msra.mxu0 0.0
        %2946 = vmatprep.subr.mxu0 0.0
        %2947 = vmatpush1.xpose.msra.mxu0 0.0
        %2948 = vmatprep.subr.mxu0 0.0
        %2949 = vmatpush1.xpose.msra.mxu0 0.0
        %2950 = vmatprep.subr.mxu0 0.0
        %2951 = vmatpush1.xpose.msra.mxu0 0.0
        %2952 = vmatprep.subr.mxu0 0.0
        %2953 = vmatpush1.xpose.msra.mxu0 0.0
        %2954 = vmatprep.subr.mxu0 0.0
        %2955 = vmatpush1.xpose.msra.mxu0 0.0
        %2956 = vmatprep.subr.mxu0 0.0
        %2957 = vmatpush1.xpose.msra.mxu0 0.0
        %2958 = vmatprep.mubr.f32.mxu0 0.0
        %2959 = vmatmul.mubr.f32.gmra.mrb[0].mxu0 %v2886
        %v2960 = vpop.f32.mrb[0].mxu0
        %v2961 = vadd.f32 0.0, %v2960
        %v2962 = vpop.f32.mrb[0].mxu0
        %2963 = vmatprep.mubr.f32.mxu0 0.0
        %2964 = vmatmul.mubr.f32.gmra.mrb[0].mxu0 %v2888
        %v2965 = vpop.f32.mrb[0].mxu0
        %v2966 = vadd.f32 0.0, %v2965
        %v2967 = vpop.f32.mrb[0].mxu0
        %2968 = vdwg.mxu0
        %v2969 = vmul.f32 %v2961, 0.35355338
        %v2970 = vmul.f32 %v2966, 0.35355338
        %v2971 = vsel %vm1580, %v2969, -inf
        %2972 = vmax.xlane.f32.xlu0 %v2971
        %v2973 = vpop.xlane.xlu0 %2972
        %v2974 = vsel %vm1580, %v2970, -inf
        %2975 = vmax.xlane.f32.xlu0 %v2974
        %v2976 = vpop.xlane.xlu0 %2975
        %v2977 = vsub.f32 %v2969, %v2973
        %v2978 = vsub.f32 %v2970, %v2976
        %v2979 = vmul.f32 %v2977, 1.442695
        %v2980 = vpow.pop %v2979
        %v2981 = vmul.f32 %v2978, 1.442695
        %v2982 = vpow.pop %v2981
        %v2983 = vsel %vm1580, %v2980, 0.0
        %2984 = vadd.xlane.f32.xlu0 %v2983
        %v2985 = vpop.xlane.xlu0 %2984
        %v2986 = vsel %vm1580, %v2982, 0.0
        %2987 = vadd.xlane.f32.xlu0 %v2986
        %v2988 = vpop.xlane.xlu0 %2987
        %v2989 = vrcp.pop %v2985
        %v2990 = vrcp.pop %v2988
        %v2991 = vmul.f32 %v2980, %v2989
        %v2992 = vmul.f32 %v2982, %v2990
        %2993 = vrot.lane.b32.xlu0 %v2872, 64
        %v2994 = vpop.permute.xlu0 %2993
        %2995 = vrot.lane.b32.xlu0 %v2877, 64
        %v2996 = vpop.permute.xlu0 %2995
        %v3000 = vsel %vm1580, %v2991, 0
        %v3003 = vsel %vm1580, %v2992, 0
        %3005 = vmatprep.subr.mxu0 0.0
        %3006 = vmatpush1.msra.mxu0 %v2994
        %3007 = vmatprep.subr.mxu0 0.0
        %3008 = vmatpush1.msra.mxu0 %v2996
        %3009 = vmatprep.subr.mxu0 0.0
        %3010 = vmatpush1.msra.mxu0 0.0
        %3011 = vmatprep.subr.mxu0 0.0
        %3012 = vmatpush1.msra.mxu0 0.0
        %3013 = vmatprep.subr.mxu0 0.0
        %3014 = vmatpush1.msra.mxu0 0.0
        %3015 = vmatprep.subr.mxu0 0.0
        %3016 = vmatpush1.msra.mxu0 0.0
        %3017 = vmatprep.subr.mxu0 0.0
        %3018 = vmatpush1.msra.mxu0 0.0
        %3019 = vmatprep.subr.mxu0 0.0
        %3020 = vmatpush1.msra.mxu0 0.0
        %3021 = vmatprep.subr.mxu0 0.0
        %3022 = vmatpush1.msra.mxu0 0.0
        %3023 = vmatprep.subr.mxu0 0.0
        %3024 = vmatpush1.msra.mxu0 0.0
        %3025 = vmatprep.subr.mxu0 0.0
        %3026 = vmatpush1.msra.mxu0 0.0
        %3027 = vmatprep.subr.mxu0 0.0
        %3028 = vmatpush1.msra.mxu0 0.0
        %3029 = vmatprep.subr.mxu0 0.0
        %3030 = vmatpush1.msra.mxu0 0.0
        %3031 = vmatprep.subr.mxu0 0.0
        %3032 = vmatpush1.msra.mxu0 0.0
        %3033 = vmatprep.subr.mxu0 0.0
        %3034 = vmatpush1.msra.mxu0 0.0
        %3035 = vmatprep.subr.mxu0 0.0
        %3036 = vmatpush1.msra.mxu0 0.0
        %3037 = vmatprep.subr.mxu0 0.0
        %3038 = vmatpush1.msra.mxu0 0.0
        %3039 = vmatprep.subr.mxu0 0.0
        %3040 = vmatpush1.msra.mxu0 0.0
        %3041 = vmatprep.subr.mxu0 0.0
        %3042 = vmatpush1.msra.mxu0 0.0
        %3043 = vmatprep.subr.mxu0 0.0
        %3044 = vmatpush1.msra.mxu0 0.0
        %3045 = vmatprep.subr.mxu0 0.0
        %3046 = vmatpush1.msra.mxu0 0.0
        %3047 = vmatprep.subr.mxu0 0.0
        %3048 = vmatpush1.msra.mxu0 0.0
        %3049 = vmatprep.subr.mxu0 0.0
        %3050 = vmatpush1.msra.mxu0 0.0
        %3051 = vmatprep.subr.mxu0 0.0
        %3052 = vmatpush1.msra.mxu0 0.0
        %3053 = vmatprep.subr.mxu0 0.0
        %3054 = vmatpush1.msra.mxu0 0.0
        %3055 = vmatprep.subr.mxu0 0.0
        %3056 = vmatpush1.msra.mxu0 0.0
        %3057 = vmatprep.subr.mxu0 0.0
        %3058 = vmatpush1.msra.mxu0 0.0
        %3059 = vmatprep.subr.mxu0 0.0
        %3060 = vmatpush1.msra.mxu0 0.0
        %3061 = vmatprep.subr.mxu0 0.0
        %3062 = vmatpush1.msra.mxu0 0.0
        %3063 = vmatprep.subr.mxu0 0.0
        %3064 = vmatpush1.msra.mxu0 0.0
        %3065 = vmatprep.subr.mxu0 0.0
        %3066 = vmatpush1.msra.mxu0 0.0
        %3067 = vmatprep.subr.mxu0 0.0
        %3068 = vmatpush1.msra.mxu0 0.0
        %3069 = vmatprep.mubr.f32.mxu0 0.0
        %3070 = vmatmul.mubr.f32.gmra.mrb[0].mxu0 %v3000
        %v3071 = vpop.f32.mrb[0].mxu0
        %v3072 = vadd.f32 0.0, %v3071
        %v3073 = vpop.f32.mrb[0].mxu0
        %3074 = vmatprep.mubr.f32.mxu0 0.0
        %3075 = vmatmul.mubr.f32.gmra.mrb[0].mxu0 %v3003
        %v3076 = vpop.f32.mrb[0].mxu0
        %v3077 = vadd.f32 0.0, %v3076
        %v3078 = vpop.f32.mrb[0].mxu0
        %3079 = vdwg.mxu0
        %3080 = vrot.lane.b32.xlu0 %v2872, 120
        %v3081 = vpop.permute.xlu0 %3080
        %3082 = vrot.lane.b32.xlu0 %v2877, 120
        %v3083 = vpop.permute.xlu0 %3082
        %3084 = vrot.lane.b32.xlu0 %v2872, 88
        %v3085 = vpop.permute.xlu0 %3084
        %3086 = vrot.lane.b32.xlu0 %v2877, 88
        %v3087 = vpop.permute.xlu0 %3086
        %v3088 = vsel %vm1494, %v3081, 0
        %v3090 = vsel %vm1494, %v3083, 0
        %v3092 = vsel %vm1494, %v3085, 0
        %v3094 = vsel %vm1494, %v3087, 0
        %3096 = vmatprep.subr.mxu0 0.0
        %3097 = vmatpush1.xpose.msra.mxu0 %v3092
        %3098 = vmatprep.subr.mxu0 0.0
        %3099 = vmatpush1.xpose.msra.mxu0 %v3094
        %3100 = vmatprep.subr.mxu0 0.0
        %3101 = vmatpush1.xpose.msra.mxu0 0.0
        %3102 = vmatprep.subr.mxu0 0.0
        %3103 = vmatpush1.xpose.msra.mxu0 0.0
        %3104 = vmatprep.subr.mxu0 0.0
        %3105 = vmatpush1.xpose.msra.mxu0 0.0
        %3106 = vmatprep.subr.mxu0 0.0
        %3107 = vmatpush1.xpose.msra.mxu0 0.0
        %3108 = vmatprep.subr.mxu0 0.0
        %3109 = vmatpush1.xpose.msra.mxu0 0.0
        %3110 = vmatprep.subr.mxu0 0.0
        %3111 = vmatpush1.xpose.msra.mxu0 0.0
        %3112 = vmatprep.subr.mxu0 0.0
        %3113 = vmatpush1.xpose.msra.mxu0 0.0
        %3114 = vmatprep.subr.mxu0 0.0
        %3115 = vmatpush1.xpose.msra.mxu0 0.0
        %3116 = vmatprep.subr.mxu0 0.0
        %3117 = vmatpush1.xpose.msra.mxu0 0.0
        %3118 = vmatprep.subr.mxu0 0.0
        %3119 = vmatpush1.xpose.msra.mxu0 0.0
        %3120 = vmatprep.subr.mxu0 0.0
        %3121 = vmatpush1.xpose.msra.mxu0 0.0
        %3122 = vmatprep.subr.mxu0 0.0
        %3123 = vmatpush1.xpose.msra.mxu0 0.0
        %3124 = vmatprep.subr.mxu0 0.0
        %3125 = vmatpush1.xpose.msra.mxu0 0.0
        %3126 = vmatprep.subr.mxu0 0.0
        %3127 = vmatpush1.xpose.msra.mxu0 0.0
        %3128 = vmatprep.subr.mxu0 0.0
        %3129 = vmatpush1.xpose.msra.mxu0 0.0
        %3130 = vmatprep.subr.mxu0 0.0
        %3131 = vmatpush1.xpose.msra.mxu0 0.0
        %3132 = vmatprep.subr.mxu0 0.0
        %3133 = vmatpush1.xpose.msra.mxu0 0.0
        %3134 = vmatprep.subr.mxu0 0.0
        %3135 = vmatpush1.xpose.msra.mxu0 0.0
        %3136 = vmatprep.subr.mxu0 0.0
        %3137 = vmatpush1.xpose.msra.mxu0 0.0
        %3138 = vmatprep.subr.mxu0 0.0
        %3139 = vmatpush1.xpose.msra.mxu0 0.0
        %3140 = vmatprep.subr.mxu0 0.0
        %3141 = vmatpush1.xpose.msra.mxu0 0.0
        %3142 = vmatprep.subr.mxu0 0.0
        %3143 = vmatpush1.xpose.msra.mxu0 0.0
        %3144 = vmatprep.subr.mxu0 0.0
        %3145 = vmatpush1.xpose.msra.mxu0 0.0
        %3146 = vmatprep.subr.mxu0 0.0
        %3147 = vmatpush1.xpose.msra.mxu0 0.0
        %3148 = vmatprep.subr.mxu0 0.0
        %3149 = vmatpush1.xpose.msra.mxu0 0.0
        %3150 = vmatprep.subr.mxu0 0.0
        %3151 = vmatpush1.xpose.msra.mxu0 0.0
        %3152 = vmatprep.subr.mxu0 0.0
        %3153 = vmatpush1.xpose.msra.mxu0 0.0
        %3154 = vmatprep.subr.mxu0 0.0
        %3155 = vmatpush1.xpose.msra.mxu0 0.0
        %3156 = vmatprep.subr.mxu0 0.0
        %3157 = vmatpush1.xpose.msra.mxu0 0.0
        %3158 = vmatprep.subr.mxu0 0.0
        %3159 = vmatpush1.xpose.msra.mxu0 0.0
        %3160 = vmatprep.mubr.f32.mxu0 0.0
        %3161 = vmatmul.mubr.f32.gmra.mrb[0].mxu0 %v3088
        %v3162 = vpop.f32.mrb[0].mxu0
        %v3163 = vadd.f32 0.0, %v3162
        %v3164 = vpop.f32.mrb[0].mxu0
        %3165 = vmatprep.mubr.f32.mxu0 0.0
        %3166 = vmatmul.mubr.f32.gmra.mrb[0].mxu0 %v3090
        %v3167 = vpop.f32.mrb[0].mxu0
        %v3168 = vadd.f32 0.0, %v3167
        %v3169 = vpop.f32.mrb[0].mxu0
        %3170 = vdwg.mxu0
        %v3171 = vmul.f32 %v3163, 0.35355338
        %v3172 = vmul.f32 %v3168, 0.35355338
        %v3173 = vsel %vm1580, %v3171, -inf
        %3174 = vmax.xlane.f32.xlu0 %v3173
        %v3175 = vpop.xlane.xlu0 %3174
        %v3176 = vsel %vm1580, %v3172, -inf
        %3177 = vmax.xlane.f32.xlu0 %v3176
        %v3178 = vpop.xlane.xlu0 %3177
        %v3179 = vsub.f32 %v3171, %v3175
        %v3180 = vsub.f32 %v3172, %v3178
        %v3181 = vmul.f32 %v3179, 1.442695
        %v3182 = vpow.pop %v3181
        %v3183 = vmul.f32 %v3180, 1.442695
        %v3184 = vpow.pop %v3183
        %v3185 = vsel %vm1580, %v3182, 0.0
        %3186 = vadd.xlane.f32.xlu0 %v3185
        %v3187 = vpop.xlane.xlu0 %3186
        %v3188 = vsel %vm1580, %v3184, 0.0
        %3189 = vadd.xlane.f32.xlu0 %v3188
        %v3190 = vpop.xlane.xlu0 %3189
        %v3191 = vrcp.pop %v3187
        %v3192 = vrcp.pop %v3190
        %v3193 = vmul.f32 %v3182, %v3191
        %v3194 = vmul.f32 %v3184, %v3192
        %3195 = vrot.lane.b32.xlu0 %v2872, 56
        %v3196 = vpop.permute.xlu0 %3195
        %3197 = vrot.lane.b32.xlu0 %v2877, 56
        %v3198 = vpop.permute.xlu0 %3197
        %v3202 = vsel %vm1580, %v3193, 0
        %v3205 = vsel %vm1580, %v3194, 0
        %3207 = vmatprep.subr.mxu0 0.0
        %3208 = vmatpush1.msra.mxu0 %v3196
        %3209 = vmatprep.subr.mxu0 0.0
        %3210 = vmatpush1.msra.mxu0 %v3198
        %3211 = vmatprep.subr.mxu0 0.0
        %3212 = vmatpush1.msra.mxu0 0.0
        %3213 = vmatprep.subr.mxu0 0.0
        %3214 = vmatpush1.msra.mxu0 0.0
        %3215 = vmatprep.subr.mxu0 0.0
        %3216 = vmatpush1.msra.mxu0 0.0
        %3217 = vmatprep.subr.mxu0 0.0
        %3218 = vmatpush1.msra.mxu0 0.0
        %3219 = vmatprep.subr.mxu0 0.0
        %3220 = vmatpush1.msra.mxu0 0.0
        %3221 = vmatprep.subr.mxu0 0.0
        %3222 = vmatpush1.msra.mxu0 0.0
        %3223 = vmatprep.subr.mxu0 0.0
        %3224 = vmatpush1.msra.mxu0 0.0
        %3225 = vmatprep.subr.mxu0 0.0
        %3226 = vmatpush1.msra.mxu0 0.0
        %3227 = vmatprep.subr.mxu0 0.0
        %3228 = vmatpush1.msra.mxu0 0.0
        %3229 = vmatprep.subr.mxu0 0.0
        %3230 = vmatpush1.msra.mxu0 0.0
        %3231 = vmatprep.subr.mxu0 0.0
        %3232 = vmatpush1.msra.mxu0 0.0
        %3233 = vmatprep.subr.mxu0 0.0
        %3234 = vmatpush1.msra.mxu0 0.0
        %3235 = vmatprep.subr.mxu0 0.0
        %3236 = vmatpush1.msra.mxu0 0.0
        %3237 = vmatprep.subr.mxu0 0.0
        %3238 = vmatpush1.msra.mxu0 0.0
        %3239 = vmatprep.subr.mxu0 0.0
        %3240 = vmatpush1.msra.mxu0 0.0
        %3241 = vmatprep.subr.mxu0 0.0
        %3242 = vmatpush1.msra.mxu0 0.0
        %3243 = vmatprep.subr.mxu0 0.0
        %3244 = vmatpush1.msra.mxu0 0.0
        %3245 = vmatprep.subr.mxu0 0.0
        %3246 = vmatpush1.msra.mxu0 0.0
        %3247 = vmatprep.subr.mxu0 0.0
        %3248 = vmatpush1.msra.mxu0 0.0
        %3249 = vmatprep.subr.mxu0 0.0
        %3250 = vmatpush1.msra.mxu0 0.0
        %3251 = vmatprep.subr.mxu0 0.0
        %3252 = vmatpush1.msra.mxu0 0.0
        %3253 = vmatprep.subr.mxu0 0.0
        %3254 = vmatpush1.msra.mxu0 0.0
        %3255 = vmatprep.subr.mxu0 0.0
        %3256 = vmatpush1.msra.mxu0 0.0
        %3257 = vmatprep.subr.mxu0 0.0
        %3258 = vmatpush1.msra.mxu0 0.0
        %3259 = vmatprep.subr.mxu0 0.0
        %3260 = vmatpush1.msra.mxu0 0.0
        %3261 = vmatprep.subr.mxu0 0.0
        %3262 = vmatpush1.msra.mxu0 0.0
        %3263 = vmatprep.subr.mxu0 0.0
        %3264 = vmatpush1.msra.mxu0 0.0
        %3265 = vmatprep.subr.mxu0 0.0
        %3266 = vmatpush1.msra.mxu0 0.0
        %3267 = vmatprep.subr.mxu0 0.0
        %3268 = vmatpush1.msra.mxu0 0.0
        %3269 = vmatprep.subr.mxu0 0.0
        %3270 = vmatpush1.msra.mxu0 0.0
        %3271 = vmatprep.mubr.f32.mxu0 0.0
        %3272 = vmatmul.mubr.f32.gmra.mrb[0].mxu0 %v3202
        %v3273 = vpop.f32.mrb[0].mxu0
        %v3274 = vadd.f32 0.0, %v3273
        %v3275 = vpop.f32.mrb[0].mxu0
        %3276 = vmatprep.mubr.f32.mxu0 0.0
        %3277 = vmatmul.mubr.f32.gmra.mrb[0].mxu0 %v3205
        %v3278 = vpop.f32.mrb[0].mxu0
        %v3279 = vadd.f32 0.0, %v3278
        %v3280 = vpop.f32.mrb[0].mxu0
        %3281 = vdwg.mxu0
        %3282 = vrot.lane.b32.xlu0 %v2872, 112
        %v3283 = vpop.permute.xlu0 %3282
        %3284 = vrot.lane.b32.xlu0 %v2877, 112
        %v3285 = vpop.permute.xlu0 %3284
        %3286 = vrot.lane.b32.xlu0 %v2872, 80
        %v3287 = vpop.permute.xlu0 %3286
        %3288 = vrot.lane.b32.xlu0 %v2877, 80
        %v3289 = vpop.permute.xlu0 %3288
        %v3290 = vsel %vm1494, %v3283, 0
        %v3292 = vsel %vm1494, %v3285, 0
        %v3294 = vsel %vm1494, %v3287, 0
        %v3296 = vsel %vm1494, %v3289, 0
        %3298 = vmatprep.subr.mxu0 0.0
        %3299 = vmatpush1.xpose.msra.mxu0 %v3294
        %3300 = vmatprep.subr.mxu0 0.0
        %3301 = vmatpush1.xpose.msra.mxu0 %v3296
        %3302 = vmatprep.subr.mxu0 0.0
        %3303 = vmatpush1.xpose.msra.mxu0 0.0
        %3304 = vmatprep.subr.mxu0 0.0
        %3305 = vmatpush1.xpose.msra.mxu0 0.0
        %3306 = vmatprep.subr.mxu0 0.0
        %3307 = vmatpush1.xpose.msra.mxu0 0.0
        %3308 = vmatprep.subr.mxu0 0.0
        %3309 = vmatpush1.xpose.msra.mxu0 0.0
        %3310 = vmatprep.subr.mxu0 0.0
        %3311 = vmatpush1.xpose.msra.mxu0 0.0
        %3312 = vmatprep.subr.mxu0 0.0
        %3313 = vmatpush1.xpose.msra.mxu0 0.0
        %3314 = vmatprep.subr.mxu0 0.0
        %3315 = vmatpush1.xpose.msra.mxu0 0.0
        %3316 = vmatprep.subr.mxu0 0.0
        %3317 = vmatpush1.xpose.msra.mxu0 0.0
        %3318 = vmatprep.subr.mxu0 0.0
        %3319 = vmatpush1.xpose.msra.mxu0 0.0
        %3320 = vmatprep.subr.mxu0 0.0
        %3321 = vmatpush1.xpose.msra.mxu0 0.0
        %3322 = vmatprep.subr.mxu0 0.0
        %3323 = vmatpush1.xpose.msra.mxu0 0.0
        %3324 = vmatprep.subr.mxu0 0.0
        %3325 = vmatpush1.xpose.msra.mxu0 0.0
        %3326 = vmatprep.subr.mxu0 0.0
        %3327 = vmatpush1.xpose.msra.mxu0 0.0
        %3328 = vmatprep.subr.mxu0 0.0
        %3329 = vmatpush1.xpose.msra.mxu0 0.0
        %3330 = vmatprep.subr.mxu0 0.0
        %3331 = vmatpush1.xpose.msra.mxu0 0.0
        %3332 = vmatprep.subr.mxu0 0.0
        %3333 = vmatpush1.xpose.msra.mxu0 0.0
        %3334 = vmatprep.subr.mxu0 0.0
        %3335 = vmatpush1.xpose.msra.mxu0 0.0
        %3336 = vmatprep.subr.mxu0 0.0
        %3337 = vmatpush1.xpose.msra.mxu0 0.0
        %3338 = vmatprep.subr.mxu0 0.0
        %3339 = vmatpush1.xpose.msra.mxu0 0.0
        %3340 = vmatprep.subr.mxu0 0.0
        %3341 = vmatpush1.xpose.msra.mxu0 0.0
        %3342 = vmatprep.subr.mxu0 0.0
        %3343 = vmatpush1.xpose.msra.mxu0 0.0
        %3344 = vmatprep.subr.mxu0 0.0
        %3345 = vmatpush1.xpose.msra.mxu0 0.0
        %3346 = vmatprep.subr.mxu0 0.0
        %3347 = vmatpush1.xpose.msra.mxu0 0.0
        %3348 = vmatprep.subr.mxu0 0.0
        %3349 = vmatpush1.xpose.msra.mxu0 0.0
        %3350 = vmatprep.subr.mxu0 0.0
        %3351 = vmatpush1.xpose.msra.mxu0 0.0
        %3352 = vmatprep.subr.mxu0 0.0
        %3353 = vmatpush1.xpose.msra.mxu0 0.0
        %3354 = vmatprep.subr.mxu0 0.0
        %3355 = vmatpush1.xpose.msra.mxu0 0.0
        %3356 = vmatprep.subr.mxu0 0.0
        %3357 = vmatpush1.xpose.msra.mxu0 0.0
        %3358 = vmatprep.subr.mxu0 0.0
        %3359 = vmatpush1.xpose.msra.mxu0 0.0
        %3360 = vmatprep.subr.mxu0 0.0
        %3361 = vmatpush1.xpose.msra.mxu0 0.0
        %3362 = vmatprep.mubr.f32.mxu0 0.0
        %3363 = vmatmul.mubr.f32.gmra.mrb[0].mxu0 %v3290
        %v3364 = vpop.f32.mrb[0].mxu0
        %v3365 = vadd.f32 0.0, %v3364
        %v3366 = vpop.f32.mrb[0].mxu0
        %3367 = vmatprep.mubr.f32.mxu0 0.0
        %3368 = vmatmul.mubr.f32.gmra.mrb[0].mxu0 %v3292
        %v3369 = vpop.f32.mrb[0].mxu0
        %v3370 = vadd.f32 0.0, %v3369
        %v3371 = vpop.f32.mrb[0].mxu0
        %3372 = vdwg.mxu0
        %v3373 = vmul.f32 %v3365, 0.35355338
        %v3374 = vmul.f32 %v3370, 0.35355338
        %v3375 = vsel %vm1580, %v3373, -inf
        %3376 = vmax.xlane.f32.xlu0 %v3375
        %v3377 = vpop.xlane.xlu0 %3376
        %v3378 = vsel %vm1580, %v3374, -inf
        %3379 = vmax.xlane.f32.xlu0 %v3378
        %v3380 = vpop.xlane.xlu0 %3379
        %v3381 = vsub.f32 %v3373, %v3377
        %v3382 = vsub.f32 %v3374, %v3380
        %v3383 = vmul.f32 %v3381, 1.442695
        %v3384 = vpow.pop %v3383
        %v3385 = vmul.f32 %v3382, 1.442695
        %v3386 = vpow.pop %v3385
        %v3387 = vsel %vm1580, %v3384, 0.0
        %3388 = vadd.xlane.f32.xlu0 %v3387
        %v3389 = vpop.xlane.xlu0 %3388
        %v3390 = vsel %vm1580, %v3386, 0.0
        %3391 = vadd.xlane.f32.xlu0 %v3390
        %v3392 = vpop.xlane.xlu0 %3391
        %v3393 = vrcp.pop %v3389
        %v3394 = vrcp.pop %v3392
        %v3395 = vmul.f32 %v3384, %v3393
        %v3396 = vmul.f32 %v3386, %v3394
        %3397 = vrot.lane.b32.xlu0 %v2872, 48
        %v3398 = vpop.permute.xlu0 %3397
        %3399 = vrot.lane.b32.xlu0 %v2877, 48
        %v3400 = vpop.permute.xlu0 %3399
        %v3404 = vsel %vm1580, %v3395, 0
        %v3407 = vsel %vm1580, %v3396, 0
        %3409 = vmatprep.subr.mxu0 0.0
        %3410 = vmatpush1.msra.mxu0 %v3398
        %3411 = vmatprep.subr.mxu0 0.0
        %3412 = vmatpush1.msra.mxu0 %v3400
        %3413 = vmatprep.subr.mxu0 0.0
        %3414 = vmatpush1.msra.mxu0 0.0
        %3415 = vmatprep.subr.mxu0 0.0
        %3416 = vmatpush1.msra.mxu0 0.0
        %3417 = vmatprep.subr.mxu0 0.0
        %3418 = vmatpush1.msra.mxu0 0.0
        %3419 = vmatprep.subr.mxu0 0.0
        %3420 = vmatpush1.msra.mxu0 0.0
        %3421 = vmatprep.subr.mxu0 0.0
        %3422 = vmatpush1.msra.mxu0 0.0
        %3423 = vmatprep.subr.mxu0 0.0
        %3424 = vmatpush1.msra.mxu0 0.0
        %3425 = vmatprep.subr.mxu0 0.0
        %3426 = vmatpush1.msra.mxu0 0.0
        %3427 = vmatprep.subr.mxu0 0.0
        %3428 = vmatpush1.msra.mxu0 0.0
        %3429 = vmatprep.subr.mxu0 0.0
        %3430 = vmatpush1.msra.mxu0 0.0
        %3431 = vmatprep.subr.mxu0 0.0
        %3432 = vmatpush1.msra.mxu0 0.0
        %3433 = vmatprep.subr.mxu0 0.0
        %3434 = vmatpush1.msra.mxu0 0.0
        %3435 = vmatprep.subr.mxu0 0.0
        %3436 = vmatpush1.msra.mxu0 0.0
        %3437 = vmatprep.subr.mxu0 0.0
        %3438 = vmatpush1.msra.mxu0 0.0
        %3439 = vmatprep.subr.mxu0 0.0
        %3440 = vmatpush1.msra.mxu0 0.0
        %3441 = vmatprep.subr.mxu0 0.0
        %3442 = vmatpush1.msra.mxu0 0.0
        %3443 = vmatprep.subr.mxu0 0.0
        %3444 = vmatpush1.msra.mxu0 0.0
        %3445 = vmatprep.subr.mxu0 0.0
        %3446 = vmatpush1.msra.mxu0 0.0
        %3447 = vmatprep.subr.mxu0 0.0
        %3448 = vmatpush1.msra.mxu0 0.0
        %3449 = vmatprep.subr.mxu0 0.0
        %3450 = vmatpush1.msra.mxu0 0.0
        %3451 = vmatprep.subr.mxu0 0.0
        %3452 = vmatpush1.msra.mxu0 0.0
        %3453 = vmatprep.subr.mxu0 0.0
        %3454 = vmatpush1.msra.mxu0 0.0
        %3455 = vmatprep.subr.mxu0 0.0
        %3456 = vmatpush1.msra.mxu0 0.0
        %3457 = vmatprep.subr.mxu0 0.0
        %3458 = vmatpush1.msra.mxu0 0.0
        %3459 = vmatprep.subr.mxu0 0.0
        %3460 = vmatpush1.msra.mxu0 0.0
        %3461 = vmatprep.subr.mxu0 0.0
        %3462 = vmatpush1.msra.mxu0 0.0
        %3463 = vmatprep.subr.mxu0 0.0
        %3464 = vmatpush1.msra.mxu0 0.0
        %3465 = vmatprep.subr.mxu0 0.0
        %3466 = vmatpush1.msra.mxu0 0.0
        %3467 = vmatprep.subr.mxu0 0.0
        %3468 = vmatpush1.msra.mxu0 0.0
        %3469 = vmatprep.subr.mxu0 0.0
        %3470 = vmatpush1.msra.mxu0 0.0
        %3471 = vmatprep.subr.mxu0 0.0
        %3472 = vmatpush1.msra.mxu0 0.0
        %3473 = vmatprep.mubr.f32.mxu0 0.0
        %3474 = vmatmul.mubr.f32.gmra.mrb[0].mxu0 %v3404
        %v3475 = vpop.f32.mrb[0].mxu0
        %v3476 = vadd.f32 0.0, %v3475
        %v3477 = vpop.f32.mrb[0].mxu0
        %3478 = vmatprep.mubr.f32.mxu0 0.0
        %3479 = vmatmul.mubr.f32.gmra.mrb[0].mxu0 %v3407
        %v3480 = vpop.f32.mrb[0].mxu0
        %v3481 = vadd.f32 0.0, %v3480
        %v3482 = vpop.f32.mrb[0].mxu0
        %3483 = vdwg.mxu0
        %3484 = vrot.lane.b32.xlu0 %v2872, 104
        %v3485 = vpop.permute.xlu0 %3484
        %3486 = vrot.lane.b32.xlu0 %v2877, 104
        %v3487 = vpop.permute.xlu0 %3486
        %3488 = vrot.lane.b32.xlu0 %v2872, 72
        %v3489 = vpop.permute.xlu0 %3488
        %3490 = vrot.lane.b32.xlu0 %v2877, 72
        %v3491 = vpop.permute.xlu0 %3490
        %v3492 = vsel %vm1494, %v3485, 0
        %v3494 = vsel %vm1494, %v3487, 0
        %v3496 = vsel %vm1494, %v3489, 0
        %v3498 = vsel %vm1494, %v3491, 0
        %3500 = vmatprep.subr.mxu0 0.0
        %3501 = vmatpush1.xpose.msra.mxu0 %v3496
        %3502 = vmatprep.subr.mxu0 0.0
        %3503 = vmatpush1.xpose.msra.mxu0 %v3498
        %3504 = vmatprep.subr.mxu0 0.0
        %3505 = vmatpush1.xpose.msra.mxu0 0.0
        %3506 = vmatprep.subr.mxu0 0.0
        %3507 = vmatpush1.xpose.msra.mxu0 0.0
        %3508 = vmatprep.subr.mxu0 0.0
        %3509 = vmatpush1.xpose.msra.mxu0 0.0
        %3510 = vmatprep.subr.mxu0 0.0
        %3511 = vmatpush1.xpose.msra.mxu0 0.0
        %3512 = vmatprep.subr.mxu0 0.0
        %3513 = vmatpush1.xpose.msra.mxu0 0.0
        %3514 = vmatprep.subr.mxu0 0.0
        %3515 = vmatpush1.xpose.msra.mxu0 0.0
        %3516 = vmatprep.subr.mxu0 0.0
        %3517 = vmatpush1.xpose.msra.mxu0 0.0
        %3518 = vmatprep.subr.mxu0 0.0
        %3519 = vmatpush1.xpose.msra.mxu0 0.0
        %3520 = vmatprep.subr.mxu0 0.0
        %3521 = vmatpush1.xpose.msra.mxu0 0.0
        %3522 = vmatprep.subr.mxu0 0.0
        %3523 = vmatpush1.xpose.msra.mxu0 0.0
        %3524 = vmatprep.subr.mxu0 0.0
        %3525 = vmatpush1.xpose.msra.mxu0 0.0
        %3526 = vmatprep.subr.mxu0 0.0
        %3527 = vmatpush1.xpose.msra.mxu0 0.0
        %3528 = vmatprep.subr.mxu0 0.0
        %3529 = vmatpush1.xpose.msra.mxu0 0.0
        %3530 = vmatprep.subr.mxu0 0.0
        %3531 = vmatpush1.xpose.msra.mxu0 0.0
        %3532 = vmatprep.subr.mxu0 0.0
        %3533 = vmatpush1.xpose.msra.mxu0 0.0
        %3534 = vmatprep.subr.mxu0 0.0
        %3535 = vmatpush1.xpose.msra.mxu0 0.0
        %3536 = vmatprep.subr.mxu0 0.0
        %3537 = vmatpush1.xpose.msra.mxu0 0.0
        %3538 = vmatprep.subr.mxu0 0.0
        %3539 = vmatpush1.xpose.msra.mxu0 0.0
        %3540 = vmatprep.subr.mxu0 0.0
        %3541 = vmatpush1.xpose.msra.mxu0 0.0
        %3542 = vmatprep.subr.mxu0 0.0
        %3543 = vmatpush1.xpose.msra.mxu0 0.0
        %3544 = vmatprep.subr.mxu0 0.0
        %3545 = vmatpush1.xpose.msra.mxu0 0.0
        %3546 = vmatprep.subr.mxu0 0.0
        %3547 = vmatpush1.xpose.msra.mxu0 0.0
        %3548 = vmatprep.subr.mxu0 0.0
        %3549 = vmatpush1.xpose.msra.mxu0 0.0
        %3550 = vmatprep.subr.mxu0 0.0
        %3551 = vmatpush1.xpose.msra.mxu0 0.0
        %3552 = vmatprep.subr.mxu0 0.0
        %3553 = vmatpush1.xpose.msra.mxu0 0.0
        %3554 = vmatprep.subr.mxu0 0.0
        %3555 = vmatpush1.xpose.msra.mxu0 0.0
        %3556 = vmatprep.subr.mxu0 0.0
        %3557 = vmatpush1.xpose.msra.mxu0 0.0
        %3558 = vmatprep.subr.mxu0 0.0
        %3559 = vmatpush1.xpose.msra.mxu0 0.0
        %3560 = vmatprep.subr.mxu0 0.0
        %3561 = vmatpush1.xpose.msra.mxu0 0.0
        %3562 = vmatprep.subr.mxu0 0.0
        %3563 = vmatpush1.xpose.msra.mxu0 0.0
        %3564 = vmatprep.mubr.f32.mxu0 0.0
        %3565 = vmatmul.mubr.f32.gmra.mrb[0].mxu0 %v3492
        %v3566 = vpop.f32.mrb[0].mxu0
        %v3567 = vadd.f32 0.0, %v3566
        %v3568 = vpop.f32.mrb[0].mxu0
        %3569 = vmatprep.mubr.f32.mxu0 0.0
        %3570 = vmatmul.mubr.f32.gmra.mrb[0].mxu0 %v3494
        %v3571 = vpop.f32.mrb[0].mxu0
        %v3572 = vadd.f32 0.0, %v3571
        %v3573 = vpop.f32.mrb[0].mxu0
        %3574 = vdwg.mxu0
        %v3575 = vmul.f32 %v3567, 0.35355338
        %v3576 = vmul.f32 %v3572, 0.35355338
        %v3577 = vsel %vm1580, %v3575, -inf
        %3578 = vmax.xlane.f32.xlu0 %v3577
        %v3579 = vpop.xlane.xlu0 %3578
        %v3580 = vsel %vm1580, %v3576, -inf
        %3581 = vmax.xlane.f32.xlu0 %v3580
        %v3582 = vpop.xlane.xlu0 %3581
        %v3583 = vsub.f32 %v3575, %v3579
        %v3584 = vsub.f32 %v3576, %v3582
        %v3585 = vmul.f32 %v3583, 1.442695
        %v3586 = vpow.pop %v3585
        %v3587 = vmul.f32 %v3584, 1.442695
        %v3588 = vpow.pop %v3587
        %v3589 = vsel %vm1580, %v3586, 0.0
        %3590 = vadd.xlane.f32.xlu0 %v3589
        %v3591 = vpop.xlane.xlu0 %3590
        %v3592 = vsel %vm1580, %v3588, 0.0
        %3593 = vadd.xlane.f32.xlu0 %v3592
        %v3594 = vpop.xlane.xlu0 %3593
        %v3595 = vrcp.pop %v3591
        %v3596 = vrcp.pop %v3594
        %v3597 = vmul.f32 %v3586, %v3595
        %v3598 = vmul.f32 %v3588, %v3596
        %3599 = vrot.lane.b32.xlu0 %v2872, 40
        %v3600 = vpop.permute.xlu0 %3599
        %3601 = vrot.lane.b32.xlu0 %v2877, 40
        %v3602 = vpop.permute.xlu0 %3601
        %v3606 = vsel %vm1580, %v3597, 0
        %v3609 = vsel %vm1580, %v3598, 0
        %3611 = vmatprep.subr.mxu0 0.0
        %3612 = vmatpush1.msra.mxu0 %v3600
        %3613 = vmatprep.subr.mxu0 0.0
        %3614 = vmatpush1.msra.mxu0 %v3602
        %3615 = vmatprep.subr.mxu0 0.0
        %3616 = vmatpush1.msra.mxu0 0.0
        %3617 = vmatprep.subr.mxu0 0.0
        %3618 = vmatpush1.msra.mxu0 0.0
        %3619 = vmatprep.subr.mxu0 0.0
        %3620 = vmatpush1.msra.mxu0 0.0
        %3621 = vmatprep.subr.mxu0 0.0
        %3622 = vmatpush1.msra.mxu0 0.0
        %3623 = vmatprep.subr.mxu0 0.0
        %3624 = vmatpush1.msra.mxu0 0.0
        %3625 = vmatprep.subr.mxu0 0.0
        %3626 = vmatpush1.msra.mxu0 0.0
        %3627 = vmatprep.subr.mxu0 0.0
        %3628 = vmatpush1.msra.mxu0 0.0
        %3629 = vmatprep.subr.mxu0 0.0
        %3630 = vmatpush1.msra.mxu0 0.0
        %3631 = vmatprep.subr.mxu0 0.0
        %3632 = vmatpush1.msra.mxu0 0.0
        %3633 = vmatprep.subr.mxu0 0.0
        %3634 = vmatpush1.msra.mxu0 0.0
        %3635 = vmatprep.subr.mxu0 0.0
        %3636 = vmatpush1.msra.mxu0 0.0
        %3637 = vmatprep.subr.mxu0 0.0
        %3638 = vmatpush1.msra.mxu0 0.0
        %3639 = vmatprep.subr.mxu0 0.0
        %3640 = vmatpush1.msra.mxu0 0.0
        %3641 = vmatprep.subr.mxu0 0.0
        %3642 = vmatpush1.msra.mxu0 0.0
        %3643 = vmatprep.subr.mxu0 0.0
        %3644 = vmatpush1.msra.mxu0 0.0
        %3645 = vmatprep.subr.mxu0 0.0
        %3646 = vmatpush1.msra.mxu0 0.0
        %3647 = vmatprep.subr.mxu0 0.0
        %3648 = vmatpush1.msra.mxu0 0.0
        %3649 = vmatprep.subr.mxu0 0.0
        %3650 = vmatpush1.msra.mxu0 0.0
        %3651 = vmatprep.subr.mxu0 0.0
        %3652 = vmatpush1.msra.mxu0 0.0
        %3653 = vmatprep.subr.mxu0 0.0
        %3654 = vmatpush1.msra.mxu0 0.0
        %3655 = vmatprep.subr.mxu0 0.0
        %3656 = vmatpush1.msra.mxu0 0.0
        %3657 = vmatprep.subr.mxu0 0.0
        %3658 = vmatpush1.msra.mxu0 0.0
        %3659 = vmatprep.subr.mxu0 0.0
        %3660 = vmatpush1.msra.mxu0 0.0
        %3661 = vmatprep.subr.mxu0 0.0
        %3662 = vmatpush1.msra.mxu0 0.0
        %3663 = vmatprep.subr.mxu0 0.0
        %3664 = vmatpush1.msra.mxu0 0.0
        %3665 = vmatprep.subr.mxu0 0.0
        %3666 = vmatpush1.msra.mxu0 0.0
        %3667 = vmatprep.subr.mxu0 0.0
        %3668 = vmatpush1.msra.mxu0 0.0
        %3669 = vmatprep.subr.mxu0 0.0
        %3670 = vmatpush1.msra.mxu0 0.0
        %3671 = vmatprep.subr.mxu0 0.0
        %3672 = vmatpush1.msra.mxu0 0.0
        %3673 = vmatprep.subr.mxu0 0.0
        %3674 = vmatpush1.msra.mxu0 0.0
        %3675 = vmatprep.mubr.f32.mxu0 0.0
        %3676 = vmatmul.mubr.f32.gmra.mrb[0].mxu0 %v3606
        %v3677 = vpop.f32.mrb[0].mxu0
        %v3678 = vadd.f32 0.0, %v3677
        %v3679 = vpop.f32.mrb[0].mxu0
        %3680 = vmatprep.mubr.f32.mxu0 0.0
        %3681 = vmatmul.mubr.f32.gmra.mrb[0].mxu0 %v3609
        %v3682 = vpop.f32.mrb[0].mxu0
        %v3683 = vadd.f32 0.0, %v3682
        %v3684 = vpop.f32.mrb[0].mxu0
        %3685 = vdwg.mxu0
        %3688 = vrot.lane.b32.xlu0 %v3274, 8
        %v3689 = vpop.permute.xlu0 %3688
        %3690 = vrot.lane.b32.xlu0 %v3279, 8
        %v3691 = vpop.permute.xlu0 %3690
        %3696 = vrot.lane.b32.xlu0 %v3476, 16
        %v3697 = vpop.permute.xlu0 %3696
        %3698 = vrot.lane.b32.xlu0 %v3481, 16
        %v3699 = vpop.permute.xlu0 %3698
        %3704 = vrot.lane.b32.xlu0 %v3678, 24
        %v3705 = vpop.permute.xlu0 %3704
        %3706 = vrot.lane.b32.xlu0 %v3683, 24
        %v3707 = vpop.permute.xlu0 %3706
        %v3710 = vsel %vm1494, %v3072, %v3689
        %v3711 = vsel %vm1494, %v3077, %v3691
        %v3712 = vsel %vm1580, %v3710, %v3697
        %v3713 = vsel %vm1580, %v3711, %v3699
        %v3714 = vsel %vm2324, %v3712, %v3705
        %v3715 = vsel %vm2324, %v3713, %v3707
        %v3716 = vld [vmem:[%s2 + $0x5] sm:$0x1]
        %v3718 = vlaneseq
        %v3719 = vshrl.u32 %v3718, 7
        %v3720 = vsub.s32 0, %v3719
        %v3721 = vrot.slane %v3716, %v3720
        %3726 = vrot.lane.b32.xlu0 %v2779, 32
        %v3727 = vpop.permute.xlu0 %3726
        %3728 = vrot.lane.b32.xlu0 %v2780, 32
        %v3729 = vpop.permute.xlu0 %3728
        %3730 = vrot.lane.b32.xlu0 %v2781, 32
        %v3731 = vpop.permute.xlu0 %3730
        %3732 = vrot.lane.b32.xlu0 %v2782, 32
        %v3733 = vpop.permute.xlu0 %3732
        %3738 = vrot.lane.b32.xlu0 %v3721, 64
        %v3739 = vpop.permute.xlu0 %3738
        %v3742 = vsel %vm439, %v3714, 0
        %v3745 = vsel %vm439, %v3715, 0
        %3747 = vmatprep.subr.mxu0 0.0
        %3748 = vmatpush1.msra.mxu0 %v3727
        %3749 = vmatprep.subr.mxu0 0.0
        %3750 = vmatpush1.msra.mxu0 %v3729
        %3751 = vmatprep.subr.mxu0 0.0
        %3752 = vmatpush1.msra.mxu0 %v3731
        %3753 = vmatprep.subr.mxu0 0.0
        %3754 = vmatpush1.msra.mxu0 %v3733
        %3755 = vmatprep.subr.mxu0 0.0
        %3756 = vmatpush1.msra.mxu0 0.0
        %3757 = vmatprep.subr.mxu0 0.0
        %3758 = vmatpush1.msra.mxu0 0.0
        %3759 = vmatprep.subr.mxu0 0.0
        %3760 = vmatpush1.msra.mxu0 0.0
        %3761 = vmatprep.subr.mxu0 0.0
        %3762 = vmatpush1.msra.mxu0 0.0
        %3763 = vmatprep.subr.mxu0 0.0
        %3764 = vmatpush1.msra.mxu0 0.0
        %3765 = vmatprep.subr.mxu0 0.0
        %3766 = vmatpush1.msra.mxu0 0.0
        %3767 = vmatprep.subr.mxu0 0.0
        %3768 = vmatpush1.msra.mxu0 0.0
        %3769 = vmatprep.subr.mxu0 0.0
        %3770 = vmatpush1.msra.mxu0 0.0
        %3771 = vmatprep.subr.mxu0 0.0
        %3772 = vmatpush1.msra.mxu0 0.0
        %3773 = vmatprep.subr.mxu0 0.0
        %3774 = vmatpush1.msra.mxu0 0.0
        %3775 = vmatprep.subr.mxu0 0.0
        %3776 = vmatpush1.msra.mxu0 0.0
        %3777 = vmatprep.subr.mxu0 0.0
        %3778 = vmatpush1.msra.mxu0 0.0
        %3779 = vmatprep.subr.mxu0 0.0
        %3780 = vmatpush1.msra.mxu0 0.0
        %3781 = vmatprep.subr.mxu0 0.0
        %3782 = vmatpush1.msra.mxu0 0.0
        %3783 = vmatprep.subr.mxu0 0.0
        %3784 = vmatpush1.msra.mxu0 0.0
        %3785 = vmatprep.subr.mxu0 0.0
        %3786 = vmatpush1.msra.mxu0 0.0
        %3787 = vmatprep.subr.mxu0 0.0
        %3788 = vmatpush1.msra.mxu0 0.0
        %3789 = vmatprep.subr.mxu0 0.0
        %3790 = vmatpush1.msra.mxu0 0.0
        %3791 = vmatprep.subr.mxu0 0.0
        %3792 = vmatpush1.msra.mxu0 0.0
        %3793 = vmatprep.subr.mxu0 0.0
        %3794 = vmatpush1.msra.mxu0 0.0
        %3795 = vmatprep.subr.mxu0 0.0
        %3796 = vmatpush1.msra.mxu0 0.0
        %3797 = vmatprep.subr.mxu0 0.0
        %3798 = vmatpush1.msra.mxu0 0.0
        %3799 = vmatprep.subr.mxu0 0.0
        %3800 = vmatpush1.msra.mxu0 0.0
        %3801 = vmatprep.subr.mxu0 0.0
        %3802 = vmatpush1.msra.mxu0 0.0
        %3803 = vmatprep.subr.mxu0 0.0
        %3804 = vmatpush1.msra.mxu0 0.0
        %3805 = vmatprep.subr.mxu0 0.0
        %3806 = vmatpush1.msra.mxu0 0.0
        %3807 = vmatprep.subr.mxu0 0.0
        %3808 = vmatpush1.msra.mxu0 0.0
        %3809 = vmatprep.subr.mxu0 0.0
        %3810 = vmatpush1.msra.mxu0 0.0
        %3811 = vmatprep.mubr.f32.mxu0 0.0
        %3812 = vmatmul.mubr.f32.gmra.mrb[0].mxu0 %v3742
        %v3813 = vpop.f32.mrb[0].mxu0
        %v3814 = vadd.f32 %v3739, %v3813
        %v3815 = vpop.f32.mrb[0].mxu0
        %3816 = vmatprep.mubr.f32.mxu0 0.0
        %3817 = vmatmul.mubr.f32.gmra.mrb[0].mxu0 %v3745
        %v3818 = vpop.f32.mrb[0].mxu0
        %v3819 = vadd.f32 %v3739, %v3818
        %v3820 = vpop.f32.mrb[0].mxu0
        %3821 = vdwg.mxu0
        %v3822 = vadd.f32 %v2771, %v3814
        %v3823 = vadd.f32 %v2772, %v3819
        %v3824 = vld [vmem:[%s2 + $0x6] sm:$0x1]
        %v3825 = vsel %vm439, %v3822, 0.0
        %3826 = vadd.xlane.f32.xlu0 %v3825
        %v3827 = vpop.xlane.xlu0 %3826
        %v3828 = vsel %vm439, %v3823, 0.0
        %3829 = vadd.xlane.f32.xlu0 %v3828
        %v3830 = vpop.xlane.xlu0 %3829
        %v3831 = vmul.f32 %v3827, %v936
        %v3832 = vmul.f32 %v3830, %v936
        %v3833 = vsub.f32 %v3822, %v3831
        %v3834 = vsub.f32 %v3823, %v3832
        %v3835 = vmul.f32 %v3833, %v3833
        %v3836 = vmul.f32 %v3834, %v3834
        %v3837 = vsel %vm439, %v3835, 0.0
        %3838 = vadd.xlane.f32.xlu0 %v3837
        %v3839 = vpop.xlane.xlu0 %3838
        %v3840 = vsel %vm439, %v3836, 0.0
        %3841 = vadd.xlane.f32.xlu0 %v3840
        %v3842 = vpop.xlane.xlu0 %3841
        %v3843 = vmul.f32 %v3839, %v936
        %v3844 = vmul.f32 %v3842, %v936
        %v3845 = vadd.f32 %v3843, 1e-05
        %v3846 = vadd.f32 %v3844, 1e-05
        %v3847 = vrsqrt.pop %v3845
        %v3848 = vrsqrt.pop %v3846
        %v3849 = vmul.f32 %v3833, %v3847
        %v3850 = vmul.f32 %v3834, %v3848
        %3851 = vrot.lane.b32.xlu0 %v3721, 32
        %v3852 = vpop.permute.xlu0 %3851
        %v3854 = vmul.f32 %v3849, %v3852
        %v3855 = vmul.f32 %v3850, %v3852
        %v3857 = vlaneseq
        %v3858 = vshrl.u32 %v3857, 7
        %v3859 = vsub.s32 0, %v3858
        %v3860 = vrot.slane %v3824, %v3859
        %v3862 = vadd.f32 %v3854, %v3860
        %v3863 = vadd.f32 %v3855, %v3860
        %v3864 = vld [vmem:[%s3 + $0x18] sm:$0xff]
        %v3865 = vld [vmem:[%s3 + $0x38] sm:$0xff]
        %v3866 = vld [vmem:[%s3 + $0x58] sm:$0xff]
        %v3867 = vld [vmem:[%s3 + $0x78] sm:$0xff]
        %3868 = vrot.lane.b32.xlu0 %v3860, 96
        %v3869 = vpop.permute.xlu0 %3868
        %v3872 = vsel %vm439, %v3862, 0
        %v3875 = vsel %vm439, %v3863, 0
        %3877 = vmatprep.subr.mxu0 0.0
        %3878 = vmatpush1.msra.mxu0 %v3864
        %3879 = vmatprep.subr.mxu0 0.0
        %3880 = vmatpush1.msra.mxu0 %v3865
        %3881 = vmatprep.subr.mxu0 0.0
        %3882 = vmatpush1.msra.mxu0 %v3866
        %3883 = vmatprep.subr.mxu0 0.0
        %3884 = vmatpush1.msra.mxu0 %v3867
        %3885 = vmatprep.subr.mxu0 0.0
        %3886 = vmatpush1.msra.mxu0 0.0
        %3887 = vmatprep.subr.mxu0 0.0
        %3888 = vmatpush1.msra.mxu0 0.0
        %3889 = vmatprep.subr.mxu0 0.0
        %3890 = vmatpush1.msra.mxu0 0.0
        %3891 = vmatprep.subr.mxu0 0.0
        %3892 = vmatpush1.msra.mxu0 0.0
        %3893 = vmatprep.subr.mxu0 0.0
        %3894 = vmatpush1.msra.mxu0 0.0
        %3895 = vmatprep.subr.mxu0 0.0
        %3896 = vmatpush1.msra.mxu0 0.0
        %3897 = vmatprep.subr.mxu0 0.0
        %3898 = vmatpush1.msra.mxu0 0.0
        %3899 = vmatprep.subr.mxu0 0.0
        %3900 = vmatpush1.msra.mxu0 0.0
        %3901 = vmatprep.subr.mxu0 0.0
        %3902 = vmatpush1.msra.mxu0 0.0
        %3903 = vmatprep.subr.mxu0 0.0
        %3904 = vmatpush1.msra.mxu0 0.0
        %3905 = vmatprep.subr.mxu0 0.0
        %3906 = vmatpush1.msra.mxu0 0.0
        %3907 = vmatprep.subr.mxu0 0.0
        %3908 = vmatpush1.msra.mxu0 0.0
        %3909 = vmatprep.subr.mxu0 0.0
        %3910 = vmatpush1.msra.mxu0 0.0
        %3911 = vmatprep.subr.mxu0 0.0
        %3912 = vmatpush1.msra.mxu0 0.0
        %3913 = vmatprep.subr.mxu0 0.0
        %3914 = vmatpush1.msra.mxu0 0.0
        %3915 = vmatprep.subr.mxu0 0.0
        %3916 = vmatpush1.msra.mxu0 0.0
        %3917 = vmatprep.subr.mxu0 0.0
        %3918 = vmatpush1.msra.mxu0 0.0
        %3919 = vmatprep.subr.mxu0 0.0
        %3920 = vmatpush1.msra.mxu0 0.0
        %3921 = vmatprep.subr.mxu0 0.0
        %3922 = vmatpush1.msra.mxu0 0.0
        %3923 = vmatprep.subr.mxu0 0.0
        %3924 = vmatpush1.msra.mxu0 0.0
        %3925 = vmatprep.subr.mxu0 0.0
        %3926 = vmatpush1.msra.mxu0 0.0
        %3927 = vmatprep.subr.mxu0 0.0
        %3928 = vmatpush1.msra.mxu0 0.0
        %3929 = vmatprep.subr.mxu0 0.0
        %3930 = vmatpush1.msra.mxu0 0.0
        %3931 = vmatprep.subr.mxu0 0.0
        %3932 = vmatpush1.msra.mxu0 0.0
        %3933 = vmatprep.subr.mxu0 0.0
        %3934 = vmatpush1.msra.mxu0 0.0
        %3935 = vmatprep.subr.mxu0 0.0
        %3936 = vmatpush1.msra.mxu0 0.0
        %3937 = vmatprep.subr.mxu0 0.0
        %3938 = vmatpush1.msra.mxu0 0.0
        %3939 = vmatprep.subr.mxu0 0.0
        %3940 = vmatpush1.msra.mxu0 0.0
        %3941 = vmatprep.mubr.f32.mxu0 0.0
        %3942 = vmatmul.mubr.f32.gmra.mrb[0].mxu0 %v3872
        %v3943 = vpop.f32.mrb[0].mxu0
        %v3944 = vadd.f32 %v3869, %v3943
        %v3945 = vpop.f32.mrb[0].mxu0
        %3946 = vmatprep.mubr.f32.mxu0 0.0
        %3947 = vmatmul.mubr.f32.gmra.mrb[0].mxu0 %v3875
        %v3948 = vpop.f32.mrb[0].mxu0
        %v3949 = vadd.f32 %v3869, %v3948
        %v3950 = vpop.f32.mrb[0].mxu0
        %3951 = vdwg.mxu0
        %v3952 = vmul.f32 %v3944, 0.5
        %v3953 = vmul.f32 %v3949, 0.5
        %v3954 = vmul.f32 %v3944, 0.70710677
        %v3955 = vmul.f32 %v3949, 0.70710677
        %v3956 = vand.u32 2147483647, %v3954
        %v3957 = vand.u32 2147483647, %v3955
        %v3958 = vmul.f32 %v3956, 0.3275911
        %v3959 = vmul.f32 %v3957, 0.3275911
        %v3960 = vadd.f32 %v3958, 1.0
        %v3961 = vadd.f32 %v3959, 1.0
        %v3962 = vrcp.pop %v3960
        %v3963 = vmul.f32 1.0, %v3962
        %v3964 = vrcp.pop %v3961
        %v3965 = vmul.f32 1.0, %v3964
        %v3966 = vmul.f32 %v3963, 1.0614054
        %v3967 = vmul.f32 %v3965, 1.0614054
        %v3968 = vadd.f32 %v3966, -1.4531521
        %v3969 = vadd.f32 %v3967, -1.4531521
        %v3970 = vmul.f32 %v3963, %v3968
        %v3971 = vmul.f32 %v3965, %v3969
        %v3972 = vadd.f32 %v3970, 1.4214138
        %v3973 = vadd.f32 %v3971, 1.4214138
        %v3974 = vmul.f32 %v3963, %v3972
        %v3975 = vmul.f32 %v3965, %v3973
        %v3976 = vadd.f32 %v3974, -0.28449672
        %v3977 = vadd.f32 %v3975, -0.28449672
        %v3978 = vmul.f32 %v3963, %v3976
        %v3979 = vmul.f32 %v3965, %v3977
        %v3980 = vadd.f32 %v3978, 0.2548296
        %v3981 = vadd.f32 %v3979, 0.2548296
        %v3982 = vmul.f32 %v3963, %v3980
        %v3983 = vmul.f32 %v3965, %v3981
        %v3984 = vsub.f32 0.0, %v3956
        %v3985 = vsub.f32 0.0, %v3957
        %v3986 = vmul.f32 %v3984, %v3956
        %v3987 = vmul.f32 %v3985, %v3957
        %v3988 = vmul.f32 %v3986, 1.442695
        %v3989 = vpow.pop %v3988
        %v3990 = vmul.f32 %v3987, 1.442695
        %v3991 = vpow.pop %v3990
        %v3992 = vmul.f32 %v3982, %v3989
        %v3993 = vmul.f32 %v3983, %v3991
        %v3994 = vsub.f32 1.0, %v3992
        %v3995 = vsub.f32 1.0, %v3993
        %vm3996 = vcmp.lt.f32.partialorder %v3954, 0.0
        %vm3997 = vcmp.lt.f32.partialorder %v3955, 0.0
        %v3998 = vsub.f32 0.0, %v3994
        %v3999 = vsub.f32 0.0, %v3995
        %v4000 = vsel %vm3996, %v3998, %v3994
        %v4001 = vsel %vm3997, %v3999, %v3995
        %v4002 = vadd.f32 %v4000, 1.0
        %v4003 = vadd.f32 %v4001, 1.0
        %v4004 = vmul.f32 %v3952, %v4002
        %v4005 = vmul.f32 %v3953, %v4003
        %4006 = vrot.lane.b32.xlu0 %v2607, 32
        %v4007 = vpop.permute.xlu0 %4006
        %4008 = vrot.lane.b32.xlu0 %v2608, 32
        %v4009 = vpop.permute.xlu0 %4008
        %4010 = vrot.lane.b32.xlu0 %v2609, 32
        %v4011 = vpop.permute.xlu0 %4010
        %4012 = vrot.lane.b32.xlu0 %v2610, 32
        %v4013 = vpop.permute.xlu0 %4012
        %4014 = vrot.lane.b32.xlu0 %v2611, 32
        %v4015 = vpop.permute.xlu0 %4014
        %4016 = vrot.lane.b32.xlu0 %v2612, 32
        %v4017 = vpop.permute.xlu0 %4016
        %4018 = vrot.lane.b32.xlu0 %v2613, 32
        %v4019 = vpop.permute.xlu0 %4018
        %4020 = vrot.lane.b32.xlu0 %v2614, 32
        %v4021 = vpop.permute.xlu0 %4020
        %4030 = vrot.lane.b32.xlu0 %v3860, 32
        %v4031 = vpop.permute.xlu0 %4030
        %v4034 = vsel %vm779, %v4004, 0
        %v4037 = vsel %vm779, %v4005, 0
        %4039 = vmatprep.subr.mxu0 0.0
        %4040 = vmatpush1.msra.mxu0 %v4007
        %4041 = vmatprep.subr.mxu0 0.0
        %4042 = vmatpush1.msra.mxu0 %v4009
        %4043 = vmatprep.subr.mxu0 0.0
        %4044 = vmatpush1.msra.mxu0 %v4011
        %4045 = vmatprep.subr.mxu0 0.0
        %4046 = vmatpush1.msra.mxu0 %v4013
        %4047 = vmatprep.subr.mxu0 0.0
        %4048 = vmatpush1.msra.mxu0 %v4015
        %4049 = vmatprep.subr.mxu0 0.0
        %4050 = vmatpush1.msra.mxu0 %v4017
        %4051 = vmatprep.subr.mxu0 0.0
        %4052 = vmatpush1.msra.mxu0 %v4019
        %4053 = vmatprep.subr.mxu0 0.0
        %4054 = vmatpush1.msra.mxu0 %v4021
        %4055 = vmatprep.subr.mxu0 0.0
        %4056 = vmatpush1.msra.mxu0 0.0
        %4057 = vmatprep.subr.mxu0 0.0
        %4058 = vmatpush1.msra.mxu0 0.0
        %4059 = vmatprep.subr.mxu0 0.0
        %4060 = vmatpush1.msra.mxu0 0.0
        %4061 = vmatprep.subr.mxu0 0.0
        %4062 = vmatpush1.msra.mxu0 0.0
        %4063 = vmatprep.subr.mxu0 0.0
        %4064 = vmatpush1.msra.mxu0 0.0
        %4065 = vmatprep.subr.mxu0 0.0
        %4066 = vmatpush1.msra.mxu0 0.0
        %4067 = vmatprep.subr.mxu0 0.0
        %4068 = vmatpush1.msra.mxu0 0.0
        %4069 = vmatprep.subr.mxu0 0.0
        %4070 = vmatpush1.msra.mxu0 0.0
        %4071 = vmatprep.subr.mxu0 0.0
        %4072 = vmatpush1.msra.mxu0 0.0
        %4073 = vmatprep.subr.mxu0 0.0
        %4074 = vmatpush1.msra.mxu0 0.0
        %4075 = vmatprep.subr.mxu0 0.0
        %4076 = vmatpush1.msra.mxu0 0.0
        %4077 = vmatprep.subr.mxu0 0.0
        %4078 = vmatpush1.msra.mxu0 0.0
        %4079 = vmatprep.subr.mxu0 0.0
        %4080 = vmatpush1.msra.mxu0 0.0
        %4081 = vmatprep.subr.mxu0 0.0
        %4082 = vmatpush1.msra.mxu0 0.0
        %4083 = vmatprep.subr.mxu0 0.0
        %4084 = vmatpush1.msra.mxu0 0.0
        %4085 = vmatprep.subr.mxu0 0.0
        %4086 = vmatpush1.msra.mxu0 0.0
        %4087 = vmatprep.subr.mxu0 0.0
        %4088 = vmatpush1.msra.mxu0 0.0
        %4089 = vmatprep.subr.mxu0 0.0
        %4090 = vmatpush1.msra.mxu0 0.0
        %4091 = vmatprep.subr.mxu0 0.0
        %4092 = vmatpush1.msra.mxu0 0.0
        %4093 = vmatprep.subr.mxu0 0.0
        %4094 = vmatpush1.msra.mxu0 0.0
        %4095 = vmatprep.subr.mxu0 0.0
        %4096 = vmatpush1.msra.mxu0 0.0
        %4097 = vmatprep.subr.mxu0 0.0
        %4098 = vmatpush1.msra.mxu0 0.0
        %4099 = vmatprep.subr.mxu0 0.0
        %4100 = vmatpush1.msra.mxu0 0.0
        %4101 = vmatprep.subr.mxu0 0.0
        %4102 = vmatpush1.msra.mxu0 0.0
        %4103 = vmatprep.mubr.f32.mxu0 0.0
        %4104 = vmatmul.mubr.f32.gmra.mrb[0].mxu0 %v4034
        %v4105 = vpop.f32.mrb[0].mxu0
        %v4106 = vadd.f32 %v4031, %v4105
        %v4107 = vpop.f32.mrb[0].mxu0
        %4108 = vmatprep.mubr.f32.mxu0 0.0
        %4109 = vmatmul.mubr.f32.gmra.mrb[0].mxu0 %v4037
        %v4110 = vpop.f32.mrb[0].mxu0
        %v4111 = vadd.f32 %v4031, %v4110
        %v4112 = vpop.f32.mrb[0].mxu0
        %4113 = vdwg.mxu0
        %v4114 = vadd.f32 %v3862, %v4106
        %v4115 = vadd.f32 %v3863, %v4111
        %v4116 = vld [vmem:[%s2 + $0x7] sm:$0x1]
        %v4117 = vsel %vm439, %v4114, 0.0
        %4118 = vadd.xlane.f32.xlu0 %v4117
        %v4119 = vpop.xlane.xlu0 %4118
        %v4120 = vsel %vm439, %v4115, 0.0
        %4121 = vadd.xlane.f32.xlu0 %v4120
        %v4122 = vpop.xlane.xlu0 %4121
        %v4123 = vmul.f32 %v4119, %v936
        %v4124 = vmul.f32 %v4122, %v936
        %v4125 = vsub.f32 %v4114, %v4123
        %v4126 = vsub.f32 %v4115, %v4124
        %v4127 = vmul.f32 %v4125, %v4125
        %v4128 = vmul.f32 %v4126, %v4126
        %v4129 = vsel %vm439, %v4127, 0.0
        %4130 = vadd.xlane.f32.xlu0 %v4129
        %v4131 = vpop.xlane.xlu0 %4130
        %v4132 = vsel %vm439, %v4128, 0.0
        %4133 = vadd.xlane.f32.xlu0 %v4132
        %v4134 = vpop.xlane.xlu0 %4133
        %v4135 = vmul.f32 %v4131, %v936
        %v4136 = vmul.f32 %v4134, %v936
        %v4137 = vadd.f32 %v4135, 1e-05
        %v4138 = vadd.f32 %v4136, 1e-05
        %v4139 = vrsqrt.pop %v4137
        %v4140 = vrsqrt.pop %v4138
        %v4141 = vmul.f32 %v4125, %v4139
        %v4142 = vmul.f32 %v4126, %v4140
        %v4144 = vlaneseq
        %v4145 = vshrl.u32 %v4144, 7
        %v4146 = vsub.s32 0, %v4145
        %v4147 = vrot.slane %v4116, %v4146
        %v4149 = vmul.f32 %v4141, %v4147
        %v4150 = vmul.f32 %v4142, %v4147
        %4151 = vrot.lane.b32.xlu0 %v4147, 96
        %v4152 = vpop.permute.xlu0 %4151
        %v4154 = vadd.f32 %v4149, %v4152
        %v4155 = vadd.f32 %v4150, %v4152
        %s4156 = sld [smem:[#allocation2 + $0x2]]
        %v4157 = vstv %s4156
        %v4158 = vmul.f32 %v4157, %v4154
        %v4159 = vmul.f32 %v4157, %v4155
        %v4160 = vadd.f32 %v2777, %v4158
        %v4161 = vadd.f32 %v2778, %v4159
        %v4163 = vrot.slane %v4160, 1
        %4164 = vrot.lane.b32.xlu0 %v4163, 32
        %v4165 = vpop.permute.xlu0 %4164
        %v4167 = vrot.slane %v4160, 2
        %4168 = vrot.lane.b32.xlu0 %v4167, 64
        %v4169 = vpop.permute.xlu0 %4168
        %v4171 = vrot.slane %v4160, 3
        %4172 = vrot.lane.b32.xlu0 %v4171, 96
        %v4173 = vpop.permute.xlu0 %4172
        %v4175 = vrot.slane %v4160, 4
        %v4177 = vrot.slane %v4160, 5
        %4178 = vrot.lane.b32.xlu0 %v4177, 32
        %v4179 = vpop.permute.xlu0 %4178
        %v4181 = vrot.slane %v4160, 6
        %4182 = vrot.lane.b32.xlu0 %v4181, 64
        %v4183 = vpop.permute.xlu0 %4182
        %v4185 = vrot.slane %v4160, 7
        %4186 = vrot.lane.b32.xlu0 %v4185, 96
        %v4187 = vpop.permute.xlu0 %4186
        %v4190 = vrot.slane %v4161, 1
        %4191 = vrot.lane.b32.xlu0 %v4190, 32
        %v4192 = vpop.permute.xlu0 %4191
        %v4194 = vrot.slane %v4161, 2
        %4195 = vrot.lane.b32.xlu0 %v4194, 64
        %v4196 = vpop.permute.xlu0 %4195
        %v4198 = vrot.slane %v4161, 3
        %4199 = vrot.lane.b32.xlu0 %v4198, 96
        %v4200 = vpop.permute.xlu0 %4199
        %v4202 = vrot.slane %v4161, 4
        %v4204 = vrot.slane %v4161, 5
        %4205 = vrot.lane.b32.xlu0 %v4204, 32
        %v4206 = vpop.permute.xlu0 %4205
        %v4208 = vrot.slane %v4161, 6
        %4209 = vrot.lane.b32.xlu0 %v4208, 64
        %v4210 = vpop.permute.xlu0 %4209
        %v4212 = vrot.slane %v4161, 7
        %4213 = vrot.lane.b32.xlu0 %v4212, 96
        %v4214 = vpop.permute.xlu0 %4213
        %v4216 = vsel %vm439, %v4160, %v4165
        %v4217 = vsel %vm779, %v4216, %v4169
        %v4218 = vsel %vm782, %v4217, %v4173
        %v4219 = vsel %vm439, %v4175, %v4179
        %v4220 = vsel %vm779, %v4219, %v4183
        %v4221 = vsel %vm782, %v4220, %v4187
        %v4222 = vsel %vm439, %v4161, %v4192
        %v4223 = vsel %vm779, %v4222, %v4196
        %v4224 = vsel %vm782, %v4223, %v4200
        %v4225 = vsel %vm439, %v4202, %v4206
        %v4226 = vsel %vm779, %v4225, %v4210
        %v4227 = vsel %vm782, %v4226, %v4214
        %v4232 = vcombine.low %v4218, %v4221
        %v4233 = vcombine.low %v4224, %v4227
        %v4235 = vunpack.c.l.s4 1966171168
        %v4236 = vunpack.c.0.s8 %v4235
        %v4237 = vlaneseq
        %v4238 = vshrl.u32 %v4237, 7
        %v4239 = vsub.s32 %v4236, %v4238
        %v4240 = vrot.slane %v4232, %v4239
        %v4242 = vunpack.c.l.s4 1966171168
        %v4243 = vunpack.c.0.s8 %v4242
        %v4244 = vlaneseq
        %v4245 = vshrl.u32 %v4244, 7
        %v4246 = vsub.s32 %v4243, %v4245
        %v4247 = vrot.slane %v4233, %v4246
        %v4248 = vcombine.low %v4240, %v4247
        %v4250 = vunpack.c.l.s4 1966171168
        %v4251 = vunpack.c.0.s8 %v4250
        %v4252 = vlaneseq
        %v4253 = vshrl.u32 %v4252, 7
        %v4254 = vsub.s32 %v4251, %v4253
        %v4255 = vrot.slane %v4248, %v4254
        %v4257 = vlaneseq
        %vm4258 = vcmp.ge.s32.totalorder %v4257, 0
        %vm4259 = vcmp.lt.s32.totalorder %v4257, 512
        %vm4260 = vmand %vm4258, %vm4259
        %4261 = vst.msk [vmem:[%s233] sm:$0xf] %vm4260, %v4255
        %p4262 = scmp.lt.s32.totalorder %s17, 1
        %s4263 = scalar_select %p4262, %s17, 1
        %s4264 = smul.addr %s4263, 4
        %s4265 = scalar_lea.vmem %s5, %s4264
        // Predicated region
        $region45: #{s3prl_forward.1} parent=39 // pred_check
          %p4266 = pneg %p145
        $region46: #{s3prl_forward.1} parent=39 // pred_check_branch
          %4268 = sbr.rel (%p4266) target = $region48
        $region47: #{s3prl_forward.1} parent=39 // pred_region
          _
        $region48: #{s3prl_forward.1} parent=39 // pred_fallthru
          _
      $region40: #{s3prl_forward.1} parent=5 // pred_fallthru
        _
      %p4269 = scmp.le.s32.totalorder 2, %s12
      // Predicated region
      $region49: #{s3prl_forward.1} parent=5 // pred_check
        %p4270 = pneg %p4269
      $region50: #{s3prl_forward.1} parent=5 // pred_check_branch
        %4272 = sbr.rel (%p4270) target = $region52
      $region51: #{s3prl_forward.1} parent=5 // pred_region
        %s4273 = ssub.s32 %s12, 2
        // Predicated region
        $region53: #{s3prl_forward.1} parent=51 // pred_check
          %p4274 = pneg %p151
        $region54: #{s3prl_forward.1} parent=51 // pred_check_branch
          %4276 = sbr.rel (%p4274) target = $region56
        $region55: #{s3prl_forward.1} parent=51 // pred_region
          %p4277 = scmp.lt.s32.totalorder %s18, 1
          %s4278 = scalar_select %p4277, %s18, 1
          %s4279 = smul.addr %s4278, 4
          %s4280 = scalar_lea.vmem %s5, %s4279
        $region56: #{s3prl_forward.1} parent=51 // pred_fallthru
          _
      $region52: #{s3prl_forward.1} parent=5 // pred_fallthru
        _
    $region6: #{s3prl_forward.1} parent=1 // loop_footer
      %s16 = sadd.s32 1, %s12
    $region7: #{s3prl_forward.1} parent=1 // loop_footer_branch
      %11 = sbr.rel target = $region3
    $region8: #{s3prl_forward.1} parent=1 // loop_exit
      _
    %4281 = vsyncpa [#allocation3], 1
    %s4282 = scalar_lea.sflag [#allocation3], 1
    %4283 = vsyncpa %s4282, 1

</llo_original>
